<compile_context>
chip_gen: v5e
topology: v5e:2x2
jax: 0.10.0
libtpu: 0.0.40
codegen_flags: <defaults>
</compile_context>

<pallas_src>
import functools
import math

import jax
import jax.numpy as jnp
from jax.experimental import pallas as pl
from jax.experimental.pallas import tpu as pltpu

DIM_FEEDFORWARD = 2048    # nn.Transformer default
LN_EPS = 1e-5             # nn.LayerNorm default
MXU_DTYPE = jnp.bfloat16  # matmul operand dtype; accumulation stays f32


# ------------------------------ tiling helpers -------------------------------

def _row_tile(m):
    """8-aligned row tile dividing m, capped at 256 (VMEM budget) and preferring
    >=2 grid steps so both v7x TensorCores get work."""
    divs = [t for t in (256, 128, 64, 32, 16, 8) if m % t == 0]
    if not divs:
        return m
    multi = [t for t in divs if m // t >= 2]
    return multi[0] if multi else divs[0]


def _col_tile(n):
    """Largest 128-aligned column tile dividing n; full n if n is small / odd-sized."""
    for t in (512, 256, 128):
        if n % t == 0:
            return t
    return n


def _params(sems, vmem_limit_mb=None):
    kw = dict(dimension_semantics=sems)
    if vmem_limit_mb is not None:
        kw["vmem_limit_bytes"] = vmem_limit_mb << 20
    return pltpu.CompilerParams(**kw)


# ------------------------------- Pallas kernels -------------------------------

def _matmul_bias_kernel(x_ref, w_ref, b_ref, o_ref, *, activation):
    # y = x @ W + b ; W stored pre-transposed (in_features, out_features), bf16.
    x = x_ref[...].astype(MXU_DTYPE)
    w = w_ref[...].astype(MXU_DTYPE)
    y = jnp.dot(x, w, preferred_element_type=jnp.float32) + b_ref[...]
    if activation == "relu":
        y = jnp.maximum(y, 0.0)
    o_ref[...] = y.astype(o_ref.dtype)


def matmul_bias(x, w, b, activation=None, out_dtype=jnp.float32, vmem_limit_mb=None):
    M, K = x.shape
    _, Nout = w.shape
    TM = _row_tile(M)
    TN = _col_tile(Nout)
    return pl.pallas_call(
        functools.partial(_matmul_bias_kernel, activation=activation),
        out_shape=jax.ShapeDtypeStruct((M, Nout), out_dtype),
        # column axis outer => the weight tile streams through HBM once, x is re-read
        # Nout/TN times (small vs. the 2048-wide weight on the FF projection).
        grid=(Nout // TN, M // TM),
        in_specs=[pl.BlockSpec((TM, K), lambda j, i: (i, 0)),
                  pl.BlockSpec((K, TN), lambda j, i: (0, j)),
                  pl.BlockSpec((1, TN), lambda j, i: (0, j))],
        out_specs=pl.BlockSpec((TM, TN), lambda j, i: (i, j)),
        compiler_params=_params(("parallel", "parallel"), vmem_limit_mb),
    )(x, w, b.reshape(1, Nout))


def _matmul_bias_add_ln_kernel(x_ref, w_ref, b_ref, r_ref, g_ref, bln_ref, o_ref, *, eps):
    # LayerNorm(residual + (x @ W + b)) fused in one pass; LN math in f32.
    x = x_ref[...].astype(MXU_DTYPE)
    w = w_ref[...].astype(MXU_DTYPE)
    y = jnp.dot(x, w, preferred_element_type=jnp.float32) + b_ref[...]
    y = y + r_ref[...]
    mu = jnp.mean(y, axis=-1, keepdims=True)
    var = jnp.mean(jnp.square(y - mu), axis=-1, keepdims=True)
    yhat = (y - mu) * jax.lax.rsqrt(var + eps)
    o_ref[...] = (yhat * g_ref[...] + bln_ref[...]).astype(o_ref.dtype)


def matmul_bias_add_ln(x, w, b, residual, gamma, beta, eps=LN_EPS, vmem_limit_mb=None):
    M, K = x.shape
    _, Nout = w.shape
    TM = _row_tile(M)
    return pl.pallas_call(
        functools.partial(_matmul_bias_add_ln_kernel, eps=eps),
        out_shape=jax.ShapeDtypeStruct((M, Nout), jnp.float32),
        grid=(M // TM,),
        in_specs=[pl.BlockSpec((TM, K), lambda i: (i, 0)),
                  pl.BlockSpec((K, Nout), lambda i: (0, 0)),
                  pl.BlockSpec((1, Nout), lambda i: (0, 0)),
                  pl.BlockSpec((TM, Nout), lambda i: (i, 0)),
                  pl.BlockSpec((1, Nout), lambda i: (0, 0)),
                  pl.BlockSpec((1, Nout), lambda i: (0, 0))],
        out_specs=pl.BlockSpec((TM, Nout), lambda i: (i, 0)),
        compiler_params=_params(("parallel",), vmem_limit_mb),
    )(x, w, b.reshape(1, Nout), residual, gamma.reshape(1, Nout), beta.reshape(1, Nout))


def _ln_kernel(x_ref, g_ref, b_ref, o_ref, *, eps):
    y = x_ref[...]
    mu = jnp.mean(y, axis=-1, keepdims=True)
    var = jnp.mean(jnp.square(y - mu), axis=-1, keepdims=True)
    yhat = (y - mu) * jax.lax.rsqrt(var + eps)
    o_ref[...] = (yhat * g_ref[...] + b_ref[...]).astype(o_ref.dtype)


def layernorm(x, gamma, beta, eps=LN_EPS):
    M, E = x.shape
    TM = _row_tile(M)
    return pl.pallas_call(
        functools.partial(_ln_kernel, eps=eps),
        out_shape=jax.ShapeDtypeStruct((M, E), jnp.float32),
        grid=(M // TM,),
        in_specs=[pl.BlockSpec((TM, E), lambda i: (i, 0)),
                  pl.BlockSpec((1, E), lambda i: (0, 0)),
                  pl.BlockSpec((1, E), lambda i: (0, 0))],
        out_specs=pl.BlockSpec((TM, E), lambda i: (i, 0)),
        compiler_params=_params(("parallel",)),
    )(x, gamma.reshape(1, E), beta.reshape(1, E))


def _heads_attention(q, k, v, o_ref, num_heads, scale):
    """Per-head softmax attention. q (Sq,E) f32, k/v (Sk,E) f32.  Each head's PV result is
    stored directly into the output-ref lane slice (no concatenate / second materialization)."""
    E = q.shape[-1]
    Dh = E // num_heads
    for h in range(num_heads):                               # small static head loop
        sl = slice(h * Dh, (h + 1) * Dh)
        qh = q[:, sl].astype(MXU_DTYPE)
        kh = k[:, sl].astype(MXU_DTYPE)
        vh = v[:, sl].astype(MXU_DTYPE)
        s = jax.lax.dot_general(qh, kh, (((1,), (1,)), ((), ())),
                                preferred_element_type=jnp.float32) * scale   # (Sq, Sk)
        m = jnp.max(s, axis=-1, keepdims=True)
        p = jnp.exp(s - m)
        p = p * pl.reciprocal(jnp.sum(p, axis=-1, keepdims=True), approx=True)  # EUP divide
        oh = jnp.dot(p.astype(MXU_DTYPE), vh, preferred_element_type=jnp.float32)
        o_ref[0, :, sl] = oh.astype(o_ref.dtype)             # direct per-head store


def _self_attn_kernel(x_ref, w_ref, b_ref, o_ref, *, num_heads, scale):
    # Fused: qkv = x @ W_qkv + b, then multi-head self-attention for one batch element.
    x = x_ref[0].astype(MXU_DTYPE)                           # (S, E)
    qkv = jnp.dot(x, w_ref[...].astype(MXU_DTYPE),
                  preferred_element_type=jnp.float32) + b_ref[...]           # (S, 3E) f32
    E = x.shape[-1]
    _heads_attention(qkv[:, :E], qkv[:, E:2 * E], qkv[:, 2 * E:], o_ref, num_heads, scale)


def self_attention(x3d, w_qkv, b_qkv, num_heads, scale):
    Nb, S, E = x3d.shape
    return pl.pallas_call(
        functools.partial(_self_attn_kernel, num_heads=num_heads, scale=scale),
        out_shape=jax.ShapeDtypeStruct((Nb, S, E), MXU_DTYPE),   # bf16: consumed by out_proj MXU
        grid=(Nb,),
        in_specs=[pl.BlockSpec((1, S, E), lambda b: (b, 0, 0)),
                  pl.BlockSpec((E, 3 * E), lambda b: (0, 0)),
                  pl.BlockSpec((1, 3 * E), lambda b: (0, 0))],
        out_specs=pl.BlockSpec((1, S, E), lambda b: (b, 0, 0)),
        compiler_params=_params(("parallel",)),
    )(x3d, w_qkv, b_qkv.reshape(1, 3 * E))


def _cross_attn_kernel(x_ref, mem_ref, wq_ref, bq_ref, wkv_ref, bkv_ref, o_ref,
                       *, num_heads, scale):
    # Fused: q = x @ Wq + bq, kv = mem @ Wkv + bkv, then multi-head cross-attention.
    x = x_ref[0].astype(MXU_DTYPE)                           # (St, E)
    mem = mem_ref[0].astype(MXU_DTYPE)                       # (Ss, E)
    E = x.shape[-1]
    q = jnp.dot(x, wq_ref[...].astype(MXU_DTYPE),
                preferred_element_type=jnp.float32) + bq_ref[...]            # (St, E)
    kv = jnp.dot(mem, wkv_ref[...].astype(MXU_DTYPE),
                 preferred_element_type=jnp.float32) + bkv_ref[...]          # (Ss, 2E)
    _heads_attention(q, kv[:, :E], kv[:, E:], o_ref, num_heads, scale)


def cross_attention(x3d, mem3d, w_q, b_q, w_kv, b_kv, num_heads, scale):
    Nb, St, E = x3d.shape
    Ss = mem3d.shape[1]
    return pl.pallas_call(
        functools.partial(_cross_attn_kernel, num_heads=num_heads, scale=scale),
        out_shape=jax.ShapeDtypeStruct((Nb, St, E), MXU_DTYPE),
        grid=(Nb,),
        in_specs=[pl.BlockSpec((1, St, E), lambda b: (b, 0, 0)),
                  pl.BlockSpec((1, Ss, E), lambda b: (b, 0, 0)),
                  pl.BlockSpec((E, E), lambda b: (0, 0)),
                  pl.BlockSpec((1, E), lambda b: (0, 0)),
                  pl.BlockSpec((E, 2 * E), lambda b: (0, 0)),
                  pl.BlockSpec((1, 2 * E), lambda b: (0, 0))],
        out_specs=pl.BlockSpec((1, St, E), lambda b: (b, 0, 0)),
        compiler_params=_params(("parallel",)),
    )(x3d, mem3d, w_q, b_q.reshape(1, E), w_kv, b_kv.reshape(1, 2 * E))


# ----------------------------- model building blocks -----------------------------

def _self_attn_block(x2d, sa, norm, num_heads, Nb, S):
    E = x2d.shape[-1]
    scale = 1.0 / math.sqrt(E // num_heads)
    attn = self_attention(x2d.reshape(Nb, S, E), sa["w_qkv"], sa["b_qkv"], num_heads, scale)
    # fused: out_proj + residual add + LayerNorm (residual stays f32)
    return matmul_bias_add_ln(attn.reshape(Nb * S, E), sa["w_out"], sa["b_out"],
                              x2d, norm["gamma"], norm["beta"])


def _ff_block(x2d, p, norm):
    # hidden kept bf16: it is only ever an MXU operand of linear2 (halves HBM traffic).
    h = matmul_bias(x2d, p["linear1_w"], p["linear1_b"], activation="relu",
                    out_dtype=MXU_DTYPE, vmem_limit_mb=32)
    # fused: linear2 + residual add + LayerNorm (K=2048 -> explicit VMEM budget)
    return matmul_bias_add_ln(h, p["linear2_w"], p["linear2_b"],
                              x2d, norm["gamma"], norm["beta"], vmem_limit_mb=32)


def encoder_layer(x2d, p, num_heads, Nb, S):
    x2d = _self_attn_block(x2d, p["self_attn"], p["norm1"], num_heads, Nb, S)
    return _ff_block(x2d, p, p["norm2"])


def decoder_layer(x2d, mem3d, p, num_heads, Nb, S):
    E = x2d.shape[-1]
    scale = 1.0 / math.sqrt(E // num_heads)
    x2d = _self_attn_block(x2d, p["self_attn"], p["norm1"], num_heads, Nb, S)
    ca = p["cross_attn"]
    attn = cross_attention(x2d.reshape(Nb, S, E), mem3d, ca["w_q"], ca["b_q"],
                           ca["w_kv"], ca["b_kv"], num_heads, scale)
    x2d = matmul_bias_add_ln(attn.reshape(Nb * S, E), ca["w_out"], ca["b_out"],
                             x2d, p["norm2"]["gamma"], p["norm2"]["beta"])
    return _ff_block(x2d, p, p["norm3"])


def text_encoder_forward(params, ids, num_heads):
    """ids: (S, N) int32 token ids -> (S, N, E) float32 (PyTorch batch_first=False)."""
    S, Nb = ids.shape
    # Embedding gather kept as plain-JAX glue; layout goes batch-major internally.
    emb = jnp.take(params["embedding"], ids.T, axis=0)                     # (N, S, E)
    E = emb.shape[-1]
    x2d = emb.reshape(Nb * S, E)

    # encoder (memory = encoder(src))
    mem2d = x2d
    for lp in params["encoder_layers"]:
        mem2d = encoder_layer(mem2d, lp, num_heads, Nb, S)
    mem2d = layernorm(mem2d, params["encoder_norm"]["gamma"], params["encoder_norm"]["beta"])
    mem3d = mem2d.reshape(Nb, S, E)

    # decoder (tgt = same embedded x)
    y2d = x2d
    for lp in params["decoder_layers"]:
        y2d = decoder_layer(y2d, mem3d, lp, num_heads, Nb, S)
    y2d = layernorm(y2d, params["decoder_norm"]["gamma"], params["decoder_norm"]["beta"])

    # single transpose back to the (S, N, E) convention of nn.Transformer
    return jnp.transpose(y2d.reshape(Nb, S, E), (1, 0, 2))


# ---------------------------------- parameters -----------------------------------

def _dense(key, in_dim, out_dim, scale=0.02):
    """Weight stored pre-transposed (in, out), bf16 for MXU; bias f32."""
    kw, kb = jax.random.split(key)
    w = (scale * jax.random.normal(kw, (in_dim, out_dim), jnp.float32)).astype(MXU_DTYPE)
    b = scale * jax.random.normal(kb, (out_dim,), jnp.float32)
    return w, b


def _self_attn_params(key, E):
    k1, k2 = jax.random.split(key)
    w_qkv, b_qkv = _dense(k1, E, 3 * E)         # fused in_proj, pre-transposed
    w_out, b_out = _dense(k2, E, E)
    return dict(w_qkv=w_qkv, b_qkv=b_qkv, w_out=w_out, b_out=b_out)


def _cross_attn_params(key, E):
    k1, k2, k3 = jax.random.split(key, 3)
    w_q, b_q = _dense(k1, E, E)
    w_kv, b_kv = _dense(k2, E, 2 * E)           # fused K/V projection of memory
    w_out, b_out = _dense(k3, E, E)
    return dict(w_q=w_q, b_q=b_q, w_kv=w_kv, b_kv=b_kv, w_out=w_out, b_out=b_out)


def _ln_params(E):
    return dict(gamma=jnp.ones((E,), jnp.float32), beta=jnp.zeros((E,), jnp.float32))


def init_params(key, vocab_size, embed_dim, num_layers):
    E, F = embed_dim, DIM_FEEDFORWARD
    keys = jax.random.split(key, 1 + 2 * num_layers)
    params = dict(
        embedding=0.02 * jax.random.normal(keys[0], (vocab_size, E), jnp.float32),
        encoder_layers=[], decoder_layers=[],
        encoder_norm=_ln_params(E), decoder_norm=_ln_params(E),
    )
    for li in range(num_layers):
        ke = jax.random.split(keys[1 + li], 3)
        w1, b1 = _dense(ke[1], E, F)
        w2, b2 = _dense(ke[2], F, E)
        params["encoder_layers"].append(dict(
            self_attn=_self_attn_params(ke[0], E),
            linear1_w=w1, linear1_b=b1, linear2_w=w2, linear2_b=b2,
            norm1=_ln_params(E), norm2=_ln_params(E)))
        kd = jax.random.split(keys[1 + num_layers + li], 4)
        w1d, b1d = _dense(kd[2], E, F)
        w2d, b2d = _dense(kd[3], F, E)
        params["decoder_layers"].append(dict(
            self_attn=_self_attn_params(kd[0], E),
            cross_attn=_cross_attn_params(kd[1], E),
            linear1_w=w1d, linear1_b=b1d, linear2_w=w2d, linear2_b=b2d,
            norm1=_ln_params(E), norm2=_ln_params(E), norm3=_ln_params(E)))
    return params


# ------------------------------------- main ---------------------------------------

if __name__ == "__main__":
    vocab_size = 50
    embed_dim = 32     # NOTE: real models should use E a multiple of 128 for lane-dense stores
    num_layers = 2
    num_heads = 4
    seq_len = 8
    batch = 2

    root = jax.random.PRNGKey(0)
    k_params, k_ids = jax.random.split(root)
    params = init_params(k_params, vocab_size, embed_dim, num_layers)
    ids = jax.random.randint(k_ids, (seq_len, batch), 0, vocab_size, dtype=jnp.int32)

    fwd = jax.jit(functools.partial(text_encoder_forward, num_heads=num_heads))
    out = fwd(params, ids)
    jax.block_until_ready(out)
    assert out.shape == (seq_len, batch, embed_dim)
    assert out.dtype == jnp.float32
    assert bool(jnp.all(jnp.isfinite(out)))
    print("KERNEL_OK")
</pallas_src>

<mosaic_0001>
module attributes {stable_mosaic.version = 11 : i64} {
  func.func @_matmul_bias_kernel(%arg0: i32, %arg1: i32, %arg2: memref<8x32xf32, #tpu.memory_space<vmem>>, %arg3: memref<32x512xbf16, #tpu.memory_space<vmem>>, %arg4: memref<1x512xf32, #tpu.memory_space<vmem>>, %arg5: memref<8x512xbf16, #tpu.memory_space<vmem>>) attributes {dimension_semantics = [#tpu.dimension_semantics<parallel>, #tpu.dimension_semantics<parallel>], iteration_bounds = array<i64: 4, 2>, scalar_prefetch = 0 : i64, scratch_operands = 0 : i64, tpu.core_type = #tpu.core_type<tc>, window_params = [{transform_indices = @transform_0, window_bounds = array<i64: 8, 32>}, {transform_indices = @transform_1, window_bounds = array<i64: 32, 512>}, {transform_indices = @transform_2, window_bounds = array<i64: 1, 512>}, {transform_indices = @transform_3, window_bounds = array<i64: 8, 512>}]} {
    %c0 = arith.constant 0 : index
    %c0_0 = arith.constant 0 : index
    %0 = vector.load %arg2[%c0, %c0_0] : memref<8x32xf32, #tpu.memory_space<vmem>>, vector<8x32xf32>
    %1 = arith.truncf %0 : vector<8x32xf32> to vector<8x32xbf16>
    %c0_1 = arith.constant 0 : index
    %c0_2 = arith.constant 0 : index
    %2 = vector.load %arg3[%c0_1, %c0_2] : memref<32x512xbf16, #tpu.memory_space<vmem>>, vector<32x512xbf16>
    %cst = arith.constant dense<0.000000e+00> : vector<8x512xf32>
    %3 = tpu.matmul %1, %2, %cst {dimension_numbers = #tpu.dot_dimension_numbers<[1], [0], [0], [1], [0, 0, 1, 1], [], []>} : vector<8x32xbf16>, vector<32x512xbf16>, vector<8x512xf32> -> vector<8x512xf32>
    %c0_3 = arith.constant 0 : index
    %c0_4 = arith.constant 0 : index
    %4 = vector.load %arg4[%c0_3, %c0_4] : memref<1x512xf32, #tpu.memory_space<vmem>>, vector<1x512xf32>
    %5 = vector.broadcast %4 : vector<1x512xf32> to vector<8x512xf32>
    %6 = arith.addf %3, %5 : vector<8x512xf32>
    %cst_5 = arith.constant 0.000000e+00 : f32
    %7 = vector.broadcast %cst_5 : f32 to vector<8x512xf32>
    %8 = arith.maximumf %6, %7 : vector<8x512xf32>
    %9 = arith.truncf %8 : vector<8x512xf32> to vector<8x512xbf16>
    %c0_6 = arith.constant 0 : index
    %c0_7 = arith.constant 0 : index
    %10 = vector.load %arg5[%c0_6, %c0_7] : memref<8x512xbf16, #tpu.memory_space<vmem>>, vector<8x512xbf16>
    tpu.vector_store %arg5[%c0_6, %c0_7], %9 {strides = array<i32>} : memref<8x512xbf16, #tpu.memory_space<vmem>>, vector<8x512xbf16>,
    return
  }
  func.func @transform_0(%arg0: i32, %arg1: i32) -> (i32, i32) {
    %c0_i32 = arith.constant 0 : i32
    %c0_i32_0 = arith.constant 0 : i32
    return %arg1, %c0_i32 : i32, i32
  }
  func.func @transform_1(%arg0: i32, %arg1: i32) -> (i32, i32) {
    %c0_i32 = arith.constant 0 : i32
    %c0_i32_0 = arith.constant 0 : i32
    return %c0_i32, %arg0 : i32, i32
  }
  func.func @transform_2(%arg0: i32, %arg1: i32) -> (i32, i32) {
    %c0_i32 = arith.constant 0 : i32
    %c0_i32_0 = arith.constant 0 : i32
    return %c0_i32, %arg0 : i32, i32
  }
  func.func @transform_3(%arg0: i32, %arg1: i32) -> (i32, i32) {
    %c0_i32 = arith.constant 0 : i32
    return %arg1, %arg0 : i32, i32
  }
}

module attributes {stable_mosaic.version = 11 : i64} {
  func.func @_self_attn_kernel(%arg0: i32, %arg1: memref<1x8x32xf32, #tpu.memory_space<vmem>>, %arg2: memref<32x96xbf16, #tpu.memory_space<vmem>>, %arg3: memref<1x96xf32, #tpu.memory_space<vmem>>, %arg4: memref<1x8x32xbf16, #tpu.memory_space<vmem>>) attributes {dimension_semantics = [#tpu.dimension_semantics<parallel>], iteration_bounds = array<i64: 2>, scalar_prefetch = 0 : i64, scratch_operands = 0 : i64, tpu.core_type = #tpu.core_type<tc>, window_params = [{transform_indices = @transform_0, window_bounds = array<i64: 1, 8, 32>}, {pipeline_mode = #tpu.pipeline_mode<synchronous>, transform_indices = @transform_1, window_bounds = array<i64: 32, 96>}, {pipeline_mode = #tpu.pipeline_mode<synchronous>, transform_indices = @transform_2, window_bounds = array<i64: 1, 96>}, {transform_indices = @transform_3, window_bounds = array<i64: 1, 8, 32>}]} {
    %c0 = arith.constant 0 : index
    %c0_0 = arith.constant 0 : index
    %c0_1 = arith.constant 0 : index
    %0 = vector.load %arg1[%c0, %c0_0, %c0_1] : memref<1x8x32xf32, #tpu.memory_space<vmem>>, vector<1x8x32xf32>
    %1 = vector.shape_cast %0 : vector<1x8x32xf32> to vector<8x32xf32>
    %2 = arith.truncf %1 : vector<8x32xf32> to vector<8x32xbf16>
    %c0_2 = arith.constant 0 : index
    %c0_3 = arith.constant 0 : index
    %3 = vector.load %arg2[%c0_2, %c0_3] : memref<32x96xbf16, #tpu.memory_space<vmem>>, vector<32x96xbf16>
    %cst = arith.constant dense<0.000000e+00> : vector<8x96xf32>
    %4 = tpu.matmul %2, %3, %cst {dimension_numbers = #tpu.dot_dimension_numbers<[1], [0], [0], [1], [0, 0, 1, 1], [], []>} : vector<8x32xbf16>, vector<32x96xbf16>, vector<8x96xf32> -> vector<8x96xf32>
    %c0_4 = arith.constant 0 : index
    %c0_5 = arith.constant 0 : index
    %5 = vector.load %arg3[%c0_4, %c0_5] : memref<1x96xf32, #tpu.memory_space<vmem>>, vector<1x96xf32>
    %6 = vector.broadcast %5 : vector<1x96xf32> to vector<8x96xf32>
    %7 = arith.addf %4, %6 : vector<8x96xf32>
    %8 = vector.extract_strided_slice %7 {offsets = [0, 0], sizes = [8, 32], strides = [1, 1]} : vector<8x96xf32> to vector<8x32xf32>
    %9 = vector.extract_strided_slice %7 {offsets = [0, 32], sizes = [8, 32], strides = [1, 1]} : vector<8x96xf32> to vector<8x32xf32>
    %10 = vector.extract_strided_slice %7 {offsets = [0, 64], sizes = [8, 32], strides = [1, 1]} : vector<8x96xf32> to vector<8x32xf32>
    %11 = vector.extract_strided_slice %8 {offsets = [0, 0], sizes = [8, 8], strides = [1, 1]} : vector<8x32xf32> to vector<8x8xf32>
    %12 = arith.truncf %11 : vector<8x8xf32> to vector<8x8xbf16>
    %13 = vector.extract_strided_slice %9 {offsets = [0, 0], sizes = [8, 8], strides = [1, 1]} : vector<8x32xf32> to vector<8x8xf32>
    %14 = arith.truncf %13 : vector<8x8xf32> to vector<8x8xbf16>
    %15 = vector.extract_strided_slice %10 {offsets = [0, 0], sizes = [8, 8], strides = [1, 1]} : vector<8x32xf32> to vector<8x8xf32>
    %16 = arith.truncf %15 : vector<8x8xf32> to vector<8x8xbf16>
    %cst_6 = arith.constant dense<0.000000e+00> : vector<8x8xf32>
    %17 = tpu.matmul %12, %14, %cst_6 {dimension_numbers = #tpu.dot_dimension_numbers<[1], [1], [0], [0], [0, 0, 1, 0], [], []>} : vector<8x8xbf16>, vector<8x8xbf16>, vector<8x8xf32> -> vector<8x8xf32>
    %cst_7 = arith.constant 0.353553385 : f32
    %18 = vector.broadcast %cst_7 : f32 to vector<8x8xf32>
    %19 = arith.mulf %17, %18 : vector<8x8xf32>
    %cst_8 = arith.constant dense<0xFF800000> : vector<8xf32>
    %20 = vector.multi_reduction <maximumf>, %19, %cst_8 [1] : vector<8x8xf32> to vector<8xf32>
    %21 = vector.shape_cast %20 : vector<8xf32> to vector<8x1xf32>
    %22 = vector.broadcast %21 : vector<8x1xf32> to vector<8x8xf32>
    %23 = arith.subf %19, %22 : vector<8x8xf32>
    %24 = math.exp %23 : vector<8x8xf32>
    %cst_9 = arith.constant dense<0.000000e+00> : vector<8xf32>
    %25 = vector.multi_reduction <add>, %24, %cst_9 [1] : vector<8x8xf32> to vector<8xf32>
    %26 = vector.shape_cast %25 : vector<8xf32> to vector<8x1xf32>
    %27 = tpu.reciprocal %26 {approx = true} : vector<8x1xf32> -> vector<8x1xf32>
    %28 = vector.broadcast %27 : vector<8x1xf32> to vector<8x8xf32>
    %29 = arith.mulf %24, %28 : vector<8x8xf32>
    %30 = arith.truncf %29 : vector<8x8xf32> to vector<8x8xbf16>
    %cst_10 = arith.constant dense<0.000000e+00> : vector<8x8xf32>
    %31 = tpu.matmul %30, %16, %cst_10 {dimension_numbers = #tpu.dot_dimension_numbers<[1], [0], [0], [1], [0, 0, 1, 1], [], []>} : vector<8x8xbf16>, vector<8x8xbf16>, vector<8x8xf32> -> vector<8x8xf32>
    %32 = arith.truncf %31 : vector<8x8xf32> to vector<8x8xbf16>
    %c0_11 = arith.constant 0 : index
    %c0_12 = arith.constant 0 : index
    %c0_13 = arith.constant 0 : index
    %33 = vector.load %arg4[%c0_11, %c0_12, %c0_13] : memref<1x8x32xbf16, #tpu.memory_space<vmem>>, vector<1x8x8xbf16>
    %34 = vector.shape_cast %33 : vector<1x8x8xbf16> to vector<8x8xbf16>
    %35 = vector.shape_cast %32 : vector<8x8xbf16> to vector<1x8x8xbf16>
    tpu.vector_store %arg4[%c0_11, %c0_12, %c0_13], %35 {strides = array<i32>} : memref<1x8x32xbf16, #tpu.memory_space<vmem>>, vector<1x8x8xbf16>,
    %36 = vector.extract_strided_slice %8 {offsets = [0, 8], sizes = [8, 8], strides = [1, 1]} : vector<8x32xf32> to vector<8x8xf32>
    %37 = arith.truncf %36 : vector<8x8xf32> to vector<8x8xbf16>
    %38 = vector.extract_strided_slice %9 {offsets = [0, 8], sizes = [8, 8], strides = [1, 1]} : vector<8x32xf32> to vector<8x8xf32>
    %39 = arith.truncf %38 : vector<8x8xf32> to vector<8x8xbf16>
    %40 = vector.extract_strided_slice %10 {offsets = [0, 8], sizes = [8, 8], strides = [1, 1]} : vector<8x32xf32> to vector<8x8xf32>
    %41 = arith.truncf %40 : vector<8x8xf32> to vector<8x8xbf16>
    %cst_14 = arith.constant dense<0.000000e+00> : vector<8x8xf32>
    %42 = tpu.matmul %37, %39, %cst_14 {dimension_numbers = #tpu.dot_dimension_numbers<[1], [1], [0], [0], [0, 0, 1, 0], [], []>} : vector<8x8xbf16>, vector<8x8xbf16>, vector<8x8xf32> -> vector<8x8xf32>
    %cst_15 = arith.constant 0.353553385 : f32
    %43 = vector.broadcast %cst_15 : f32 to vector<8x8xf32>
    %44 = arith.mulf %42, %43 : vector<8x8xf32>
    %cst_16 = arith.constant dense<0xFF800000> : vector<8xf32>
    %45 = vector.multi_reduction <maximumf>, %44, %cst_16 [1] : vector<8x8xf32> to vector<8xf32>
    %46 = vector.shape_cast %45 : vector<8xf32> to vector<8x1xf32>
    %47 = vector.broadcast %46 : vector<8x1xf32> to vector<8x8xf32>
    %48 = arith.subf %44, %47 : vector<8x8xf32>
    %49 = math.exp %48 : vector<8x8xf32>
    %cst_17 = arith.constant dense<0.000000e+00> : vector<8xf32>
    %50 = vector.multi_reduction <add>, %49, %cst_17 [1] : vector<8x8xf32> to vector<8xf32>
    %51 = vector.shape_cast %50 : vector<8xf32> to vector<8x1xf32>
    %52 = tpu.reciprocal %51 {approx = true} : vector<8x1xf32> -> vector<8x1xf32>
    %53 = vector.broadcast %52 : vector<8x1xf32> to vector<8x8xf32>
    %54 = arith.mulf %49, %53 : vector<8x8xf32>
    %55 = arith.truncf %54 : vector<8x8xf32> to vector<8x8xbf16>
    %cst_18 = arith.constant dense<0.000000e+00> : vector<8x8xf32>
    %56 = tpu.matmul %55, %41, %cst_18 {dimension_numbers = #tpu.dot_dimension_numbers<[1], [0], [0], [1], [0, 0, 1, 1], [], []>} : vector<8x8xbf16>, vector<8x8xbf16>, vector<8x8xf32> -> vector<8x8xf32>
    %57 = arith.truncf %56 : vector<8x8xf32> to vector<8x8xbf16>
    %c0_19 = arith.constant 0 : index
    %c0_20 = arith.constant 0 : index
    %c8 = arith.constant 8 : index
    %58 = vector.load %arg4[%c0_19, %c0_20, %c8] : memref<1x8x32xbf16, #tpu.memory_space<vmem>>, vector<1x8x8xbf16>
    %59 = vector.shape_cast %58 : vector<1x8x8xbf16> to vector<8x8xbf16>
    %60 = vector.shape_cast %57 : vector<8x8xbf16> to vector<1x8x8xbf16>
    tpu.vector_store %arg4[%c0_19, %c0_20, %c8], %60 {strides = array<i32>} : memref<1x8x32xbf16, #tpu.memory_space<vmem>>, vector<1x8x8xbf16>,
    %61 = vector.extract_strided_slice %8 {offsets = [0, 16], sizes = [8, 8], strides = [1, 1]} : vector<8x32xf32> to vector<8x8xf32>
    %62 = arith.truncf %61 : vector<8x8xf32> to vector<8x8xbf16>
    %63 = vector.extract_strided_slice %9 {offsets = [0, 16], sizes = [8, 8], strides = [1, 1]} : vector<8x32xf32> to vector<8x8xf32>
    %64 = arith.truncf %63 : vector<8x8xf32> to vector<8x8xbf16>
    %65 = vector.extract_strided_slice %10 {offsets = [0, 16], sizes = [8, 8], strides = [1, 1]} : vector<8x32xf32> to vector<8x8xf32>
    %66 = arith.truncf %65 : vector<8x8xf32> to vector<8x8xbf16>
    %cst_21 = arith.constant dense<0.000000e+00> : vector<8x8xf32>
    %67 = tpu.matmul %62, %64, %cst_21 {dimension_numbers = #tpu.dot_dimension_numbers<[1], [1], [0], [0], [0, 0, 1, 0], [], []>} : vector<8x8xbf16>, vector<8x8xbf16>, vector<8x8xf32> -> vector<8x8xf32>
    %cst_22 = arith.constant 0.353553385 : f32
    %68 = vector.broadcast %cst_22 : f32 to vector<8x8xf32>
    %69 = arith.mulf %67, %68 : vector<8x8xf32>
    %cst_23 = arith.constant dense<0xFF800000> : vector<8xf32>
    %70 = vector.multi_reduction <maximumf>, %69, %cst_23 [1] : vector<8x8xf32> to vector<8xf32>
    %71 = vector.shape_cast %70 : vector<8xf32> to vector<8x1xf32>
    %72 = vector.broadcast %71 : vector<8x1xf32> to vector<8x8xf32>
    %73 = arith.subf %69, %72 : vector<8x8xf32>
    %74 = math.exp %73 : vector<8x8xf32>
    %cst_24 = arith.constant dense<0.000000e+00> : vector<8xf32>
    %75 = vector.multi_reduction <add>, %74, %cst_24 [1] : vector<8x8xf32> to vector<8xf32>
    %76 = vector.shape_cast %75 : vector<8xf32> to vector<8x1xf32>
    %77 = tpu.reciprocal %76 {approx = true} : vector<8x1xf32> -> vector<8x1xf32>
    %78 = vector.broadcast %77 : vector<8x1xf32> to vector<8x8xf32>
    %79 = arith.mulf %74, %78 : vector<8x8xf32>
    %80 = arith.truncf %79 : vector<8x8xf32> to vector<8x8xbf16>
    %cst_25 = arith.constant dense<0.000000e+00> : vector<8x8xf32>
    %81 = tpu.matmul %80, %66, %cst_25 {dimension_numbers = #tpu.dot_dimension_numbers<[1], [0], [0], [1], [0, 0, 1, 1], [], []>} : vector<8x8xbf16>, vector<8x8xbf16>, vector<8x8xf32> -> vector<8x8xf32>
    %82 = arith.truncf %81 : vector<8x8xf32> to vector<8x8xbf16>
    %c0_26 = arith.constant 0 : index
    %c0_27 = arith.constant 0 : index
    %c16 = arith.constant 16 : index
    %83 = vector.load %arg4[%c0_26, %c0_27, %c16] : memref<1x8x32xbf16, #tpu.memory_space<vmem>>, vector<1x8x8xbf16>
    %84 = vector.shape_cast %83 : vector<1x8x8xbf16> to vector<8x8xbf16>
    %85 = vector.shape_cast %82 : vector<8x8xbf16> to vector<1x8x8xbf16>
    tpu.vector_store %arg4[%c0_26, %c0_27, %c16], %85 {strides = array<i32>} : memref<1x8x32xbf16, #tpu.memory_space<vmem>>, vector<1x8x8xbf16>,
    %86 = vector.extract_strided_slice %8 {offsets = [0, 24], sizes = [8, 8], strides = [1, 1]} : vector<8x32xf32> to vector<8x8xf32>
    %87 = arith.truncf %86 : vector<8x8xf32> to vector<8x8xbf16>
    %88 = vector.extract_strided_slice %9 {offsets = [0, 24], sizes = [8, 8], strides = [1, 1]} : vector<8x32xf32> to vector<8x8xf32>
    %89 = arith.truncf %88 : vector<8x8xf32> to vector<8x8xbf16>
    %90 = vector.extract_strided_slice %10 {offsets = [0, 24], sizes = [8, 8], strides = [1, 1]} : vector<8x32xf32> to vector<8x8xf32>
    %91 = arith.truncf %90 : vector<8x8xf32> to vector<8x8xbf16>
    %cst_28 = arith.constant dense<0.000000e+00> : vector<8x8xf32>
    %92 = tpu.matmul %87, %89, %cst_28 {dimension_numbers = #tpu.dot_dimension_numbers<[1], [1], [0], [0], [0, 0, 1, 0], [], []>} : vector<8x8xbf16>, vector<8x8xbf16>, vector<8x8xf32> -> vector<8x8xf32>
    %cst_29 = arith.constant 0.353553385 : f32
    %93 = vector.broadcast %cst_29 : f32 to vector<8x8xf32>
    %94 = arith.mulf %92, %93 : vector<8x8xf32>
    %cst_30 = arith.constant dense<0xFF800000> : vector<8xf32>
    %95 = vector.multi_reduction <maximumf>, %94, %cst_30 [1] : vector<8x8xf32> to vector<8xf32>
    %96 = vector.shape_cast %95 : vector<8xf32> to vector<8x1xf32>
    %97 = vector.broadcast %96 : vector<8x1xf32> to vector<8x8xf32>
    %98 = arith.subf %94, %97 : vector<8x8xf32>
    %99 = math.exp %98 : vector<8x8xf32>
    %cst_31 = arith.constant dense<0.000000e+00> : vector<8xf32>
    %100 = vector.multi_reduction <add>, %99, %cst_31 [1] : vector<8x8xf32> to vector<8xf32>
    %101 = vector.shape_cast %100 : vector<8xf32> to vector<8x1xf32>
    %102 = tpu.reciprocal %101 {approx = true} : vector<8x1xf32> -> vector<8x1xf32>
    %103 = vector.broadcast %102 : vector<8x1xf32> to vector<8x8xf32>
    %104 = arith.mulf %99, %103 : vector<8x8xf32>
    %105 = arith.truncf %104 : vector<8x8xf32> to vector<8x8xbf16>
    %cst_32 = arith.constant dense<0.000000e+00> : vector<8x8xf32>
    %106 = tpu.matmul %105, %91, %cst_32 {dimension_numbers = #tpu.dot_dimension_numbers<[1], [0], [0], [1], [0, 0, 1, 1], [], []>} : vector<8x8xbf16>, vector<8x8xbf16>, vector<8x8xf32> -> vector<8x8xf32>
    %107 = arith.truncf %106 : vector<8x8xf32> to vector<8x8xbf16>
    %c0_33 = arith.constant 0 : index
    %c0_34 = arith.constant 0 : index
    %c24 = arith.constant 24 : index
    %108 = vector.load %arg4[%c0_33, %c0_34, %c24] : memref<1x8x32xbf16, #tpu.memory_space<vmem>>, vector<1x8x8xbf16>
    %109 = vector.shape_cast %108 : vector<1x8x8xbf16> to vector<8x8xbf16>
    %110 = vector.shape_cast %107 : vector<8x8xbf16> to vector<1x8x8xbf16>
    tpu.vector_store %arg4[%c0_33, %c0_34, %c24], %110 {strides = array<i32>} : memref<1x8x32xbf16, #tpu.memory_space<vmem>>, vector<1x8x8xbf16>,
    return
  }
  func.func @transform_0(%arg0: i32) -> (i32, i32, i32) {
    %c0_i32 = arith.constant 0 : i32
    %c0_i32_0 = arith.constant 0 : i32
    %c0_i32_1 = arith.constant 0 : i32
    return %arg0, %c0_i32, %c0_i32_0 : i32, i32, i32
  }
  func.func @transform_1(%arg0: i32) -> (i32, i32) {
    %c0_i32 = arith.constant 0 : i32
    %c0_i32_0 = arith.constant 0 : i32
    %c0_i32_1 = arith.constant 0 : i32
    return %c0_i32, %c0_i32_0 : i32, i32
  }
  func.func @transform_2(%arg0: i32) -> (i32, i32) {
    %c0_i32 = arith.constant 0 : i32
    %c0_i32_0 = arith.constant 0 : i32
    %c0_i32_1 = arith.constant 0 : i32
    return %c0_i32, %c0_i32_0 : i32, i32
  }
  func.func @transform_3(%arg0: i32) -> (i32, i32, i32) {
    %c0_i32 = arith.constant 0 : i32
    %c0_i32_0 = arith.constant 0 : i32
    %c0_i32_1 = arith.constant 0 : i32
    return %arg0, %c0_i32, %c0_i32_0 : i32, i32, i32
  }
}

module attributes {stable_mosaic.version = 11 : i64} {
  func.func @_matmul_bias_add_ln_kernel(%arg0: i32, %arg1: memref<8x32xbf16, #tpu.memory_space<vmem>>, %arg2: memref<32x32xbf16, #tpu.memory_space<vmem>>, %arg3: memref<1x32xf32, #tpu.memory_space<vmem>>, %arg4: memref<8x32xf32, #tpu.memory_space<vmem>>, %arg5: memref<1x32xf32, #tpu.memory_space<vmem>>, %arg6: memref<1x32xf32, #tpu.memory_space<vmem>>, %arg7: memref<8x32xf32, #tpu.memory_space<vmem>>) attributes {dimension_semantics = [#tpu.dimension_semantics<parallel>], iteration_bounds = array<i64: 2>, scalar_prefetch = 0 : i64, scratch_operands = 0 : i64, tpu.core_type = #tpu.core_type<tc>, window_params = [{transform_indices = @transform_0, window_bounds = array<i64: 8, 32>}, {pipeline_mode = #tpu.pipeline_mode<synchronous>, transform_indices = @transform_1, window_bounds = array<i64: 32, 32>}, {pipeline_mode = #tpu.pipeline_mode<synchronous>, transform_indices = @transform_2, window_bounds = array<i64: 1, 32>}, {transform_indices = @transform_3, window_bounds = array<i64: 8, 32>}, {pipeline_mode = #tpu.pipeline_mode<synchronous>, transform_indices = @transform_4, window_bounds = array<i64: 1, 32>}, {pipeline_mode = #tpu.pipeline_mode<synchronous>, transform_indices = @transform_5, window_bounds = array<i64: 1, 32>}, {transform_indices = @transform_6, window_bounds = array<i64: 8, 32>}]} {
    %c0 = arith.constant 0 : index
    %c0_0 = arith.constant 0 : index
    %0 = vector.load %arg1[%c0, %c0_0] : memref<8x32xbf16, #tpu.memory_space<vmem>>, vector<8x32xbf16>
    %c0_1 = arith.constant 0 : index
    %c0_2 = arith.constant 0 : index
    %1 = vector.load %arg2[%c0_1, %c0_2] : memref<32x32xbf16, #tpu.memory_space<vmem>>, vector<32x32xbf16>
    %cst = arith.constant dense<0.000000e+00> : vector<8x32xf32>
    %2 = tpu.matmul %0, %1, %cst {dimension_numbers = #tpu.dot_dimension_numbers<[1], [0], [0], [1], [0, 0, 1, 1], [], []>} : vector<8x32xbf16>, vector<32x32xbf16>, vector<8x32xf32> -> vector<8x32xf32>
    %c0_3 = arith.constant 0 : index
    %c0_4 = arith.constant 0 : index
    %3 = vector.load %arg3[%c0_3, %c0_4] : memref<1x32xf32, #tpu.memory_space<vmem>>, vector<1x32xf32>
    %4 = vector.broadcast %3 : vector<1x32xf32> to vector<8x32xf32>
    %5 = arith.addf %2, %4 : vector<8x32xf32>
    %c0_5 = arith.constant 0 : index
    %c0_6 = arith.constant 0 : index
    %6 = vector.load %arg4[%c0_5, %c0_6] : memref<8x32xf32, #tpu.memory_space<vmem>>, vector<8x32xf32>
    %7 = arith.addf %5, %6 : vector<8x32xf32>
    %cst_7 = arith.constant dense<0.000000e+00> : vector<8xf32>
    %8 = vector.multi_reduction <add>, %7, %cst_7 [1] : vector<8x32xf32> to vector<8xf32>
    %9 = vector.shape_cast %8 : vector<8xf32> to vector<8x1xf32>
    %cst_8 = arith.constant 3.200000e+01 : f32
    %10 = vector.broadcast %cst_8 : f32 to vector<8x1xf32>
    %11 = arith.divf %9, %10 : vector<8x1xf32>
    %12 = vector.broadcast %11 : vector<8x1xf32> to vector<8x32xf32>
    %13 = arith.subf %7, %12 : vector<8x32xf32>
    %14 = arith.mulf %13, %13 : vector<8x32xf32>
    %cst_9 = arith.constant dense<0.000000e+00> : vector<8xf32>
    %15 = vector.multi_reduction <add>, %14, %cst_9 [1] : vector<8x32xf32> to vector<8xf32>
    %16 = vector.shape_cast %15 : vector<8xf32> to vector<8x1xf32>
    %cst_10 = arith.constant 3.200000e+01 : f32
    %17 = vector.broadcast %cst_10 : f32 to vector<8x1xf32>
    %18 = arith.divf %16, %17 : vector<8x1xf32>
    %19 = vector.broadcast %11 : vector<8x1xf32> to vector<8x32xf32>
    %20 = arith.subf %7, %19 : vector<8x32xf32>
    %cst_11 = arith.constant 9.99999974E-6 : f32
    %21 = vector.broadcast %cst_11 : f32 to vector<8x1xf32>
    %22 = arith.addf %18, %21 : vector<8x1xf32>
    %23 = math.rsqrt %22 : vector<8x1xf32>
    %24 = vector.broadcast %23 : vector<8x1xf32> to vector<8x32xf32>
    %25 = arith.mulf %20, %24 : vector<8x32xf32>
    %c0_12 = arith.constant 0 : index
    %c0_13 = arith.constant 0 : index
    %26 = vector.load %arg5[%c0_12, %c0_13] : memref<1x32xf32, #tpu.memory_space<vmem>>, vector<1x32xf32>
    %27 = vector.broadcast %26 : vector<1x32xf32> to vector<8x32xf32>
    %28 = arith.mulf %25, %27 : vector<8x32xf32>
    %c0_14 = arith.constant 0 : index
    %c0_15 = arith.constant 0 : index
    %29 = vector.load %arg6[%c0_14, %c0_15] : memref<1x32xf32, #tpu.memory_space<vmem>>, vector<1x32xf32>
    %30 = vector.broadcast %29 : vector<1x32xf32> to vector<8x32xf32>
    %31 = arith.addf %28, %30 : vector<8x32xf32>
    %c0_16 = arith.constant 0 : index
    %c0_17 = arith.constant 0 : index
    %32 = vector.load %arg7[%c0_16, %c0_17] : memref<8x32xf32, #tpu.memory_space<vmem>>, vector<8x32xf32>
    tpu.vector_store %arg7[%c0_16, %c0_17], %31 {strides = array<i32>} : memref<8x32xf32, #tpu.memory_space<vmem>>, vector<8x32xf32>,
    return
  }
  func.func @transform_0(%arg0: i32) -> (i32, i32) {
    %c0_i32 = arith.constant 0 : i32
    %c0_i32_0 = arith.constant 0 : i32
    return %arg0, %c0_i32 : i32, i32
  }
  func.func @transform_1(%arg0: i32) -> (i32, i32) {
    %c0_i32 = arith.constant 0 : i32
    %c0_i32_0 = arith.constant 0 : i32
    %c0_i32_1 = arith.constant 0 : i32
    return %c0_i32, %c0_i32_0 : i32, i32
  }
  func.func @transform_2(%arg0: i32) -> (i32, i32) {
    %c0_i32 = arith.constant 0 : i32
    %c0_i32_0 = arith.constant 0 : i32
    %c0_i32_1 = arith.constant 0 : i32
    return %c0_i32, %c0_i32_0 : i32, i32
  }
  func.func @transform_3(%arg0: i32) -> (i32, i32) {
    %c0_i32 = arith.constant 0 : i32
    %c0_i32_0 = arith.constant 0 : i32
    return %arg0, %c0_i32 : i32, i32
  }
  func.func @transform_4(%arg0: i32) -> (i32, i32) {
    %c0_i32 = arith.constant 0 : i32
    %c0_i32_0 = arith.constant 0 : i32
    %c0_i32_1 = arith.constant 0 : i32
    return %c0_i32, %c0_i32_0 : i32, i32
  }
  func.func @transform_5(%arg0: i32) -> (i32, i32) {
    %c0_i32 = arith.constant 0 : i32
    %c0_i32_0 = arith.constant 0 : i32
    %c0_i32_1 = arith.constant 0 : i32
    return %c0_i32, %c0_i32_0 : i32, i32
  }
  func.func @transform_6(%arg0: i32) -> (i32, i32) {
    %c0_i32 = arith.constant 0 : i32
    %c0_i32_0 = arith.constant 0 : i32
    return %arg0, %c0_i32 : i32, i32
  }
}

module attributes {stable_mosaic.version = 11 : i64} {
  func.func @_matmul_bias_kernel(%arg0: i32, %arg1: i32, %arg2: memref<8x32xf32, #tpu.memory_space<vmem>>, %arg3: memref<32x512xbf16, #tpu.memory_space<vmem>>, %arg4: memref<1x512xf32, #tpu.memory_space<vmem>>, %arg5: memref<8x512xbf16, #tpu.memory_space<vmem>>) attributes {dimension_semantics = [#tpu.dimension_semantics<parallel>, #tpu.dimension_semantics<parallel>], iteration_bounds = array<i64: 4, 2>, scalar_prefetch = 0 : i64, scratch_operands = 0 : i64, tpu.core_type = #tpu.core_type<tc>, window_params = [{transform_indices = @transform_0, window_bounds = array<i64: 8, 32>}, {transform_indices = @transform_1, window_bounds = array<i64: 32, 512>}, {transform_indices = @transform_2, window_bounds = array<i64: 1, 512>}, {transform_indices = @transform_3, window_bounds = array<i64: 8, 512>}]} {
    %c0 = arith.constant 0 : index
    %c0_0 = arith.constant 0 : index
    %0 = vector.load %arg2[%c0, %c0_0] : memref<8x32xf32, #tpu.memory_space<vmem>>, vector<8x32xf32>
    %1 = arith.truncf %0 : vector<8x32xf32> to vector<8x32xbf16>
    %c0_1 = arith.constant 0 : index
    %c0_2 = arith.constant 0 : index
    %2 = vector.load %arg3[%c0_1, %c0_2] : memref<32x512xbf16, #tpu.memory_space<vmem>>, vector<32x512xbf16>
    %cst = arith.constant dense<0.000000e+00> : vector<8x512xf32>
    %3 = tpu.matmul %1, %2, %cst {dimension_numbers = #tpu.dot_dimension_numbers<[1], [0], [0], [1], [0, 0, 1, 1], [], []>} : vector<8x32xbf16>, vector<32x512xbf16>, vector<8x512xf32> -> vector<8x512xf32>
    %c0_3 = arith.constant 0 : index
    %c0_4 = arith.constant 0 : index
    %4 = vector.load %arg4[%c0_3, %c0_4] : memref<1x512xf32, #tpu.memory_space<vmem>>, vector<1x512xf32>
    %5 = vector.broadcast %4 : vector<1x512xf32> to vector<8x512xf32>
    %6 = arith.addf %3, %5 : vector<8x512xf32>
    %cst_5 = arith.constant 0.000000e+00 : f32
    %7 = vector.broadcast %cst_5 : f32 to vector<8x512xf32>
    %8 = arith.maximumf %6, %7 : vector<8x512xf32>
    %9 = arith.truncf %8 : vector<8x512xf32> to vector<8x512xbf16>
    %c0_6 = arith.constant 0 : index
    %c0_7 = arith.constant 0 : index
    %10 = vector.load %arg5[%c0_6, %c0_7] : memref<8x512xbf16, #tpu.memory_space<vmem>>, vector<8x512xbf16>
    tpu.vector_store %arg5[%c0_6, %c0_7], %9 {strides = array<i32>} : memref<8x512xbf16, #tpu.memory_space<vmem>>, vector<8x512xbf16>,
    return
  }
  func.func @transform_0(%arg0: i32, %arg1: i32) -> (i32, i32) {
    %c0_i32 = arith.constant 0 : i32
    %c0_i32_0 = arith.constant 0 : i32
    return %arg1, %c0_i32 : i32, i32
  }
  func.func @transform_1(%arg0: i32, %arg1: i32) -> (i32, i32) {
    %c0_i32 = arith.constant 0 : i32
    %c0_i32_0 = arith.constant 0 : i32
    return %c0_i32, %arg0 : i32, i32
  }
  func.func @transform_2(%arg0: i32, %arg1: i32) -> (i32, i32) {
    %c0_i32 = arith.constant 0 : i32
    %c0_i32_0 = arith.constant 0 : i32
    return %c0_i32, %arg0 : i32, i32
  }
  func.func @transform_3(%arg0: i32, %arg1: i32) -> (i32, i32) {
    %c0_i32 = arith.constant 0 : i32
    return %arg1, %arg0 : i32, i32
  }
}

module attributes {stable_mosaic.version = 11 : i64} {
  func.func @_matmul_bias_add_ln_kernel(%arg0: i32, %arg1: memref<8x2048xbf16, #tpu.memory_space<vmem>>, %arg2: memref<2048x32xbf16, #tpu.memory_space<vmem>>, %arg3: memref<1x32xf32, #tpu.memory_space<vmem>>, %arg4: memref<8x32xf32, #tpu.memory_space<vmem>>, %arg5: memref<1x32xf32, #tpu.memory_space<vmem>>, %arg6: memref<1x32xf32, #tpu.memory_space<vmem>>, %arg7: memref<8x32xf32, #tpu.memory_space<vmem>>) attributes {dimension_semantics = [#tpu.dimension_semantics<parallel>], iteration_bounds = array<i64: 2>, scalar_prefetch = 0 : i64, scratch_operands = 0 : i64, tpu.core_type = #tpu.core_type<tc>, window_params = [{transform_indices = @transform_0, window_bounds = array<i64: 8, 2048>}, {pipeline_mode = #tpu.pipeline_mode<synchronous>, transform_indices = @transform_1, window_bounds = array<i64: 2048, 32>}, {pipeline_mode = #tpu.pipeline_mode<synchronous>, transform_indices = @transform_2, window_bounds = array<i64: 1, 32>}, {transform_indices = @transform_3, window_bounds = array<i64: 8, 32>}, {pipeline_mode = #tpu.pipeline_mode<synchronous>, transform_indices = @transform_4, window_bounds = array<i64: 1, 32>}, {pipeline_mode = #tpu.pipeline_mode<synchronous>, transform_indices = @transform_5, window_bounds = array<i64: 1, 32>}, {transform_indices = @transform_6, window_bounds = array<i64: 8, 32>}]} {
    %c0 = arith.constant 0 : index
    %c0_0 = arith.constant 0 : index
    %0 = vector.load %arg1[%c0, %c0_0] : memref<8x2048xbf16, #tpu.memory_space<vmem>>, vector<8x2048xbf16>
    %c0_1 = arith.constant 0 : index
    %c0_2 = arith.constant 0 : index
    %1 = vector.load %arg2[%c0_1, %c0_2] : memref<2048x32xbf16, #tpu.memory_space<vmem>>, vector<2048x32xbf16>
    %cst = arith.constant dense<0.000000e+00> : vector<8x32xf32>
    %2 = tpu.matmul %0, %1, %cst {dimension_numbers = #tpu.dot_dimension_numbers<[1], [0], [0], [1], [0, 0, 1, 1], [], []>} : vector<8x2048xbf16>, vector<2048x32xbf16>, vector<8x32xf32> -> vector<8x32xf32>
    %c0_3 = arith.constant 0 : index
    %c0_4 = arith.constant 0 : index
    %3 = vector.load %arg3[%c0_3, %c0_4] : memref<1x32xf32, #tpu.memory_space<vmem>>, vector<1x32xf32>
    %4 = vector.broadcast %3 : vector<1x32xf32> to vector<8x32xf32>
    %5 = arith.addf %2, %4 : vector<8x32xf32>
    %c0_5 = arith.constant 0 : index
    %c0_6 = arith.constant 0 : index
    %6 = vector.load %arg4[%c0_5, %c0_6] : memref<8x32xf32, #tpu.memory_space<vmem>>, vector<8x32xf32>
    %7 = arith.addf %5, %6 : vector<8x32xf32>
    %cst_7 = arith.constant dense<0.000000e+00> : vector<8xf32>
    %8 = vector.multi_reduction <add>, %7, %cst_7 [1] : vector<8x32xf32> to vector<8xf32>
    %9 = vector.shape_cast %8 : vector<8xf32> to vector<8x1xf32>
    %cst_8 = arith.constant 3.200000e+01 : f32
    %10 = vector.broadcast %cst_8 : f32 to vector<8x1xf32>
    %11 = arith.divf %9, %10 : vector<8x1xf32>
    %12 = vector.broadcast %11 : vector<8x1xf32> to vector<8x32xf32>
    %13 = arith.subf %7, %12 : vector<8x32xf32>
    %14 = arith.mulf %13, %13 : vector<8x32xf32>
    %cst_9 = arith.constant dense<0.000000e+00> : vector<8xf32>
    %15 = vector.multi_reduction <add>, %14, %cst_9 [1] : vector<8x32xf32> to vector<8xf32>
    %16 = vector.shape_cast %15 : vector<8xf32> to vector<8x1xf32>
    %cst_10 = arith.constant 3.200000e+01 : f32
    %17 = vector.broadcast %cst_10 : f32 to vector<8x1xf32>
    %18 = arith.divf %16, %17 : vector<8x1xf32>
    %19 = vector.broadcast %11 : vector<8x1xf32> to vector<8x32xf32>
    %20 = arith.subf %7, %19 : vector<8x32xf32>
    %cst_11 = arith.constant 9.99999974E-6 : f32
    %21 = vector.broadcast %cst_11 : f32 to vector<8x1xf32>
    %22 = arith.addf %18, %21 : vector<8x1xf32>
    %23 = math.rsqrt %22 : vector<8x1xf32>
    %24 = vector.broadcast %23 : vector<8x1xf32> to vector<8x32xf32>
    %25 = arith.mulf %20, %24 : vector<8x32xf32>
    %c0_12 = arith.constant 0 : index
    %c0_13 = arith.constant 0 : index
    %26 = vector.load %arg5[%c0_12, %c0_13] : memref<1x32xf32, #tpu.memory_space<vmem>>, vector<1x32xf32>
    %27 = vector.broadcast %26 : vector<1x32xf32> to vector<8x32xf32>
    %28 = arith.mulf %25, %27 : vector<8x32xf32>
    %c0_14 = arith.constant 0 : index
    %c0_15 = arith.constant 0 : index
    %29 = vector.load %arg6[%c0_14, %c0_15] : memref<1x32xf32, #tpu.memory_space<vmem>>, vector<1x32xf32>
    %30 = vector.broadcast %29 : vector<1x32xf32> to vector<8x32xf32>
    %31 = arith.addf %28, %30 : vector<8x32xf32>
    %c0_16 = arith.constant 0 : index
    %c0_17 = arith.constant 0 : index
    %32 = vector.load %arg7[%c0_16, %c0_17] : memref<8x32xf32, #tpu.memory_space<vmem>>, vector<8x32xf32>
    tpu.vector_store %arg7[%c0_16, %c0_17], %31 {strides = array<i32>} : memref<8x32xf32, #tpu.memory_space<vmem>>, vector<8x32xf32>,
    return
  }
  func.func @transform_0(%arg0: i32) -> (i32, i32) {
    %c0_i32 = arith.constant 0 : i32
    %c0_i32_0 = arith.constant 0 : i32
    return %arg0, %c0_i32 : i32, i32
  }
  func.func @transform_1(%arg0: i32) -> (i32, i32) {
    %c0_i32 = arith.constant 0 : i32
    %c0_i32_0 = arith.constant 0 : i32
    %c0_i32_1 = arith.constant 0 : i32
    return %c0_i32, %c0_i32_0 : i32, i32
  }
  func.func @transform_2(%arg0: i32) -> (i32, i32) {
    %c0_i32 = arith.constant 0 : i32
    %c0_i32_0 = arith.constant 0 : i32
    %c0_i32_1 = arith.constant 0 : i32
    return %c0_i32, %c0_i32_0 : i32, i32
  }
  func.func @transform_3(%arg0: i32) -> (i32, i32) {
    %c0_i32 = arith.constant 0 : i32
    %c0_i32_0 = arith.constant 0 : i32
    return %arg0, %c0_i32 : i32, i32
  }
  func.func @transform_4(%arg0: i32) -> (i32, i32) {
    %c0_i32 = arith.constant 0 : i32
    %c0_i32_0 = arith.constant 0 : i32
    %c0_i32_1 = arith.constant 0 : i32
    return %c0_i32, %c0_i32_0 : i32, i32
  }
  func.func @transform_5(%arg0: i32) -> (i32, i32) {
    %c0_i32 = arith.constant 0 : i32
    %c0_i32_0 = arith.constant 0 : i32
    %c0_i32_1 = arith.constant 0 : i32
    return %c0_i32, %c0_i32_0 : i32, i32
  }
  func.func @transform_6(%arg0: i32) -> (i32, i32) {
    %c0_i32 = arith.constant 0 : i32
    %c0_i32_0 = arith.constant 0 : i32
    return %arg0, %c0_i32 : i32, i32
  }
}

module attributes {stable_mosaic.version = 11 : i64} {
  func.func @_ln_kernel(%arg0: i32, %arg1: memref<8x32xf32, #tpu.memory_space<vmem>>, %arg2: memref<1x32xf32, #tpu.memory_space<vmem>>, %arg3: memref<1x32xf32, #tpu.memory_space<vmem>>, %arg4: memref<8x32xf32, #tpu.memory_space<vmem>>) attributes {dimension_semantics = [#tpu.dimension_semantics<parallel>], iteration_bounds = array<i64: 2>, scalar_prefetch = 0 : i64, scratch_operands = 0 : i64, tpu.core_type = #tpu.core_type<tc>, window_params = [{transform_indices = @transform_0, window_bounds = array<i64: 8, 32>}, {pipeline_mode = #tpu.pipeline_mode<synchronous>, transform_indices = @transform_1, window_bounds = array<i64: 1, 32>}, {pipeline_mode = #tpu.pipeline_mode<synchronous>, transform_indices = @transform_2, window_bounds = array<i64: 1, 32>}, {transform_indices = @transform_3, window_bounds = array<i64: 8, 32>}]} {
    %c0 = arith.constant 0 : index
    %c0_0 = arith.constant 0 : index
    %0 = vector.load %arg1[%c0, %c0_0] : memref<8x32xf32, #tpu.memory_space<vmem>>, vector<8x32xf32>
    %cst = arith.constant dense<0.000000e+00> : vector<8xf32>
    %1 = vector.multi_reduction <add>, %0, %cst [1] : vector<8x32xf32> to vector<8xf32>
    %2 = vector.shape_cast %1 : vector<8xf32> to vector<8x1xf32>
    %cst_1 = arith.constant 3.200000e+01 : f32
    %3 = vector.broadcast %cst_1 : f32 to vector<8x1xf32>
    %4 = arith.divf %2, %3 : vector<8x1xf32>
    %5 = vector.broadcast %4 : vector<8x1xf32> to vector<8x32xf32>
    %6 = arith.subf %0, %5 : vector<8x32xf32>
    %7 = arith.mulf %6, %6 : vector<8x32xf32>
    %cst_2 = arith.constant dense<0.000000e+00> : vector<8xf32>
    %8 = vector.multi_reduction <add>, %7, %cst_2 [1] : vector<8x32xf32> to vector<8xf32>
    %9 = vector.shape_cast %8 : vector<8xf32> to vector<8x1xf32>
    %cst_3 = arith.constant 3.200000e+01 : f32
    %10 = vector.broadcast %cst_3 : f32 to vector<8x1xf32>
    %11 = arith.divf %9, %10 : vector<8x1xf32>
    %12 = vector.broadcast %4 : vector<8x1xf32> to vector<8x32xf32>
    %13 = arith.subf %0, %12 : vector<8x32xf32>
    %cst_4 = arith.constant 9.99999974E-6 : f32
    %14 = vector.broadcast %cst_4 : f32 to vector<8x1xf32>
    %15 = arith.addf %11, %14 : vector<8x1xf32>
    %16 = math.rsqrt %15 : vector<8x1xf32>
    %17 = vector.broadcast %16 : vector<8x1xf32> to vector<8x32xf32>
    %18 = arith.mulf %13, %17 : vector<8x32xf32>
    %c0_5 = arith.constant 0 : index
    %c0_6 = arith.constant 0 : index
    %19 = vector.load %arg2[%c0_5, %c0_6] : memref<1x32xf32, #tpu.memory_space<vmem>>, vector<1x32xf32>
    %20 = vector.broadcast %19 : vector<1x32xf32> to vector<8x32xf32>
    %21 = arith.mulf %18, %20 : vector<8x32xf32>
    %c0_7 = arith.constant 0 : index
    %c0_8 = arith.constant 0 : index
    %22 = vector.load %arg3[%c0_7, %c0_8] : memref<1x32xf32, #tpu.memory_space<vmem>>, vector<1x32xf32>
    %23 = vector.broadcast %22 : vector<1x32xf32> to vector<8x32xf32>
    %24 = arith.addf %21, %23 : vector<8x32xf32>
    %c0_9 = arith.constant 0 : index
    %c0_10 = arith.constant 0 : index
    %25 = vector.load %arg4[%c0_9, %c0_10] : memref<8x32xf32, #tpu.memory_space<vmem>>, vector<8x32xf32>
    tpu.vector_store %arg4[%c0_9, %c0_10], %24 {strides = array<i32>} : memref<8x32xf32, #tpu.memory_space<vmem>>, vector<8x32xf32>,
    return
  }
  func.func @transform_0(%arg0: i32) -> (i32, i32) {
    %c0_i32 = arith.constant 0 : i32
    %c0_i32_0 = arith.constant 0 : i32
    return %arg0, %c0_i32 : i32, i32
  }
  func.func @transform_1(%arg0: i32) -> (i32, i32) {
    %c0_i32 = arith.constant 0 : i32
    %c0_i32_0 = arith.constant 0 : i32
    %c0_i32_1 = arith.constant 0 : i32
    return %c0_i32, %c0_i32_0 : i32, i32
  }
  func.func @transform_2(%arg0: i32) -> (i32, i32) {
    %c0_i32 = arith.constant 0 : i32
    %c0_i32_0 = arith.constant 0 : i32
    %c0_i32_1 = arith.constant 0 : i32
    return %c0_i32, %c0_i32_0 : i32, i32
  }
  func.func @transform_3(%arg0: i32) -> (i32, i32) {
    %c0_i32 = arith.constant 0 : i32
    %c0_i32_0 = arith.constant 0 : i32
    return %arg0, %c0_i32 : i32, i32
  }
}

module attributes {stable_mosaic.version = 11 : i64} {
  func.func @_cross_attn_kernel(%arg0: i32, %arg1: memref<1x8x32xf32, #tpu.memory_space<vmem>>, %arg2: memref<1x8x32xf32, #tpu.memory_space<vmem>>, %arg3: memref<32x32xbf16, #tpu.memory_space<vmem>>, %arg4: memref<1x32xf32, #tpu.memory_space<vmem>>, %arg5: memref<32x64xbf16, #tpu.memory_space<vmem>>, %arg6: memref<1x64xf32, #tpu.memory_space<vmem>>, %arg7: memref<1x8x32xbf16, #tpu.memory_space<vmem>>) attributes {dimension_semantics = [#tpu.dimension_semantics<parallel>], iteration_bounds = array<i64: 2>, scalar_prefetch = 0 : i64, scratch_operands = 0 : i64, tpu.core_type = #tpu.core_type<tc>, window_params = [{transform_indices = @transform_0, window_bounds = array<i64: 1, 8, 32>}, {transform_indices = @transform_1, window_bounds = array<i64: 1, 8, 32>}, {pipeline_mode = #tpu.pipeline_mode<synchronous>, transform_indices = @transform_2, window_bounds = array<i64: 32, 32>}, {pipeline_mode = #tpu.pipeline_mode<synchronous>, transform_indices = @transform_3, window_bounds = array<i64: 1, 32>}, {pipeline_mode = #tpu.pipeline_mode<synchronous>, transform_indices = @transform_4, window_bounds = array<i64: 32, 64>}, {pipeline_mode = #tpu.pipeline_mode<synchronous>, transform_indices = @transform_5, window_bounds = array<i64: 1, 64>}, {transform_indices = @transform_6, window_bounds = array<i64: 1, 8, 32>}]} {
    %c0 = arith.constant 0 : index
    %c0_0 = arith.constant 0 : index
    %c0_1 = arith.constant 0 : index
    %0 = vector.load %arg1[%c0, %c0_0, %c0_1] : memref<1x8x32xf32, #tpu.memory_space<vmem>>, vector<1x8x32xf32>
    %1 = vector.shape_cast %0 : vector<1x8x32xf32> to vector<8x32xf32>
    %2 = arith.truncf %1 : vector<8x32xf32> to vector<8x32xbf16>
    %c0_2 = arith.constant 0 : index
    %c0_3 = arith.constant 0 : index
    %c0_4 = arith.constant 0 : index
    %3 = vector.load %arg2[%c0_2, %c0_3, %c0_4] : memref<1x8x32xf32, #tpu.memory_space<vmem>>, vector<1x8x32xf32>
    %4 = vector.shape_cast %3 : vector<1x8x32xf32> to vector<8x32xf32>
    %5 = arith.truncf %4 : vector<8x32xf32> to vector<8x32xbf16>
    %c0_5 = arith.constant 0 : index
    %c0_6 = arith.constant 0 : index
    %6 = vector.load %arg3[%c0_5, %c0_6] : memref<32x32xbf16, #tpu.memory_space<vmem>>, vector<32x32xbf16>
    %cst = arith.constant dense<0.000000e+00> : vector<8x32xf32>
    %7 = tpu.matmul %2, %6, %cst {dimension_numbers = #tpu.dot_dimension_numbers<[1], [0], [0], [1], [0, 0, 1, 1], [], []>} : vector<8x32xbf16>, vector<32x32xbf16>, vector<8x32xf32> -> vector<8x32xf32>
    %c0_7 = arith.constant 0 : index
    %c0_8 = arith.constant 0 : index
    %8 = vector.load %arg4[%c0_7, %c0_8] : memref<1x32xf32, #tpu.memory_space<vmem>>, vector<1x32xf32>
    %9 = vector.broadcast %8 : vector<1x32xf32> to vector<8x32xf32>
    %10 = arith.addf %7, %9 : vector<8x32xf32>
    %c0_9 = arith.constant 0 : index
    %c0_10 = arith.constant 0 : index
    %11 = vector.load %arg5[%c0_9, %c0_10] : memref<32x64xbf16, #tpu.memory_space<vmem>>, vector<32x64xbf16>
    %cst_11 = arith.constant dense<0.000000e+00> : vector<8x64xf32>
    %12 = tpu.matmul %5, %11, %cst_11 {dimension_numbers = #tpu.dot_dimension_numbers<[1], [0], [0], [1], [0, 0, 1, 1], [], []>} : vector<8x32xbf16>, vector<32x64xbf16>, vector<8x64xf32> -> vector<8x64xf32>
    %c0_12 = arith.constant 0 : index
    %c0_13 = arith.constant 0 : index
    %13 = vector.load %arg6[%c0_12, %c0_13] : memref<1x64xf32, #tpu.memory_space<vmem>>, vector<1x64xf32>
    %14 = vector.broadcast %13 : vector<1x64xf32> to vector<8x64xf32>
    %15 = arith.addf %12, %14 : vector<8x64xf32>
    %16 = vector.extract_strided_slice %15 {offsets = [0, 0], sizes = [8, 32], strides = [1, 1]} : vector<8x64xf32> to vector<8x32xf32>
    %17 = vector.extract_strided_slice %15 {offsets = [0, 32], sizes = [8, 32], strides = [1, 1]} : vector<8x64xf32> to vector<8x32xf32>
    %18 = vector.extract_strided_slice %10 {offsets = [0, 0], sizes = [8, 8], strides = [1, 1]} : vector<8x32xf32> to vector<8x8xf32>
    %19 = arith.truncf %18 : vector<8x8xf32> to vector<8x8xbf16>
    %20 = vector.extract_strided_slice %16 {offsets = [0, 0], sizes = [8, 8], strides = [1, 1]} : vector<8x32xf32> to vector<8x8xf32>
    %21 = arith.truncf %20 : vector<8x8xf32> to vector<8x8xbf16>
    %22 = vector.extract_strided_slice %17 {offsets = [0, 0], sizes = [8, 8], strides = [1, 1]} : vector<8x32xf32> to vector<8x8xf32>
    %23 = arith.truncf %22 : vector<8x8xf32> to vector<8x8xbf16>
    %cst_14 = arith.constant dense<0.000000e+00> : vector<8x8xf32>
    %24 = tpu.matmul %19, %21, %cst_14 {dimension_numbers = #tpu.dot_dimension_numbers<[1], [1], [0], [0], [0, 0, 1, 0], [], []>} : vector<8x8xbf16>, vector<8x8xbf16>, vector<8x8xf32> -> vector<8x8xf32>
    %cst_15 = arith.constant 0.353553385 : f32
    %25 = vector.broadcast %cst_15 : f32 to vector<8x8xf32>
    %26 = arith.mulf %24, %25 : vector<8x8xf32>
    %cst_16 = arith.constant dense<0xFF800000> : vector<8xf32>
    %27 = vector.multi_reduction <maximumf>, %26, %cst_16 [1] : vector<8x8xf32> to vector<8xf32>
    %28 = vector.shape_cast %27 : vector<8xf32> to vector<8x1xf32>
    %29 = vector.broadcast %28 : vector<8x1xf32> to vector<8x8xf32>
    %30 = arith.subf %26, %29 : vector<8x8xf32>
    %31 = math.exp %30 : vector<8x8xf32>
    %cst_17 = arith.constant dense<0.000000e+00> : vector<8xf32>
    %32 = vector.multi_reduction <add>, %31, %cst_17 [1] : vector<8x8xf32> to vector<8xf32>
    %33 = vector.shape_cast %32 : vector<8xf32> to vector<8x1xf32>
    %34 = tpu.reciprocal %33 {approx = true} : vector<8x1xf32> -> vector<8x1xf32>
    %35 = vector.broadcast %34 : vector<8x1xf32> to vector<8x8xf32>
    %36 = arith.mulf %31, %35 : vector<8x8xf32>
    %37 = arith.truncf %36 : vector<8x8xf32> to vector<8x8xbf16>
    %cst_18 = arith.constant dense<0.000000e+00> : vector<8x8xf32>
    %38 = tpu.matmul %37, %23, %cst_18 {dimension_numbers = #tpu.dot_dimension_numbers<[1], [0], [0], [1], [0, 0, 1, 1], [], []>} : vector<8x8xbf16>, vector<8x8xbf16>, vector<8x8xf32> -> vector<8x8xf32>
    %39 = arith.truncf %38 : vector<8x8xf32> to vector<8x8xbf16>
    %c0_19 = arith.constant 0 : index
    %c0_20 = arith.constant 0 : index
    %c0_21 = arith.constant 0 : index
    %40 = vector.load %arg7[%c0_19, %c0_20, %c0_21] : memref<1x8x32xbf16, #tpu.memory_space<vmem>>, vector<1x8x8xbf16>
    %41 = vector.shape_cast %40 : vector<1x8x8xbf16> to vector<8x8xbf16>
    %42 = vector.shape_cast %39 : vector<8x8xbf16> to vector<1x8x8xbf16>
    tpu.vector_store %arg7[%c0_19, %c0_20, %c0_21], %42 {strides = array<i32>} : memref<1x8x32xbf16, #tpu.memory_space<vmem>>, vector<1x8x8xbf16>,
    %43 = vector.extract_strided_slice %10 {offsets = [0, 8], sizes = [8, 8], strides = [1, 1]} : vector<8x32xf32> to vector<8x8xf32>
    %44 = arith.truncf %43 : vector<8x8xf32> to vector<8x8xbf16>
    %45 = vector.extract_strided_slice %16 {offsets = [0, 8], sizes = [8, 8], strides = [1, 1]} : vector<8x32xf32> to vector<8x8xf32>
    %46 = arith.truncf %45 : vector<8x8xf32> to vector<8x8xbf16>
    %47 = vector.extract_strided_slice %17 {offsets = [0, 8], sizes = [8, 8], strides = [1, 1]} : vector<8x32xf32> to vector<8x8xf32>
    %48 = arith.truncf %47 : vector<8x8xf32> to vector<8x8xbf16>
    %cst_22 = arith.constant dense<0.000000e+00> : vector<8x8xf32>
    %49 = tpu.matmul %44, %46, %cst_22 {dimension_numbers = #tpu.dot_dimension_numbers<[1], [1], [0], [0], [0, 0, 1, 0], [], []>} : vector<8x8xbf16>, vector<8x8xbf16>, vector<8x8xf32> -> vector<8x8xf32>
    %cst_23 = arith.constant 0.353553385 : f32
    %50 = vector.broadcast %cst_23 : f32 to vector<8x8xf32>
    %51 = arith.mulf %49, %50 : vector<8x8xf32>
    %cst_24 = arith.constant dense<0xFF800000> : vector<8xf32>
    %52 = vector.multi_reduction <maximumf>, %51, %cst_24 [1] : vector<8x8xf32> to vector<8xf32>
    %53 = vector.shape_cast %52 : vector<8xf32> to vector<8x1xf32>
    %54 = vector.broadcast %53 : vector<8x1xf32> to vector<8x8xf32>
    %55 = arith.subf %51, %54 : vector<8x8xf32>
    %56 = math.exp %55 : vector<8x8xf32>
    %cst_25 = arith.constant dense<0.000000e+00> : vector<8xf32>
    %57 = vector.multi_reduction <add>, %56, %cst_25 [1] : vector<8x8xf32> to vector<8xf32>
    %58 = vector.shape_cast %57 : vector<8xf32> to vector<8x1xf32>
    %59 = tpu.reciprocal %58 {approx = true} : vector<8x1xf32> -> vector<8x1xf32>
    %60 = vector.broadcast %59 : vector<8x1xf32> to vector<8x8xf32>
    %61 = arith.mulf %56, %60 : vector<8x8xf32>
    %62 = arith.truncf %61 : vector<8x8xf32> to vector<8x8xbf16>
    %cst_26 = arith.constant dense<0.000000e+00> : vector<8x8xf32>
    %63 = tpu.matmul %62, %48, %cst_26 {dimension_numbers = #tpu.dot_dimension_numbers<[1], [0], [0], [1], [0, 0, 1, 1], [], []>} : vector<8x8xbf16>, vector<8x8xbf16>, vector<8x8xf32> -> vector<8x8xf32>
    %64 = arith.truncf %63 : vector<8x8xf32> to vector<8x8xbf16>
    %c0_27 = arith.constant 0 : index
    %c0_28 = arith.constant 0 : index
    %c8 = arith.constant 8 : index
    %65 = vector.load %arg7[%c0_27, %c0_28, %c8] : memref<1x8x32xbf16, #tpu.memory_space<vmem>>, vector<1x8x8xbf16>
    %66 = vector.shape_cast %65 : vector<1x8x8xbf16> to vector<8x8xbf16>
    %67 = vector.shape_cast %64 : vector<8x8xbf16> to vector<1x8x8xbf16>
    tpu.vector_store %arg7[%c0_27, %c0_28, %c8], %67 {strides = array<i32>} : memref<1x8x32xbf16, #tpu.memory_space<vmem>>, vector<1x8x8xbf16>,
    %68 = vector.extract_strided_slice %10 {offsets = [0, 16], sizes = [8, 8], strides = [1, 1]} : vector<8x32xf32> to vector<8x8xf32>
    %69 = arith.truncf %68 : vector<8x8xf32> to vector<8x8xbf16>
    %70 = vector.extract_strided_slice %16 {offsets = [0, 16], sizes = [8, 8], strides = [1, 1]} : vector<8x32xf32> to vector<8x8xf32>
    %71 = arith.truncf %70 : vector<8x8xf32> to vector<8x8xbf16>
    %72 = vector.extract_strided_slice %17 {offsets = [0, 16], sizes = [8, 8], strides = [1, 1]} : vector<8x32xf32> to vector<8x8xf32>
    %73 = arith.truncf %72 : vector<8x8xf32> to vector<8x8xbf16>
    %cst_29 = arith.constant dense<0.000000e+00> : vector<8x8xf32>
    %74 = tpu.matmul %69, %71, %cst_29 {dimension_numbers = #tpu.dot_dimension_numbers<[1], [1], [0], [0], [0, 0, 1, 0], [], []>} : vector<8x8xbf16>, vector<8x8xbf16>, vector<8x8xf32> -> vector<8x8xf32>
    %cst_30 = arith.constant 0.353553385 : f32
    %75 = vector.broadcast %cst_30 : f32 to vector<8x8xf32>
    %76 = arith.mulf %74, %75 : vector<8x8xf32>
    %cst_31 = arith.constant dense<0xFF800000> : vector<8xf32>
    %77 = vector.multi_reduction <maximumf>, %76, %cst_31 [1] : vector<8x8xf32> to vector<8xf32>
    %78 = vector.shape_cast %77 : vector<8xf32> to vector<8x1xf32>
    %79 = vector.broadcast %78 : vector<8x1xf32> to vector<8x8xf32>
    %80 = arith.subf %76, %79 : vector<8x8xf32>
    %81 = math.exp %80 : vector<8x8xf32>
    %cst_32 = arith.constant dense<0.000000e+00> : vector<8xf32>
    %82 = vector.multi_reduction <add>, %81, %cst_32 [1] : vector<8x8xf32> to vector<8xf32>
    %83 = vector.shape_cast %82 : vector<8xf32> to vector<8x1xf32>
    %84 = tpu.reciprocal %83 {approx = true} : vector<8x1xf32> -> vector<8x1xf32>
    %85 = vector.broadcast %84 : vector<8x1xf32> to vector<8x8xf32>
    %86 = arith.mulf %81, %85 : vector<8x8xf32>
    %87 = arith.truncf %86 : vector<8x8xf32> to vector<8x8xbf16>
    %cst_33 = arith.constant dense<0.000000e+00> : vector<8x8xf32>
    %88 = tpu.matmul %87, %73, %cst_33 {dimension_numbers = #tpu.dot_dimension_numbers<[1], [0], [0], [1], [0, 0, 1, 1], [], []>} : vector<8x8xbf16>, vector<8x8xbf16>, vector<8x8xf32> -> vector<8x8xf32>
    %89 = arith.truncf %88 : vector<8x8xf32> to vector<8x8xbf16>
    %c0_34 = arith.constant 0 : index
    %c0_35 = arith.constant 0 : index
    %c16 = arith.constant 16 : index
    %90 = vector.load %arg7[%c0_34, %c0_35, %c16] : memref<1x8x32xbf16, #tpu.memory_space<vmem>>, vector<1x8x8xbf16>
    %91 = vector.shape_cast %90 : vector<1x8x8xbf16> to vector<8x8xbf16>
    %92 = vector.shape_cast %89 : vector<8x8xbf16> to vector<1x8x8xbf16>
    tpu.vector_store %arg7[%c0_34, %c0_35, %c16], %92 {strides = array<i32>} : memref<1x8x32xbf16, #tpu.memory_space<vmem>>, vector<1x8x8xbf16>,
    %93 = vector.extract_strided_slice %10 {offsets = [0, 24], sizes = [8, 8], strides = [1, 1]} : vector<8x32xf32> to vector<8x8xf32>
    %94 = arith.truncf %93 : vector<8x8xf32> to vector<8x8xbf16>
    %95 = vector.extract_strided_slice %16 {offsets = [0, 24], sizes = [8, 8], strides = [1, 1]} : vector<8x32xf32> to vector<8x8xf32>
    %96 = arith.truncf %95 : vector<8x8xf32> to vector<8x8xbf16>
    %97 = vector.extract_strided_slice %17 {offsets = [0, 24], sizes = [8, 8], strides = [1, 1]} : vector<8x32xf32> to vector<8x8xf32>
    %98 = arith.truncf %97 : vector<8x8xf32> to vector<8x8xbf16>
    %cst_36 = arith.constant dense<0.000000e+00> : vector<8x8xf32>
    %99 = tpu.matmul %94, %96, %cst_36 {dimension_numbers = #tpu.dot_dimension_numbers<[1], [1], [0], [0], [0, 0, 1, 0], [], []>} : vector<8x8xbf16>, vector<8x8xbf16>, vector<8x8xf32> -> vector<8x8xf32>
    %cst_37 = arith.constant 0.353553385 : f32
    %100 = vector.broadcast %cst_37 : f32 to vector<8x8xf32>
    %101 = arith.mulf %99, %100 : vector<8x8xf32>
    %cst_38 = arith.constant dense<0xFF800000> : vector<8xf32>
    %102 = vector.multi_reduction <maximumf>, %101, %cst_38 [1] : vector<8x8xf32> to vector<8xf32>
    %103 = vector.shape_cast %102 : vector<8xf32> to vector<8x1xf32>
    %104 = vector.broadcast %103 : vector<8x1xf32> to vector<8x8xf32>
    %105 = arith.subf %101, %104 : vector<8x8xf32>
    %106 = math.exp %105 : vector<8x8xf32>
    %cst_39 = arith.constant dense<0.000000e+00> : vector<8xf32>
    %107 = vector.multi_reduction <add>, %106, %cst_39 [1] : vector<8x8xf32> to vector<8xf32>
    %108 = vector.shape_cast %107 : vector<8xf32> to vector<8x1xf32>
    %109 = tpu.reciprocal %108 {approx = true} : vector<8x1xf32> -> vector<8x1xf32>
    %110 = vector.broadcast %109 : vector<8x1xf32> to vector<8x8xf32>
    %111 = arith.mulf %106, %110 : vector<8x8xf32>
    %112 = arith.truncf %111 : vector<8x8xf32> to vector<8x8xbf16>
    %cst_40 = arith.constant dense<0.000000e+00> : vector<8x8xf32>
    %113 = tpu.matmul %112, %98, %cst_40 {dimension_numbers = #tpu.dot_dimension_numbers<[1], [0], [0], [1], [0, 0, 1, 1], [], []>} : vector<8x8xbf16>, vector<8x8xbf16>, vector<8x8xf32> -> vector<8x8xf32>
    %114 = arith.truncf %113 : vector<8x8xf32> to vector<8x8xbf16>
    %c0_41 = arith.constant 0 : index
    %c0_42 = arith.constant 0 : index
    %c24 = arith.constant 24 : index
    %115 = vector.load %arg7[%c0_41, %c0_42, %c24] : memref<1x8x32xbf16, #tpu.memory_space<vmem>>, vector<1x8x8xbf16>
    %116 = vector.shape_cast %115 : vector<1x8x8xbf16> to vector<8x8xbf16>
    %117 = vector.shape_cast %114 : vector<8x8xbf16> to vector<1x8x8xbf16>
    tpu.vector_store %arg7[%c0_41, %c0_42, %c24], %117 {strides = array<i32>} : memref<1x8x32xbf16, #tpu.memory_space<vmem>>, vector<1x8x8xbf16>,
    return
  }
  func.func @transform_0(%arg0: i32) -> (i32, i32, i32) {
    %c0_i32 = arith.constant 0 : i32
    %c0_i32_0 = arith.constant 0 : i32
    %c0_i32_1 = arith.constant 0 : i32
    return %arg0, %c0_i32, %c0_i32_0 : i32, i32, i32
  }
  func.func @transform_1(%arg0: i32) -> (i32, i32, i32) {
    %c0_i32 = arith.constant 0 : i32
    %c0_i32_0 = arith.constant 0 : i32
    %c0_i32_1 = arith.constant 0 : i32
    return %arg0, %c0_i32, %c0_i32_0 : i32, i32, i32
  }
  func.func @transform_2(%arg0: i32) -> (i32, i32) {
    %c0_i32 = arith.constant 0 : i32
    %c0_i32_0 = arith.constant 0 : i32
    %c0_i32_1 = arith.constant 0 : i32
    return %c0_i32, %c0_i32_0 : i32, i32
  }
  func.func @transform_3(%arg0: i32) -> (i32, i32) {
    %c0_i32 = arith.constant 0 : i32
    %c0_i32_0 = arith.constant 0 : i32
    %c0_i32_1 = arith.constant 0 : i32
    return %c0_i32, %c0_i32_0 : i32, i32
  }
  func.func @transform_4(%arg0: i32) -> (i32, i32) {
    %c0_i32 = arith.constant 0 : i32
    %c0_i32_0 = arith.constant 0 : i32
    %c0_i32_1 = arith.constant 0 : i32
    return %c0_i32, %c0_i32_0 : i32, i32
  }
  func.func @transform_5(%arg0: i32) -> (i32, i32) {
    %c0_i32 = arith.constant 0 : i32
    %c0_i32_0 = arith.constant 0 : i32
    %c0_i32_1 = arith.constant 0 : i32
    return %c0_i32, %c0_i32_0 : i32, i32
  }
  func.func @transform_6(%arg0: i32) -> (i32, i32, i32) {
    %c0_i32 = arith.constant 0 : i32
    %c0_i32_0 = arith.constant 0 : i32
    %c0_i32_1 = arith.constant 0 : i32
    return %arg0, %c0_i32, %c0_i32_0 : i32, i32, i32
  }
}

</mosaic_0001>

<llo_original>
// kernel: text_encoder_forward.24
$region0: #{text_encoder_forward.24}
  #allocation0 [shape = 'u32[]', space=smem, size = 0x4, offset = 0x4, fixed_abs, tag = 'smem constant byte address 0x4 - core index']
  #allocation1 [shape = 'u32[72,128]{1,0:T(1,128)}', space=vmem, size = 0x9000, scoped, tag = 'internal scratch']
  %s0 = inlined_call_operand.vmem [shape: f32[16,32], index: 0, kind: input, shape index: {}]
  %s1 = inlined_call_operand.hbm [shape: bf16[32,2048], index: 1, kind: input, shape index: {}]
  %s2 = inlined_call_operand.vmem [shape: f32[1,2048], index: 2, kind: input, shape index: {}]
  %s3 = inlined_call_operand.vmem [shape: bf16[16,2048], index: 3, kind: output, shape index: {}]
  %s4 = sld [smem:[#allocation0]]
  $region49: #{text_encoder_forward.24} parent=0
    _
  %s6 = ssub.s32 1, %s4
  %s7 = scalar_select 0, %s6, %s4
  $region1: #{text_encoder_forward.24} parent=0
    #allocation2 [shape = 'u8[65536]{0}', space=vmem, size = 0x10000, scoped, tag = 'input window, operand 1']
    #allocation3 [shape = 's32[2]{0}', space=sflag, size = 0x8, scoped, tag = 'scoped memory for text_encoder_forward.24']
    %8 = vsyncpa [#allocation3], 0
    %s9 = scalar_lea.sflag [#allocation3], 1
    %10 = vsyncpa %s9, 0
    loop: start=0, step=1, limit=10
    $region2: #{text_encoder_forward.24} parent=1 // loop_pre_header
      _
    $region3: #{text_encoder_forward.24} parent=1 // loop_header
      %s12 = sphi 0, %s16
      %p13 = scmp.ge.s32.totalorder %s12, 10
      %s19 = sphi 0, %s31
      %s20 = sphi 0, %s27
      %s21 = sphi 0, %s19
      %s22 = sphi 0, %s20
      %s23 = sphi 0, %s21
      %s24 = sphi 0, %s22
      %s34 = sphi 0, %s36
      %s37 = sphi 0, %s34
      %s38 = sphi 0, %s37
      %s54 = sphi 0, %s38
      %s60 = sphi 0, %s62
      %s63 = sphi 0, %s60
      %s64 = sphi 0, %s63
      %s80 = sphi 0, %s64
      %s86 = sphi 0, %s88
      %s89 = sphi 0, %s86
      %s90 = sphi 0, %s89
      %s106 = sphi 0, %s90
      %s114 = sphi 0, %s116
      %s117 = sphi 0, %s114
      %s118 = sphi 0, %s117
      %s134 = sphi 0, %s118
    $region4: #{text_encoder_forward.24} parent=1 // loop_header_branch
      %15 = sbr.rel (%p13) target = $region8
    $region5: #{text_encoder_forward.24} parent=1 // loop_body
      %s17 = ssub.s32 %s12, 1
      %s18 = ssub.s32 %s12, 2
      %s25 = sadd.s32 1, %s20
      %p26 = scmp.ge.s32.totalorder %s25, 2
      %s27 = scalar_select %p26, 0, %s25
      %s28 = sadd.s32 1, %s19
      %s29 = scalar_select %p26, %s28, %s19
      %p30 = scmp.ge.s32.totalorder %s29, 4
      %s31 = scalar_select %p30, 0, %s29
      %s32 = ssub.s32 %s20, %s27
      %p33 = scmp.eq.s32.totalorder %s32, 0
      %s35 = sadd.s32 %s34, 1
      %s36 = scalar_select %p33, %s34, %s35
      %p39 = pneg %p33
      %p40 = scmp.eq.s32.totalorder %s12, 7
      %p41 = por %p39, %p40
      %p42 = scmp.ne.s32.totalorder %s34, %s37
      %p43 = scmp.eq.s32.totalorder %s12, 0
      %p44 = por %p42, %p43
      %p45 = scmp.ne.s32.totalorder %s34, %s37
      %p46 = scmp.eq.s32.totalorder %s17, 7
      %p47 = por %p45, %p46
      %p48 = scmp.ne.s32.totalorder %s37, %s38
      %p49 = scmp.eq.s32.totalorder %s17, 0
      %p50 = por %p48, %p49
      %p51 = scmp.ne.s32.totalorder %s37, %s38
      %p52 = scmp.eq.s32.totalorder %s18, 7
      %p53 = por %p51, %p52
      %p55 = scmp.ne.s32.totalorder %s38, %s54
      %p56 = scmp.eq.s32.totalorder %s18, 0
      %p57 = por %p55, %p56
      %s58 = ssub.s32 %s19, %s31
      %p59 = scmp.eq.s32.totalorder %s58, 0
      %s61 = sadd.s32 %s60, 1
      %s62 = scalar_select %p59, %s60, %s61
      %p65 = pneg %p59
      %p66 = scmp.eq.s32.totalorder %s12, 7
      %p67 = por %p65, %p66
      %p68 = scmp.ne.s32.totalorder %s60, %s63
      %p69 = scmp.eq.s32.totalorder %s12, 0
      %p70 = por %p68, %p69
      %p71 = scmp.ne.s32.totalorder %s60, %s63
      %p72 = scmp.eq.s32.totalorder %s17, 7
      %p73 = por %p71, %p72
      %p74 = scmp.ne.s32.totalorder %s63, %s64
      %p75 = scmp.eq.s32.totalorder %s17, 0
      %p76 = por %p74, %p75
      %p77 = scmp.ne.s32.totalorder %s63, %s64
      %p78 = scmp.eq.s32.totalorder %s18, 7
      %p79 = por %p77, %p78
      %p81 = scmp.ne.s32.totalorder %s64, %s80
      %p82 = scmp.eq.s32.totalorder %s18, 0
      %p83 = por %p81, %p82
      %s84 = ssub.s32 %s19, %s31
      %p85 = scmp.eq.s32.totalorder %s84, 0
      %s87 = sadd.s32 %s86, 1
      %s88 = scalar_select %p85, %s86, %s87
      %p91 = pneg %p85
      %p92 = scmp.eq.s32.totalorder %s12, 7
      %p93 = por %p91, %p92
      %p94 = scmp.ne.s32.totalorder %s86, %s89
      %p95 = scmp.eq.s32.totalorder %s12, 0
      %p96 = por %p94, %p95
      %p97 = scmp.ne.s32.totalorder %s86, %s89
      %p98 = scmp.eq.s32.totalorder %s17, 7
      %p99 = por %p97, %p98
      %p100 = scmp.ne.s32.totalorder %s89, %s90
      %p101 = scmp.eq.s32.totalorder %s17, 0
      %p102 = por %p100, %p101
      %p103 = scmp.ne.s32.totalorder %s89, %s90
      %p104 = scmp.eq.s32.totalorder %s18, 7
      %p105 = por %p103, %p104
      %p107 = scmp.ne.s32.totalorder %s90, %s106
      %p108 = scmp.eq.s32.totalorder %s18, 0
      %p109 = por %p107, %p108
      %s110 = ssub.s32 %s20, %s27
      %s111 = ssub.s32 %s19, %s31
      %s112 = sor.u32 %s110, %s111
      %p113 = scmp.eq.s32.totalorder %s112, 0
      %s115 = sadd.s32 %s114, 1
      %s116 = scalar_select %p113, %s114, %s115
      %p119 = pneg %p113
      %p120 = scmp.eq.s32.totalorder %s12, 7
      %p121 = por %p119, %p120
      %p122 = scmp.ne.s32.totalorder %s114, %s117
      %p123 = scmp.eq.s32.totalorder %s12, 0
      %p124 = por %p122, %p123
      %p125 = scmp.ne.s32.totalorder %s114, %s117
      %p126 = scmp.eq.s32.totalorder %s17, 7
      %p127 = por %p125, %p126
      %p128 = scmp.ne.s32.totalorder %s117, %s118
      %p129 = scmp.eq.s32.totalorder %s17, 0
      %p130 = por %p128, %p129
      %p131 = scmp.ne.s32.totalorder %s117, %s118
      %p132 = scmp.eq.s32.totalorder %s18, 7
      %p133 = por %p131, %p132
      %p135 = scmp.ne.s32.totalorder %s118, %s134
      %p136 = scmp.eq.s32.totalorder %s18, 0
      %p137 = por %p135, %p136
      %p138 = scmp.le.s32.totalorder 1, %s12
      %p139 = scmp.lt.s32.totalorder %s12, 9
      %p140 = pnand %p138, %p139
      %p141 = pneg %p140
      // Predicated region
      $region9: #{text_encoder_forward.24} parent=5 // pred_check
        _
      $region10: #{text_encoder_forward.24} parent=5 // pred_check_branch
        %143 = sbr.rel (%p140) target = $region12
      $region11: #{text_encoder_forward.24} parent=5 // pred_region
        %s144 = ssub.s32 %s12, 1
      $region12: #{text_encoder_forward.24} parent=5 // pred_fallthru
        _
      %p145 = scmp.lt.s32.totalorder %s12, 8
      // Predicated region
      $region13: #{text_encoder_forward.24} parent=5 // pred_check
        %p146 = pneg %p145
      $region14: #{text_encoder_forward.24} parent=5 // pred_check_branch
        %148 = sbr.rel (%p146) target = $region16
      $region15: #{text_encoder_forward.24} parent=5 // pred_region
        // Predicated region
        $region17: #{text_encoder_forward.24} parent=15 // pred_check
          %p149 = pneg %p44
        $region18: #{text_encoder_forward.24} parent=15 // pred_check_branch
          %151 = sbr.rel (%p149) target = $region20
        $region19: #{text_encoder_forward.24} parent=15 // pred_region
          %p152 = scmp.lt.s32.totalorder %s20, 1
          %s153 = scalar_select %p152, %s20, 1
          %s154 = smul.addr %s153, 8
          %s155 = scalar_lea.vmem %s0, %s154
        $region20: #{text_encoder_forward.24} parent=15 // pred_fallthru
          _
        // Predicated region
        $region21: #{text_encoder_forward.24} parent=15 // pred_check
          %p156 = pneg %p70
        $region22: #{text_encoder_forward.24} parent=15 // pred_check_branch
          %158 = sbr.rel (%p156) target = $region24
        $region23: #{text_encoder_forward.24} parent=15 // pred_region
          %s159 = sand.u32 %s60, 1
          %s160 = scalar_lea.sflag [#allocation3], %s159
          %s161 = sand.u32 %s60, 1
          %s162 = smul.addr %s161, 64
          %s163 = scalar_lea.vmem [#allocation2], %s162
          %s164 = smul.u32 4, %s19
          %166 = vsyncadd %s160, 0
          %s167 = smul.addr %s164, 4
          %s168 = scalar_lea.hbm %s1, %s167
          %s169 = sshll.u32 %s168, 4
          %s170 = int_to_ptr.hbm [resolvable:$true] %s169
          %s171 = sshll.u32 %s163, 4
          %s172 = int_to_ptr.vmem [resolvable:$true] %s171
          %177 = dma.hbm_to_vmem [thread:$0]  %s170, 1024, %s172, %s160, 1024, 256, 16
        $region24: #{text_encoder_forward.24} parent=15 // pred_fallthru
          _
        // Predicated region
        $region25: #{text_encoder_forward.24} parent=15 // pred_check
          %p178 = pneg %p96
        $region26: #{text_encoder_forward.24} parent=15 // pred_check_branch
          %180 = sbr.rel (%p178) target = $region28
        $region27: #{text_encoder_forward.24} parent=15 // pred_region
          %s181 = smul.u32 4, %s19
          %p182 = scmp.lt.s32.totalorder %s181, 15
          %s183 = scalar_select %p182, %s181, 15
          %s184 = scalar_lea.vmem %s2, %s183
          %s185 = smul.u32 4, %s19
        $region28: #{text_encoder_forward.24} parent=15 // pred_fallthru
          _
      $region16: #{text_encoder_forward.24} parent=5 // pred_fallthru
        _
      %p186 = scmp.le.s32.totalorder 1, %s12
      %p187 = scmp.lt.s32.totalorder %s12, 9
      %p188 = pnand %p186, %p187
      %p189 = pneg %p188
      // Predicated region
      $region29: #{text_encoder_forward.24} parent=5 // pred_check
        _
      $region30: #{text_encoder_forward.24} parent=5 // pred_check_branch
        %191 = sbr.rel (%p188) target = $region32
      $region31: #{text_encoder_forward.24} parent=5 // pred_region
        %s192 = ssub.s32 %s12, 1
        %s193 = sand.u32 %s63, 1
        %s194 = scalar_lea.sflag [#allocation3], %s193
        %s195 = sand.u32 %s63, 1
        %s196 = smul.addr %s195, 64
        %s197 = scalar_lea.vmem [#allocation2], %s196
        // Predicated region
        $region33: #{text_encoder_forward.24} parent=31 // pred_check
          %p198 = pneg %p76
        $region34: #{text_encoder_forward.24} parent=31 // pred_check_branch
          %200 = sbr.rel (%p198) target = $region36
        $region35: #{text_encoder_forward.24} parent=31 // pred_region
          %202 = dma.done %s194, 1024
        $region36: #{text_encoder_forward.24} parent=31 // pred_fallthru
          _
        %p203 = scmp.lt.s32.totalorder %s22, 1
        %s204 = scalar_select %p203, %s22, 1
        %s205 = smul.addr %s204, 8
        %s206 = scalar_lea.vmem %s0, %s205
        %p207 = pneg %p50
        %p208 = pneg %p47
        %s209 = sand.u32 %s63, 1
        %s210 = scalar_lea.sflag [#allocation3], %s209
        %s211 = sand.u32 %s63, 1
        %s212 = smul.addr %s211, 64
        %s213 = scalar_lea.vmem [#allocation2], %s212
        %p214 = pneg %p76
        %p215 = pneg %p73
        %s216 = smul.u32 4, %s21
        %p217 = scmp.lt.s32.totalorder %s216, 15
        %s218 = scalar_select %p217, %s216, 15
        %s219 = scalar_lea.vmem %s2, %s218
        %p220 = pneg %p102
        %p221 = pneg %p99
        %p222 = pneg %p130
        %p223 = pneg %p127
        %s224 = smul.u32 4, %s21
        %p225 = scmp.lt.s32.totalorder %s22, 1
        %s226 = scalar_select %p225, %s22, 1
        %p227 = scmp.lt.s32.totalorder %s224, 15
        %s228 = scalar_select %p227, %s224, 15
        %s229 = smul.addr %s226, 16
        %s230 = sadd.s32 %s228, %s229
        %s231 = smul.addr %s230, 4
        %s232 = scalar_lea.vmem %s3, %s231
        %p233 = scmp.lt.s32.totalorder %s22, 1
        %s234 = scalar_select %p233, %s22, 1
        %s235 = smul.addr %s234, 8
        %s236 = scalar_lea.vmem %s0, %s235
        %s237 = smul.u32 4, %s21
        %s238 = smul.u32 4, %s21
        %p239 = scmp.lt.s32.totalorder %s238, 15
        %s240 = scalar_select %p239, %s238, 15
        %s241 = scalar_lea.vmem %s2, %s240
        %s242 = smul.u32 4, %s21
        %s243 = smul.u32 4, %s21
        %p244 = scmp.lt.s32.totalorder %s22, 1
        %s245 = scalar_select %p244, %s22, 1
        %p246 = scmp.lt.s32.totalorder %s243, 15
        %s247 = scalar_select %p246, %s243, 15
        %s248 = smul.addr %s245, 16
        %s249 = sadd.s32 %s247, %s248
        %s250 = smul.addr %s249, 4
        %s251 = scalar_lea.vmem %s3, %s250
        %s252 = smul.u32 4, %s21
        %v254 = vld [vmem:[%s236] sm:$0xff]
        %v255 = vpack.c.bf16 %v254, %v254
        %v256 = vld [vmem:[%s197] sm:$0xff]
        %v257 = vld [vmem:[%s197 + $0x8] sm:$0xff]
        %v258 = vld [vmem:[%s197 + $0x10] sm:$0xff]
        %v259 = vld [vmem:[%s197 + $0x18] sm:$0xff]
        %v260 = vld [vmem:[%s197 + $0x20] sm:$0xff]
        %v261 = vld [vmem:[%s197 + $0x28] sm:$0xff]
        %v262 = vld [vmem:[%s197 + $0x30] sm:$0xff]
        %v263 = vld [vmem:[%s197 + $0x38] sm:$0xff]
        %v264 = vld [vmem:[%s241] sm:$0xf]
        %v266 = vperm.slane %v264, 0
        %v267 = vperm.slane %v264, 1
        %v268 = vperm.slane %v264, 2
        %v269 = vperm.slane %v264, 3
        %v282 = vunpack.c.l.b16 %v256
        %v283 = vunpack.c.h.b16 %v256
        %v284 = vunpack.c.l.b16 %v257
        %v285 = vunpack.c.h.b16 %v257
        %v286 = vunpack.c.l.b16 %v258
        %v287 = vunpack.c.h.b16 %v258
        %v288 = vunpack.c.l.b16 %v259
        %v289 = vunpack.c.h.b16 %v259
        %v290 = vunpack.c.l.b16 %v260
        %v291 = vunpack.c.h.b16 %v260
        %v292 = vunpack.c.l.b16 %v261
        %v293 = vunpack.c.h.b16 %v261
        %v294 = vunpack.c.l.b16 %v262
        %v295 = vunpack.c.h.b16 %v262
        %v296 = vunpack.c.l.b16 %v263
        %v297 = vunpack.c.h.b16 %v263
        %v298 = vpack.c.b16 %v286, %v282
        %v299 = vpack.c.b16 %v287, %v283
        %v300 = vpack.c.b16 %v288, %v284
        %v301 = vpack.c.b16 %v289, %v285
        %v302 = vpack.c.b16 %v294, %v290
        %v303 = vpack.c.b16 %v295, %v291
        %v304 = vpack.c.b16 %v296, %v292
        %v305 = vpack.c.b16 %v297, %v293
        %vm314 = vcmask 261120
        %v316 = vsel %vm314, %v255, 0
        %318 = vmatpush.bf16.msra.mxu0 0
        %319 = vmatpush.bf16.msra.mxu0 0
        %320 = vmatpush.bf16.msra.mxu0 0
        %321 = vmatpush.bf16.msra.mxu0 0
        %322 = vmatpush.bf16.msra.mxu0 0
        %323 = vmatpush.bf16.msra.mxu0 0
        %324 = vmatpush.bf16.msra.mxu0 %v302
        %325 = vmatpush.bf16.msra.mxu0 %v298
        %326 = vmatmul.bf16.gmra.mxu0 %v316
        %v327 = vpop.f32.mrf.mxu0
        %v328 = vadd.f32 %v266, %v327
        %v329 = vpop.f32.mrf.mxu0
        %330 = vdwg.mxu0
        %331 = vmatpush.bf16.msra.mxu0 0
        %332 = vmatpush.bf16.msra.mxu0 0
        %333 = vmatpush.bf16.msra.mxu0 0
        %334 = vmatpush.bf16.msra.mxu0 0
        %335 = vmatpush.bf16.msra.mxu0 0
        %336 = vmatpush.bf16.msra.mxu0 0
        %337 = vmatpush.bf16.msra.mxu0 %v303
        %338 = vmatpush.bf16.msra.mxu0 %v299
        %339 = vmatmul.bf16.gmra.mxu0 %v316
        %v340 = vpop.f32.mrf.mxu0
        %v341 = vadd.f32 %v267, %v340
        %v342 = vpop.f32.mrf.mxu0
        %343 = vdwg.mxu0
        %344 = vmatpush.bf16.msra.mxu0 0
        %345 = vmatpush.bf16.msra.mxu0 0
        %346 = vmatpush.bf16.msra.mxu0 0
        %347 = vmatpush.bf16.msra.mxu0 0
        %348 = vmatpush.bf16.msra.mxu0 0
        %349 = vmatpush.bf16.msra.mxu0 0
        %350 = vmatpush.bf16.msra.mxu0 %v304
        %351 = vmatpush.bf16.msra.mxu0 %v300
        %352 = vmatmul.bf16.gmra.mxu0 %v316
        %v353 = vpop.f32.mrf.mxu0
        %v354 = vadd.f32 %v268, %v353
        %v355 = vpop.f32.mrf.mxu0
        %356 = vdwg.mxu0
        %357 = vmatpush.bf16.msra.mxu0 0
        %358 = vmatpush.bf16.msra.mxu0 0
        %359 = vmatpush.bf16.msra.mxu0 0
        %360 = vmatpush.bf16.msra.mxu0 0
        %361 = vmatpush.bf16.msra.mxu0 0
        %362 = vmatpush.bf16.msra.mxu0 0
        %363 = vmatpush.bf16.msra.mxu0 %v305
        %364 = vmatpush.bf16.msra.mxu0 %v301
        %365 = vmatmul.bf16.gmra.mxu0 %v316
        %v366 = vpop.f32.mrf.mxu0
        %v367 = vadd.f32 %v269, %v366
        %v368 = vpop.f32.mrf.mxu0
        %369 = vdwg.mxu0
        %v370 = vmax.f32 %v328, 0.0
        %v371 = vmax.f32 %v341, 0.0
        %v372 = vmax.f32 %v354, 0.0
        %v373 = vmax.f32 %v367, 0.0
        %v374 = vpack.c.bf16 %v371, %v370
        %v375 = vpack.c.bf16 %v373, %v372
        %376 = vst [vmem:[%s251] sm:$0xff] %v374
        %377 = vst [vmem:[%s251 + $0x8] sm:$0xff] %v375
        %s378 = smul.u32 4, %s21
        %p379 = scmp.lt.s32.totalorder %s22, 1
        %s380 = scalar_select %p379, %s22, 1
        %p381 = scmp.lt.s32.totalorder %s378, 15
        %s382 = scalar_select %p381, %s378, 15
        %s383 = smul.addr %s380, 16
        %s384 = sadd.s32 %s382, %s383
        %s385 = smul.addr %s384, 4
        %s386 = scalar_lea.vmem %s3, %s385
        // Predicated region
        $region37: #{text_encoder_forward.24} parent=31 // pred_check
          %p387 = pneg %p127
        $region38: #{text_encoder_forward.24} parent=31 // pred_check_branch
          %389 = sbr.rel (%p387) target = $region40
        $region39: #{text_encoder_forward.24} parent=31 // pred_region
          %s390 = smul.u32 4, %s21
        $region40: #{text_encoder_forward.24} parent=31 // pred_fallthru
          _
      $region32: #{text_encoder_forward.24} parent=5 // pred_fallthru
        _
      %p391 = scmp.le.s32.totalorder 2, %s12
      // Predicated region
      $region41: #{text_encoder_forward.24} parent=5 // pred_check
        %p392 = pneg %p391
      $region42: #{text_encoder_forward.24} parent=5 // pred_check_branch
        %394 = sbr.rel (%p392) target = $region44
      $region43: #{text_encoder_forward.24} parent=5 // pred_region
        %s395 = ssub.s32 %s12, 2
        // Predicated region
        $region45: #{text_encoder_forward.24} parent=43 // pred_check
          %p396 = pneg %p133
        $region46: #{text_encoder_forward.24} parent=43 // pred_check_branch
          %398 = sbr.rel (%p396) target = $region48
        $region47: #{text_encoder_forward.24} parent=43 // pred_region
          %s399 = smul.u32 4, %s23
          %p400 = scmp.lt.s32.totalorder %s24, 1
          %s401 = scalar_select %p400, %s24, 1
          %p402 = scmp.lt.s32.totalorder %s399, 15
          %s403 = scalar_select %p402, %s399, 15
          %s404 = smul.addr %s401, 16
          %s405 = sadd.s32 %s403, %s404
          %s406 = smul.addr %s405, 4
          %s407 = scalar_lea.vmem %s3, %s406
        $region48: #{text_encoder_forward.24} parent=43 // pred_fallthru
          _
      $region44: #{text_encoder_forward.24} parent=5 // pred_fallthru
        _
    $region6: #{text_encoder_forward.24} parent=1 // loop_footer
      %s16 = sadd.s32 1, %s12
    $region7: #{text_encoder_forward.24} parent=1 // loop_footer_branch
      %11 = sbr.rel target = $region3
    $region8: #{text_encoder_forward.24} parent=1 // loop_exit
      _
    %408 = vsyncpa [#allocation3], 1
    %s409 = scalar_lea.sflag [#allocation3], 1
    %410 = vsyncpa %s409, 1

// kernel: text_encoder_forward.31
$region0: #{text_encoder_forward.31}
  #allocation0 [shape = 'u32[]', space=smem, size = 0x4, offset = 0x4, fixed_abs, tag = 'smem constant byte address 0x4 - core index']
  #allocation1 [shape = 'u32[72,128]{1,0:T(1,128)}', space=vmem, size = 0x9000, scoped, tag = 'internal scratch']
  %s0 = inlined_call_operand.vmem [shape: f32[2,8,32], index: 0, kind: input, shape index: {}]
  %s1 = inlined_call_operand.vmem [shape: bf16[32,96], index: 1, kind: input, shape index: {}]
  %s2 = inlined_call_operand.vmem [shape: f32[1,96], index: 2, kind: input, shape index: {}]
  %s3 = inlined_call_operand.vmem [shape: bf16[2,8,32], index: 3, kind: output, shape index: {}]
  %s4 = sld [smem:[#allocation0]]
  $region45: #{text_encoder_forward.31} parent=0
    _
  %s6 = ssub.s32 1, %s4
  %s7 = scalar_select 0, %s6, %s4
  loop: start=0, step=1, limit=4
  $region2: #{text_encoder_forward.31} parent=0 // loop_pre_header
    _
  $region3: #{text_encoder_forward.31} parent=0 // loop_header
    %s9 = sphi 0, %s13
    %p10 = scmp.ge.s32.totalorder %s9, 4
    %s19 = sphi 0, %s21
    %s22 = sphi 0, %s19
    %s23 = sphi 0, %s22
    %s39 = sphi 0, %s23
    %s43 = sphi 0, %s43
    %s45 = sphi 0, %s43
    %s46 = sphi 0, %s45
    %s60 = sphi 0, %s46
    %s64 = sphi 0, %s64
    %s66 = sphi 0, %s64
    %s67 = sphi 0, %s66
    %s81 = sphi 0, %s67
    %s87 = sphi 0, %s89
    %s90 = sphi 0, %s87
    %s91 = sphi 0, %s90
    %s107 = sphi 0, %s91
  $region4: #{text_encoder_forward.31} parent=0 // loop_header_branch
    %12 = sbr.rel (%p10) target = $region8
  $region5: #{text_encoder_forward.31} parent=0 // loop_body
    %s14 = ssub.s32 %s9, 1
    %s15 = ssub.s32 %s9, 2
    %s16 = sadd.s32 %s9, 1
    %s17 = ssub.s32 %s9, %s16
    %p18 = scmp.eq.s32.totalorder %s17, 0
    %s20 = sadd.s32 %s19, 1
    %s21 = scalar_select %p18, %s19, %s20
    %p24 = pneg %p18
    %p25 = scmp.eq.s32.totalorder %s9, 1
    %p26 = por %p24, %p25
    %p27 = scmp.ne.s32.totalorder %s19, %s22
    %p28 = scmp.eq.s32.totalorder %s9, 0
    %p29 = por %p27, %p28
    %p30 = scmp.ne.s32.totalorder %s19, %s22
    %p31 = scmp.eq.s32.totalorder %s14, 1
    %p32 = por %p30, %p31
    %p33 = scmp.ne.s32.totalorder %s22, %s23
    %p34 = scmp.eq.s32.totalorder %s14, 0
    %p35 = por %p33, %p34
    %p36 = scmp.ne.s32.totalorder %s22, %s23
    %p37 = scmp.eq.s32.totalorder %s15, 1
    %p38 = por %p36, %p37
    %p40 = scmp.ne.s32.totalorder %s23, %s39
    %p41 = scmp.eq.s32.totalorder %s15, 0
    %p42 = por %p40, %p41
    %s44 = sadd.s32 %s43, 1
    %p47 = scmp.eq.s32.totalorder %s9, 1
    %p48 = scmp.ne.s32.totalorder %s43, %s45
    %p49 = scmp.eq.s32.totalorder %s9, 0
    %p50 = por %p48, %p49
    %p51 = scmp.ne.s32.totalorder %s43, %s45
    %p52 = scmp.eq.s32.totalorder %s14, 1
    %p53 = por %p51, %p52
    %p54 = scmp.ne.s32.totalorder %s45, %s46
    %p55 = scmp.eq.s32.totalorder %s14, 0
    %p56 = por %p54, %p55
    %p57 = scmp.ne.s32.totalorder %s45, %s46
    %p58 = scmp.eq.s32.totalorder %s15, 1
    %p59 = por %p57, %p58
    %p61 = scmp.ne.s32.totalorder %s46, %s60
    %p62 = scmp.eq.s32.totalorder %s15, 0
    %p63 = por %p61, %p62
    %s65 = sadd.s32 %s64, 1
    %p68 = scmp.eq.s32.totalorder %s9, 1
    %p69 = scmp.ne.s32.totalorder %s64, %s66
    %p70 = scmp.eq.s32.totalorder %s9, 0
    %p71 = por %p69, %p70
    %p72 = scmp.ne.s32.totalorder %s64, %s66
    %p73 = scmp.eq.s32.totalorder %s14, 1
    %p74 = por %p72, %p73
    %p75 = scmp.ne.s32.totalorder %s66, %s67
    %p76 = scmp.eq.s32.totalorder %s14, 0
    %p77 = por %p75, %p76
    %p78 = scmp.ne.s32.totalorder %s66, %s67
    %p79 = scmp.eq.s32.totalorder %s15, 1
    %p80 = por %p78, %p79
    %p82 = scmp.ne.s32.totalorder %s67, %s81
    %p83 = scmp.eq.s32.totalorder %s15, 0
    %p84 = por %p82, %p83
    %s85 = ssub.s32 %s9, %s16
    %p86 = scmp.eq.s32.totalorder %s85, 0
    %s88 = sadd.s32 %s87, 1
    %s89 = scalar_select %p86, %s87, %s88
    %p92 = pneg %p86
    %p93 = scmp.eq.s32.totalorder %s9, 1
    %p94 = por %p92, %p93
    %p95 = scmp.ne.s32.totalorder %s87, %s90
    %p96 = scmp.eq.s32.totalorder %s9, 0
    %p97 = por %p95, %p96
    %p98 = scmp.ne.s32.totalorder %s87, %s90
    %p99 = scmp.eq.s32.totalorder %s14, 1
    %p100 = por %p98, %p99
    %p101 = scmp.ne.s32.totalorder %s90, %s91
    %p102 = scmp.eq.s32.totalorder %s14, 0
    %p103 = por %p101, %p102
    %p104 = scmp.ne.s32.totalorder %s90, %s91
    %p105 = scmp.eq.s32.totalorder %s15, 1
    %p106 = por %p104, %p105
    %p108 = scmp.ne.s32.totalorder %s91, %s107
    %p109 = scmp.eq.s32.totalorder %s15, 0
    %p110 = por %p108, %p109
    %p111 = scmp.le.s32.totalorder 1, %s9
    %p112 = scmp.lt.s32.totalorder %s9, 3
    %p113 = pnand %p111, %p112
    %p114 = pneg %p113
    // Predicated region
    $region9: #{text_encoder_forward.31} parent=5 // pred_check
      _
    $region10: #{text_encoder_forward.31} parent=5 // pred_check_branch
      %116 = sbr.rel (%p113) target = $region12
    $region11: #{text_encoder_forward.31} parent=5 // pred_region
      %s117 = ssub.s32 %s9, 1
      // Predicated region
      $region13: #{text_encoder_forward.31} parent=11 // pred_check
        %p118 = pneg %p56
      $region14: #{text_encoder_forward.31} parent=11 // pred_check_branch
        %120 = sbr.rel (%p118) target = $region16
      $region15: #{text_encoder_forward.31} parent=11 // pred_region
        _
      $region16: #{text_encoder_forward.31} parent=11 // pred_fallthru
        _
      // Predicated region
      $region17: #{text_encoder_forward.31} parent=11 // pred_check
        %p121 = pneg %p77
      $region18: #{text_encoder_forward.31} parent=11 // pred_check_branch
        %123 = sbr.rel (%p121) target = $region20
      $region19: #{text_encoder_forward.31} parent=11 // pred_region
        _
      $region20: #{text_encoder_forward.31} parent=11 // pred_fallthru
        _
    $region12: #{text_encoder_forward.31} parent=5 // pred_fallthru
      _
    %p124 = scmp.lt.s32.totalorder %s9, 2
    // Predicated region
    $region21: #{text_encoder_forward.31} parent=5 // pred_check
      %p125 = pneg %p124
    $region22: #{text_encoder_forward.31} parent=5 // pred_check_branch
      %127 = sbr.rel (%p125) target = $region24
    $region23: #{text_encoder_forward.31} parent=5 // pred_region
      // Predicated region
      $region25: #{text_encoder_forward.31} parent=23 // pred_check
        %p128 = pneg %p29
      $region26: #{text_encoder_forward.31} parent=23 // pred_check_branch
        %130 = sbr.rel (%p128) target = $region28
      $region27: #{text_encoder_forward.31} parent=23 // pred_region
        %p131 = scmp.lt.s32.totalorder %s9, 1
        %s132 = scalar_select %p131, %s9, 1
        %s133 = smul.addr %s132, 8
        %s134 = scalar_lea.vmem %s0, %s133
      $region28: #{text_encoder_forward.31} parent=23 // pred_fallthru
        _
    $region24: #{text_encoder_forward.31} parent=5 // pred_fallthru
      _
    %p135 = scmp.le.s32.totalorder 1, %s9
    %p136 = scmp.lt.s32.totalorder %s9, 3
    %p137 = pnand %p135, %p136
    %p138 = pneg %p137
    // Predicated region
    $region29: #{text_encoder_forward.31} parent=5 // pred_check
      _
    $region30: #{text_encoder_forward.31} parent=5 // pred_check_branch
      %140 = sbr.rel (%p137) target = $region32
    $region31: #{text_encoder_forward.31} parent=5 // pred_region
      %s141 = ssub.s32 %s9, 1
      %p142 = scmp.lt.s32.totalorder %s14, 1
      %s143 = scalar_select %p142, %s14, 1
      %s144 = smul.addr %s143, 8
      %s145 = scalar_lea.vmem %s0, %s144
      %p146 = pneg %p35
      %p147 = pneg %p32
      %p148 = pneg %p56
      %p149 = pneg %p53
      %p150 = pneg %p77
      %p151 = pneg %p74
      %p152 = pneg %p103
      %p153 = pneg %p100
      %p154 = scmp.lt.s32.totalorder %s14, 1
      %s155 = scalar_select %p154, %s14, 1
      %s156 = smul.addr %s155, 4
      %s157 = scalar_lea.vmem %s3, %s156
      %p158 = scmp.lt.s32.totalorder %s14, 1
      %s159 = scalar_select %p158, %s14, 1
      %s160 = smul.addr %s159, 8
      %s161 = scalar_lea.vmem %s0, %s160
      %p162 = scmp.lt.s32.totalorder %s14, 1
      %s163 = scalar_select %p162, %s14, 1
      %s164 = smul.addr %s163, 4
      %s165 = scalar_lea.vmem %s3, %s164
      %v167 = vld [vmem:[%s161] sm:$0xff]
      %v168 = vpack.c.bf16 %v167, %v167
      %v169 = vld [vmem:[%s1] sm:$0xf]
      %v170 = vld [vmem:[%s1 + $0x4] sm:$0xf]
      %v171 = vld [vmem:[%s1 + $0x8] sm:$0xf]
      %v172 = vld [vmem:[%s1 + $0xc] sm:$0xf]
      %v173 = vld [vmem:[%s2] sm:$0x1]
      %v175 = vperm.slane %v173, 0
      %v181 = vunpack.c.l.b16 %v169
      %v182 = vunpack.c.l.b16 %v170
      %v183 = vunpack.c.l.b16 %v171
      %v184 = vunpack.c.l.b16 %v172
      %v185 = vpack.c.b16 %v182, %v181
      %v186 = vpack.c.b16 %v184, %v183
      %vm189 = vcmask 261120
      %v191 = vsel %vm189, %v168, 0
      %193 = vmatpush.bf16.msra.mxu0 0
      %194 = vmatpush.bf16.msra.mxu0 0
      %195 = vmatpush.bf16.msra.mxu0 0
      %196 = vmatpush.bf16.msra.mxu0 0
      %197 = vmatpush.bf16.msra.mxu0 0
      %198 = vmatpush.bf16.msra.mxu0 0
      %199 = vmatpush.bf16.msra.mxu0 %v186
      %200 = vmatpush.bf16.msra.mxu0 %v185
      %201 = vmatmul.bf16.gmra.mxu0 %v191
      %v202 = vpop.f32.mrf.mxu0
      %v203 = vadd.f32 %v175, %v202
      %v204 = vpop.f32.mrf.mxu0
      %205 = vdwg.mxu0
      %v206 = vpack.c.bf16 %v203, %v203
      %208 = vrot.lane.b32.xlu0 %v206, 96
      %v209 = vpop.permute.xlu0 %208
      %vm210 = vcmask 64512
      %v212 = vsel %vm210, %v206, 0
      %v215 = vsel %vm210, %v209, 0
      %217 = vmatpush.bf16.xpose.msra.mxu0 0
      %218 = vmatpush.bf16.xpose.msra.mxu0 0
      %219 = vmatpush.bf16.xpose.msra.mxu0 0
      %220 = vmatpush.bf16.xpose.msra.mxu0 0
      %221 = vmatpush.bf16.xpose.msra.mxu0 0
      %222 = vmatpush.bf16.xpose.msra.mxu0 0
      %223 = vmatpush.bf16.xpose.msra.mxu0 0
      %224 = vmatpush.bf16.xpose.msra.mxu0 %v215
      %225 = vmatmul.bf16.gmra.mxu0 %v212
      %v226 = vpop.f32.mrf.mxu0
      %v227 = vadd.f32 0.0, %v226
      %v228 = vpop.f32.mrf.mxu0
      %229 = vdwg.mxu0
      %v230 = vmul.f32 %v227, 0.35355338
      %v231 = vsel %vm210, %v230, -inf
      %232 = vmax.xlane.f32.xlu0 %v231
      %v233 = vpop.xlane.xlu0 %232
      %v234 = vsub.f32 %v230, %v233
      %v235 = vmul.f32 %v234, 1.442695
      %v236 = vpow.pop %v235
      %v237 = vsel %vm210, %v236, 0.0
      %238 = vadd.xlane.f32.xlu0 %v237
      %v239 = vpop.xlane.xlu0 %238
      %v240 = vrcp.pop %v239
      %v241 = vmul.f32 %v236, %v240
      %v242 = vpack.c.bf16 %v241, %v241
      %243 = vrot.lane.b32.xlu0 %v206, 64
      %v244 = vpop.permute.xlu0 %243
      %v246 = vsel %vm210, %v242, 0
      %vm248 = vcmask 1043456
      %v250 = vsel %vm248, %v244, 0
      %252 = vmatpush.bf16.msra.mxu0 0
      %253 = vmatpush.bf16.msra.mxu0 0
      %254 = vmatpush.bf16.msra.mxu0 0
      %255 = vmatpush.bf16.msra.mxu0 0
      %256 = vmatpush.bf16.msra.mxu0 0
      %257 = vmatpush.bf16.msra.mxu0 0
      %258 = vmatpush.bf16.msra.mxu0 0
      %259 = vmatpush.bf16.msra.mxu0 %v250
      %260 = vmatmul.bf16.gmra.mxu0 %v246
      %v261 = vpop.f32.mrf.mxu0
      %v262 = vadd.f32 0.0, %v261
      %v263 = vpop.f32.mrf.mxu0
      %264 = vdwg.mxu0
      %v265 = vpack.c.bf16 %v262, %v262
      %vm266 = vcmask 60416
      %267 = vst.msk [vmem:[%s165] sm:$0xf] %vm266, %v265
      %268 = vrot.lane.b32.xlu0 %v206, 120
      %v269 = vpop.permute.xlu0 %268
      %270 = vrot.lane.b32.xlu0 %v206, 88
      %v271 = vpop.permute.xlu0 %270
      %v273 = vsel %vm210, %v269, 0
      %v276 = vsel %vm210, %v271, 0
      %278 = vmatpush.bf16.xpose.msra.mxu0 0
      %279 = vmatpush.bf16.xpose.msra.mxu0 0
      %280 = vmatpush.bf16.xpose.msra.mxu0 0
      %281 = vmatpush.bf16.xpose.msra.mxu0 0
      %282 = vmatpush.bf16.xpose.msra.mxu0 0
      %283 = vmatpush.bf16.xpose.msra.mxu0 0
      %284 = vmatpush.bf16.xpose.msra.mxu0 0
      %285 = vmatpush.bf16.xpose.msra.mxu0 %v276
      %286 = vmatmul.bf16.gmra.mxu0 %v273
      %v287 = vpop.f32.mrf.mxu0
      %v288 = vadd.f32 0.0, %v287
      %v289 = vpop.f32.mrf.mxu0
      %290 = vdwg.mxu0
      %v291 = vmul.f32 %v288, 0.35355338
      %v292 = vsel %vm210, %v291, -inf
      %293 = vmax.xlane.f32.xlu0 %v292
      %v294 = vpop.xlane.xlu0 %293
      %v295 = vsub.f32 %v291, %v294
      %v296 = vmul.f32 %v295, 1.442695
      %v297 = vpow.pop %v296
      %v298 = vsel %vm210, %v297, 0.0
      %299 = vadd.xlane.f32.xlu0 %v298
      %v300 = vpop.xlane.xlu0 %299
      %v301 = vrcp.pop %v300
      %v302 = vmul.f32 %v297, %v301
      %v303 = vpack.c.bf16 %v302, %v302
      %304 = vrot.lane.b32.xlu0 %v206, 56
      %v305 = vpop.permute.xlu0 %304
      %v307 = vsel %vm210, %v303, 0
      %v310 = vsel %vm248, %v305, 0
      %312 = vmatpush.bf16.msra.mxu0 0
      %313 = vmatpush.bf16.msra.mxu0 0
      %314 = vmatpush.bf16.msra.mxu0 0
      %315 = vmatpush.bf16.msra.mxu0 0
      %316 = vmatpush.bf16.msra.mxu0 0
      %317 = vmatpush.bf16.msra.mxu0 0
      %318 = vmatpush.bf16.msra.mxu0 0
      %319 = vmatpush.bf16.msra.mxu0 %v310
      %320 = vmatmul.bf16.gmra.mxu0 %v307
      %v321 = vpop.f32.mrf.mxu0
      %v322 = vadd.f32 0.0, %v321
      %v323 = vpop.f32.mrf.mxu0
      %324 = vdwg.mxu0
      %v325 = vpack.c.bf16 %v322, %v322
      %327 = vrot.lane.b32.xlu0 %v325, 8
      %v328 = vpop.permute.xlu0 %327
      %vm330 = vcmask 126016
      %331 = vst.msk [vmem:[%s165] sm:$0xf] %vm330, %v328
      %332 = vrot.lane.b32.xlu0 %v206, 112
      %v333 = vpop.permute.xlu0 %332
      %334 = vrot.lane.b32.xlu0 %v206, 80
      %v335 = vpop.permute.xlu0 %334
      %v337 = vsel %vm210, %v333, 0
      %v340 = vsel %vm210, %v335, 0
      %342 = vmatpush.bf16.xpose.msra.mxu0 0
      %343 = vmatpush.bf16.xpose.msra.mxu0 0
      %344 = vmatpush.bf16.xpose.msra.mxu0 0
      %345 = vmatpush.bf16.xpose.msra.mxu0 0
      %346 = vmatpush.bf16.xpose.msra.mxu0 0
      %347 = vmatpush.bf16.xpose.msra.mxu0 0
      %348 = vmatpush.bf16.xpose.msra.mxu0 0
      %349 = vmatpush.bf16.xpose.msra.mxu0 %v340
      %350 = vmatmul.bf16.gmra.mxu0 %v337
      %v351 = vpop.f32.mrf.mxu0
      %v352 = vadd.f32 0.0, %v351
      %v353 = vpop.f32.mrf.mxu0
      %354 = vdwg.mxu0
      %v355 = vmul.f32 %v352, 0.35355338
      %v356 = vsel %vm210, %v355, -inf
      %357 = vmax.xlane.f32.xlu0 %v356
      %v358 = vpop.xlane.xlu0 %357
      %v359 = vsub.f32 %v355, %v358
      %v360 = vmul.f32 %v359, 1.442695
      %v361 = vpow.pop %v360
      %v362 = vsel %vm210, %v361, 0.0
      %363 = vadd.xlane.f32.xlu0 %v362
      %v364 = vpop.xlane.xlu0 %363
      %v365 = vrcp.pop %v364
      %v366 = vmul.f32 %v361, %v365
      %v367 = vpack.c.bf16 %v366, %v366
      %368 = vrot.lane.b32.xlu0 %v206, 48
      %v369 = vpop.permute.xlu0 %368
      %v371 = vsel %vm210, %v367, 0
      %v374 = vsel %vm248, %v369, 0
      %376 = vmatpush.bf16.msra.mxu0 0
      %377 = vmatpush.bf16.msra.mxu0 0
      %378 = vmatpush.bf16.msra.mxu0 0
      %379 = vmatpush.bf16.msra.mxu0 0
      %380 = vmatpush.bf16.msra.mxu0 0
      %381 = vmatpush.bf16.msra.mxu0 0
      %382 = vmatpush.bf16.msra.mxu0 0
      %383 = vmatpush.bf16.msra.mxu0 %v374
      %384 = vmatmul.bf16.gmra.mxu0 %v371
      %v385 = vpop.f32.mrf.mxu0
      %v386 = vadd.f32 0.0, %v385
      %v387 = vpop.f32.mrf.mxu0
      %388 = vdwg.mxu0
      %v389 = vpack.c.bf16 %v386, %v386
      %391 = vrot.lane.b32.xlu0 %v389, 16
      %v392 = vpop.permute.xlu0 %391
      %vm394 = vcmask 191616
      %395 = vst.msk [vmem:[%s165] sm:$0xf] %vm394, %v392
      %396 = vrot.lane.b32.xlu0 %v206, 104
      %v397 = vpop.permute.xlu0 %396
      %398 = vrot.lane.b32.xlu0 %v206, 72
      %v399 = vpop.permute.xlu0 %398
      %v401 = vsel %vm210, %v397, 0
      %v404 = vsel %vm210, %v399, 0
      %406 = vmatpush.bf16.xpose.msra.mxu0 0
      %407 = vmatpush.bf16.xpose.msra.mxu0 0
      %408 = vmatpush.bf16.xpose.msra.mxu0 0
      %409 = vmatpush.bf16.xpose.msra.mxu0 0
      %410 = vmatpush.bf16.xpose.msra.mxu0 0
      %411 = vmatpush.bf16.xpose.msra.mxu0 0
      %412 = vmatpush.bf16.xpose.msra.mxu0 0
      %413 = vmatpush.bf16.xpose.msra.mxu0 %v404
      %414 = vmatmul.bf16.gmra.mxu0 %v401
      %v415 = vpop.f32.mrf.mxu0
      %v416 = vadd.f32 0.0, %v415
      %v417 = vpop.f32.mrf.mxu0
      %418 = vdwg.mxu0
      %v419 = vmul.f32 %v416, 0.35355338
      %v420 = vsel %vm210, %v419, -inf
      %421 = vmax.xlane.f32.xlu0 %v420
      %v422 = vpop.xlane.xlu0 %421
      %v423 = vsub.f32 %v419, %v422
      %v424 = vmul.f32 %v423, 1.442695
      %v425 = vpow.pop %v424
      %v426 = vsel %vm210, %v425, 0.0
      %427 = vadd.xlane.f32.xlu0 %v426
      %v428 = vpop.xlane.xlu0 %427
      %v429 = vrcp.pop %v428
      %v430 = vmul.f32 %v425, %v429
      %v431 = vpack.c.bf16 %v430, %v430
      %432 = vrot.lane.b32.xlu0 %v206, 40
      %v433 = vpop.permute.xlu0 %432
      %v435 = vsel %vm210, %v431, 0
      %v438 = vsel %vm248, %v433, 0
      %440 = vmatpush.bf16.msra.mxu0 0
      %441 = vmatpush.bf16.msra.mxu0 0
      %442 = vmatpush.bf16.msra.mxu0 0
      %443 = vmatpush.bf16.msra.mxu0 0
      %444 = vmatpush.bf16.msra.mxu0 0
      %445 = vmatpush.bf16.msra.mxu0 0
      %446 = vmatpush.bf16.msra.mxu0 0
      %447 = vmatpush.bf16.msra.mxu0 %v438
      %448 = vmatmul.bf16.gmra.mxu0 %v435
      %v449 = vpop.f32.mrf.mxu0
      %v450 = vadd.f32 0.0, %v449
      %v451 = vpop.f32.mrf.mxu0
      %452 = vdwg.mxu0
      %v453 = vpack.c.bf16 %v450, %v450
      %455 = vrot.lane.b32.xlu0 %v453, 24
      %v456 = vpop.permute.xlu0 %455
      %vm458 = vcmask 257216
      %459 = vst.msk [vmem:[%s165] sm:$0xf] %vm458, %v456
      %p460 = scmp.lt.s32.totalorder %s14, 1
      %s461 = scalar_select %p460, %s14, 1
      %s462 = smul.addr %s461, 4
      %s463 = scalar_lea.vmem %s3, %s462
      // Predicated region
      $region33: #{text_encoder_forward.31} parent=31 // pred_check
        %p464 = pneg %p100
      $region34: #{text_encoder_forward.31} parent=31 // pred_check_branch
        %466 = sbr.rel (%p464) target = $region36
      $region35: #{text_encoder_forward.31} parent=31 // pred_region
        _
      $region36: #{text_encoder_forward.31} parent=31 // pred_fallthru
        _
    $region32: #{text_encoder_forward.31} parent=5 // pred_fallthru
      _
    %p467 = scmp.le.s32.totalorder 2, %s9
    // Predicated region
    $region37: #{text_encoder_forward.31} parent=5 // pred_check
      %p468 = pneg %p467
    $region38: #{text_encoder_forward.31} parent=5 // pred_check_branch
      %470 = sbr.rel (%p468) target = $region40
    $region39: #{text_encoder_forward.31} parent=5 // pred_region
      %s471 = ssub.s32 %s9, 2
      // Predicated region
      $region41: #{text_encoder_forward.31} parent=39 // pred_check
        %p472 = pneg %p106
      $region42: #{text_encoder_forward.31} parent=39 // pred_check_branch
        %474 = sbr.rel (%p472) target = $region44
      $region43: #{text_encoder_forward.31} parent=39 // pred_region
        %p475 = scmp.lt.s32.totalorder %s15, 1
        %s476 = scalar_select %p475, %s15, 1
        %s477 = smul.addr %s476, 4
        %s478 = scalar_lea.vmem %s3, %s477
      $region44: #{text_encoder_forward.31} parent=39 // pred_fallthru
        _
    $region40: #{text_encoder_forward.31} parent=5 // pred_fallthru
      _
  $region6: #{text_encoder_forward.31} parent=0 // loop_footer
    %s13 = sadd.s32 1, %s9
  $region7: #{text_encoder_forward.31} parent=0 // loop_footer_branch
    %8 = sbr.rel target = $region3
  $region8: #{text_encoder_forward.31} parent=0 // loop_exit
    _

// kernel: text_encoder_forward.32
$region0: #{text_encoder_forward.32}
  #allocation0 [shape = 'u32[]', space=smem, size = 0x4, offset = 0x4, fixed_abs, tag = 'smem constant byte address 0x4 - core index']
  #allocation1 [shape = 'u32[72,128]{1,0:T(1,128)}', space=vmem, size = 0x9000, scoped, tag = 'internal scratch']
  %s0 = inlined_call_operand.vmem [shape: bf16[16,32], index: 0, kind: input, shape index: {}]
  %s1 = inlined_call_operand.vmem [shape: bf16[32,32], index: 1, kind: input, shape index: {}]
  %s2 = inlined_call_operand.vmem [shape: f32[1,32], index: 2, kind: input, shape index: {}]
  %s3 = inlined_call_operand.vmem [shape: f32[16,32], index: 3, kind: input, shape index: {}]
  %s4 = inlined_call_operand.vmem [shape: f32[1,32], index: 4, kind: input, shape index: {}]
  %s5 = inlined_call_operand.vmem [shape: f32[1,32], index: 5, kind: input, shape index: {}]
  %s6 = inlined_call_operand.vmem [shape: f32[16,32], index: 6, kind: output, shape index: {}]
  %s7 = sld [smem:[#allocation0]]
  $region57: #{text_encoder_forward.32} parent=0
    _
  %s9 = ssub.s32 1, %s7
  %s10 = scalar_select 0, %s9, %s7
  loop: start=0, step=1, limit=4
  $region2: #{text_encoder_forward.32} parent=0 // loop_pre_header
    _
  $region3: #{text_encoder_forward.32} parent=0 // loop_header
    %s12 = sphi 0, %s16
    %p13 = scmp.ge.s32.totalorder %s12, 4
    %s22 = sphi 0, %s24
    %s25 = sphi 0, %s22
    %s26 = sphi 0, %s25
    %s42 = sphi 0, %s26
    %s46 = sphi 0, %s46
    %s48 = sphi 0, %s46
    %s49 = sphi 0, %s48
    %s63 = sphi 0, %s49
    %s67 = sphi 0, %s67
    %s69 = sphi 0, %s67
    %s70 = sphi 0, %s69
    %s84 = sphi 0, %s70
    %s90 = sphi 0, %s92
    %s93 = sphi 0, %s90
    %s94 = sphi 0, %s93
    %s110 = sphi 0, %s94
    %s114 = sphi 0, %s114
    %s116 = sphi 0, %s114
    %s117 = sphi 0, %s116
    %s131 = sphi 0, %s117
    %s135 = sphi 0, %s135
    %s137 = sphi 0, %s135
    %s138 = sphi 0, %s137
    %s152 = sphi 0, %s138
    %s158 = sphi 0, %s160
    %s161 = sphi 0, %s158
    %s162 = sphi 0, %s161
    %s178 = sphi 0, %s162
  $region4: #{text_encoder_forward.32} parent=0 // loop_header_branch
    %15 = sbr.rel (%p13) target = $region8
  $region5: #{text_encoder_forward.32} parent=0 // loop_body
    %s17 = ssub.s32 %s12, 1
    %s18 = ssub.s32 %s12, 2
    %s19 = sadd.s32 %s12, 1
    %s20 = ssub.s32 %s12, %s19
    %p21 = scmp.eq.s32.totalorder %s20, 0
    %s23 = sadd.s32 %s22, 1
    %s24 = scalar_select %p21, %s22, %s23
    %p27 = pneg %p21
    %p28 = scmp.eq.s32.totalorder %s12, 1
    %p29 = por %p27, %p28
    %p30 = scmp.ne.s32.totalorder %s22, %s25
    %p31 = scmp.eq.s32.totalorder %s12, 0
    %p32 = por %p30, %p31
    %p33 = scmp.ne.s32.totalorder %s22, %s25
    %p34 = scmp.eq.s32.totalorder %s17, 1
    %p35 = por %p33, %p34
    %p36 = scmp.ne.s32.totalorder %s25, %s26
    %p37 = scmp.eq.s32.totalorder %s17, 0
    %p38 = por %p36, %p37
    %p39 = scmp.ne.s32.totalorder %s25, %s26
    %p40 = scmp.eq.s32.totalorder %s18, 1
    %p41 = por %p39, %p40
    %p43 = scmp.ne.s32.totalorder %s26, %s42
    %p44 = scmp.eq.s32.totalorder %s18, 0
    %p45 = por %p43, %p44
    %s47 = sadd.s32 %s46, 1
    %p50 = scmp.eq.s32.totalorder %s12, 1
    %p51 = scmp.ne.s32.totalorder %s46, %s48
    %p52 = scmp.eq.s32.totalorder %s12, 0
    %p53 = por %p51, %p52
    %p54 = scmp.ne.s32.totalorder %s46, %s48
    %p55 = scmp.eq.s32.totalorder %s17, 1
    %p56 = por %p54, %p55
    %p57 = scmp.ne.s32.totalorder %s48, %s49
    %p58 = scmp.eq.s32.totalorder %s17, 0
    %p59 = por %p57, %p58
    %p60 = scmp.ne.s32.totalorder %s48, %s49
    %p61 = scmp.eq.s32.totalorder %s18, 1
    %p62 = por %p60, %p61
    %p64 = scmp.ne.s32.totalorder %s49, %s63
    %p65 = scmp.eq.s32.totalorder %s18, 0
    %p66 = por %p64, %p65
    %s68 = sadd.s32 %s67, 1
    %p71 = scmp.eq.s32.totalorder %s12, 1
    %p72 = scmp.ne.s32.totalorder %s67, %s69
    %p73 = scmp.eq.s32.totalorder %s12, 0
    %p74 = por %p72, %p73
    %p75 = scmp.ne.s32.totalorder %s67, %s69
    %p76 = scmp.eq.s32.totalorder %s17, 1
    %p77 = por %p75, %p76
    %p78 = scmp.ne.s32.totalorder %s69, %s70
    %p79 = scmp.eq.s32.totalorder %s17, 0
    %p80 = por %p78, %p79
    %p81 = scmp.ne.s32.totalorder %s69, %s70
    %p82 = scmp.eq.s32.totalorder %s18, 1
    %p83 = por %p81, %p82
    %p85 = scmp.ne.s32.totalorder %s70, %s84
    %p86 = scmp.eq.s32.totalorder %s18, 0
    %p87 = por %p85, %p86
    %s88 = ssub.s32 %s12, %s19
    %p89 = scmp.eq.s32.totalorder %s88, 0
    %s91 = sadd.s32 %s90, 1
    %s92 = scalar_select %p89, %s90, %s91
    %p95 = pneg %p89
    %p96 = scmp.eq.s32.totalorder %s12, 1
    %p97 = por %p95, %p96
    %p98 = scmp.ne.s32.totalorder %s90, %s93
    %p99 = scmp.eq.s32.totalorder %s12, 0
    %p100 = por %p98, %p99
    %p101 = scmp.ne.s32.totalorder %s90, %s93
    %p102 = scmp.eq.s32.totalorder %s17, 1
    %p103 = por %p101, %p102
    %p104 = scmp.ne.s32.totalorder %s93, %s94
    %p105 = scmp.eq.s32.totalorder %s17, 0
    %p106 = por %p104, %p105
    %p107 = scmp.ne.s32.totalorder %s93, %s94
    %p108 = scmp.eq.s32.totalorder %s18, 1
    %p109 = por %p107, %p108
    %p111 = scmp.ne.s32.totalorder %s94, %s110
    %p112 = scmp.eq.s32.totalorder %s18, 0
    %p113 = por %p111, %p112
    %s115 = sadd.s32 %s114, 1
    %p118 = scmp.eq.s32.totalorder %s12, 1
    %p119 = scmp.ne.s32.totalorder %s114, %s116
    %p120 = scmp.eq.s32.totalorder %s12, 0
    %p121 = por %p119, %p120
    %p122 = scmp.ne.s32.totalorder %s114, %s116
    %p123 = scmp.eq.s32.totalorder %s17, 1
    %p124 = por %p122, %p123
    %p125 = scmp.ne.s32.totalorder %s116, %s117
    %p126 = scmp.eq.s32.totalorder %s17, 0
    %p127 = por %p125, %p126
    %p128 = scmp.ne.s32.totalorder %s116, %s117
    %p129 = scmp.eq.s32.totalorder %s18, 1
    %p130 = por %p128, %p129
    %p132 = scmp.ne.s32.totalorder %s117, %s131
    %p133 = scmp.eq.s32.totalorder %s18, 0
    %p134 = por %p132, %p133
    %s136 = sadd.s32 %s135, 1
    %p139 = scmp.eq.s32.totalorder %s12, 1
    %p140 = scmp.ne.s32.totalorder %s135, %s137
    %p141 = scmp.eq.s32.totalorder %s12, 0
    %p142 = por %p140, %p141
    %p143 = scmp.ne.s32.totalorder %s135, %s137
    %p144 = scmp.eq.s32.totalorder %s17, 1
    %p145 = por %p143, %p144
    %p146 = scmp.ne.s32.totalorder %s137, %s138
    %p147 = scmp.eq.s32.totalorder %s17, 0
    %p148 = por %p146, %p147
    %p149 = scmp.ne.s32.totalorder %s137, %s138
    %p150 = scmp.eq.s32.totalorder %s18, 1
    %p151 = por %p149, %p150
    %p153 = scmp.ne.s32.totalorder %s138, %s152
    %p154 = scmp.eq.s32.totalorder %s18, 0
    %p155 = por %p153, %p154
    %s156 = ssub.s32 %s12, %s19
    %p157 = scmp.eq.s32.totalorder %s156, 0
    %s159 = sadd.s32 %s158, 1
    %s160 = scalar_select %p157, %s158, %s159
    %p163 = pneg %p157
    %p164 = scmp.eq.s32.totalorder %s12, 1
    %p165 = por %p163, %p164
    %p166 = scmp.ne.s32.totalorder %s158, %s161
    %p167 = scmp.eq.s32.totalorder %s12, 0
    %p168 = por %p166, %p167
    %p169 = scmp.ne.s32.totalorder %s158, %s161
    %p170 = scmp.eq.s32.totalorder %s17, 1
    %p171 = por %p169, %p170
    %p172 = scmp.ne.s32.totalorder %s161, %s162
    %p173 = scmp.eq.s32.totalorder %s17, 0
    %p174 = por %p172, %p173
    %p175 = scmp.ne.s32.totalorder %s161, %s162
    %p176 = scmp.eq.s32.totalorder %s18, 1
    %p177 = por %p175, %p176
    %p179 = scmp.ne.s32.totalorder %s162, %s178
    %p180 = scmp.eq.s32.totalorder %s18, 0
    %p181 = por %p179, %p180
    %p182 = scmp.le.s32.totalorder 1, %s12
    %p183 = scmp.lt.s32.totalorder %s12, 3
    %p184 = pnand %p182, %p183
    %p185 = pneg %p184
    // Predicated region
    $region9: #{text_encoder_forward.32} parent=5 // pred_check
      _
    $region10: #{text_encoder_forward.32} parent=5 // pred_check_branch
      %187 = sbr.rel (%p184) target = $region12
    $region11: #{text_encoder_forward.32} parent=5 // pred_region
      %s188 = ssub.s32 %s12, 1
      // Predicated region
      $region13: #{text_encoder_forward.32} parent=11 // pred_check
        %p189 = pneg %p59
      $region14: #{text_encoder_forward.32} parent=11 // pred_check_branch
        %191 = sbr.rel (%p189) target = $region16
      $region15: #{text_encoder_forward.32} parent=11 // pred_region
        _
      $region16: #{text_encoder_forward.32} parent=11 // pred_fallthru
        _
      // Predicated region
      $region17: #{text_encoder_forward.32} parent=11 // pred_check
        %p192 = pneg %p80
      $region18: #{text_encoder_forward.32} parent=11 // pred_check_branch
        %194 = sbr.rel (%p192) target = $region20
      $region19: #{text_encoder_forward.32} parent=11 // pred_region
        _
      $region20: #{text_encoder_forward.32} parent=11 // pred_fallthru
        _
      // Predicated region
      $region21: #{text_encoder_forward.32} parent=11 // pred_check
        %p195 = pneg %p127
      $region22: #{text_encoder_forward.32} parent=11 // pred_check_branch
        %197 = sbr.rel (%p195) target = $region24
      $region23: #{text_encoder_forward.32} parent=11 // pred_region
        _
      $region24: #{text_encoder_forward.32} parent=11 // pred_fallthru
        _
      // Predicated region
      $region25: #{text_encoder_forward.32} parent=11 // pred_check
        %p198 = pneg %p148
      $region26: #{text_encoder_forward.32} parent=11 // pred_check_branch
        %200 = sbr.rel (%p198) target = $region28
      $region27: #{text_encoder_forward.32} parent=11 // pred_region
        _
      $region28: #{text_encoder_forward.32} parent=11 // pred_fallthru
        _
    $region12: #{text_encoder_forward.32} parent=5 // pred_fallthru
      _
    %p201 = scmp.lt.s32.totalorder %s12, 2
    // Predicated region
    $region29: #{text_encoder_forward.32} parent=5 // pred_check
      %p202 = pneg %p201
    $region30: #{text_encoder_forward.32} parent=5 // pred_check_branch
      %204 = sbr.rel (%p202) target = $region32
    $region31: #{text_encoder_forward.32} parent=5 // pred_region
      // Predicated region
      $region33: #{text_encoder_forward.32} parent=31 // pred_check
        %p205 = pneg %p32
      $region34: #{text_encoder_forward.32} parent=31 // pred_check_branch
        %207 = sbr.rel (%p205) target = $region36
      $region35: #{text_encoder_forward.32} parent=31 // pred_region
        %p208 = scmp.lt.s32.totalorder %s12, 1
        %s209 = scalar_select %p208, %s12, 1
        %s210 = smul.addr %s209, 4
        %s211 = scalar_lea.vmem %s0, %s210
      $region36: #{text_encoder_forward.32} parent=31 // pred_fallthru
        _
      // Predicated region
      $region37: #{text_encoder_forward.32} parent=31 // pred_check
        %p212 = pneg %p100
      $region38: #{text_encoder_forward.32} parent=31 // pred_check_branch
        %214 = sbr.rel (%p212) target = $region40
      $region39: #{text_encoder_forward.32} parent=31 // pred_region
        %p215 = scmp.lt.s32.totalorder %s12, 1
        %s216 = scalar_select %p215, %s12, 1
        %s217 = smul.addr %s216, 8
        %s218 = scalar_lea.vmem %s3, %s217
      $region40: #{text_encoder_forward.32} parent=31 // pred_fallthru
        _
    $region32: #{text_encoder_forward.32} parent=5 // pred_fallthru
      _
    %p219 = scmp.le.s32.totalorder 1, %s12
    %p220 = scmp.lt.s32.totalorder %s12, 3
    %p221 = pnand %p219, %p220
    %p222 = pneg %p221
    // Predicated region
    $region41: #{text_encoder_forward.32} parent=5 // pred_check
      _
    $region42: #{text_encoder_forward.32} parent=5 // pred_check_branch
      %224 = sbr.rel (%p221) target = $region44
    $region43: #{text_encoder_forward.32} parent=5 // pred_region
      %s225 = ssub.s32 %s12, 1
      %p226 = scmp.lt.s32.totalorder %s17, 1
      %s227 = scalar_select %p226, %s17, 1
      %s228 = smul.addr %s227, 4
      %s229 = scalar_lea.vmem %s0, %s228
      %p230 = pneg %p38
      %p231 = pneg %p35
      %p232 = pneg %p59
      %p233 = pneg %p56
      %p234 = pneg %p80
      %p235 = pneg %p77
      %p236 = scmp.lt.s32.totalorder %s17, 1
      %s237 = scalar_select %p236, %s17, 1
      %s238 = smul.addr %s237, 8
      %s239 = scalar_lea.vmem %s3, %s238
      %p240 = pneg %p106
      %p241 = pneg %p103
      %p242 = pneg %p127
      %p243 = pneg %p124
      %p244 = pneg %p148
      %p245 = pneg %p145
      %p246 = pneg %p174
      %p247 = pneg %p171
      %p248 = scmp.lt.s32.totalorder %s17, 1
      %s249 = scalar_select %p248, %s17, 1
      %s250 = smul.addr %s249, 8
      %s251 = scalar_lea.vmem %s6, %s250
      %p252 = scmp.lt.s32.totalorder %s17, 1
      %s253 = scalar_select %p252, %s17, 1
      %s254 = smul.addr %s253, 4
      %s255 = scalar_lea.vmem %s0, %s254
      %p256 = scmp.lt.s32.totalorder %s17, 1
      %s257 = scalar_select %p256, %s17, 1
      %s258 = smul.addr %s257, 8
      %s259 = scalar_lea.vmem %s3, %s258
      %p260 = scmp.lt.s32.totalorder %s17, 1
      %s261 = scalar_select %p260, %s17, 1
      %s262 = smul.addr %s261, 8
      %s263 = scalar_lea.vmem %s6, %s262
      %v265 = vld [vmem:[%s255] sm:$0xf]
      %v266 = vld [vmem:[%s1] sm:$0xf]
      %v267 = vld [vmem:[%s1 + $0x4] sm:$0xf]
      %v268 = vld [vmem:[%s1 + $0x8] sm:$0xf]
      %v269 = vld [vmem:[%s1 + $0xc] sm:$0xf]
      %v270 = vld [vmem:[%s2] sm:$0x1]
      %v272 = vperm.slane %v270, 0
      %v278 = vunpack.c.l.b16 %v266
      %v279 = vunpack.c.l.b16 %v267
      %v280 = vunpack.c.l.b16 %v268
      %v281 = vunpack.c.l.b16 %v269
      %v282 = vpack.c.b16 %v279, %v278
      %v283 = vpack.c.b16 %v281, %v280
      %vm286 = vcmask 261120
      %v288 = vsel %vm286, %v265, 0
      %290 = vmatpush.bf16.msra.mxu0 0
      %291 = vmatpush.bf16.msra.mxu0 0
      %292 = vmatpush.bf16.msra.mxu0 0
      %293 = vmatpush.bf16.msra.mxu0 0
      %294 = vmatpush.bf16.msra.mxu0 0
      %295 = vmatpush.bf16.msra.mxu0 0
      %296 = vmatpush.bf16.msra.mxu0 %v283
      %297 = vmatpush.bf16.msra.mxu0 %v282
      %298 = vmatmul.bf16.gmra.mxu0 %v288
      %v299 = vpop.f32.mrf.mxu0
      %v300 = vadd.f32 %v272, %v299
      %v301 = vpop.f32.mrf.mxu0
      %302 = vdwg.mxu0
      %v303 = vld [vmem:[%s259] sm:$0xff]
      %v304 = vadd.f32 %v300, %v303
      %v305 = vsel %vm286, %v304, 0.0
      %306 = vadd.xlane.f32.xlu0 %v305
      %v307 = vpop.xlane.xlu0 %306
      %v308 = vrcp.pop 32.0
      %v309 = vmul.f32 32.0, %v308
      %v310 = vsub.f32 1.0, %v309
      %v311 = vmul.f32 %v308, %v310
      %v312 = vadd.f32 %v308, %v311
      %vm313 = vweird.f32 %v308
      %v314 = vsel %vm313, %v308, %v312
      %v315 = vmul.f32 %v307, %v314
      %v316 = vsub.f32 %v304, %v315
      %v317 = vmul.f32 %v316, %v316
      %v318 = vsel %vm286, %v317, 0.0
      %319 = vadd.xlane.f32.xlu0 %v318
      %v320 = vpop.xlane.xlu0 %319
      %v321 = vmul.f32 %v320, %v314
      %v322 = vadd.f32 %v321, 1e-05
      %v323 = vrsqrt.pop %v322
      %v324 = vmul.f32 %v323, %v322
      %v325 = vmul.f32 %v324, %v323
      %v326 = vmul.f32 0.5, %v325
      %v327 = vsub.f32 1.5, %v326
      %v328 = vmul.f32 %v323, %v327
      %vm329 = vweird.f32 %v322
      %vm330 = vweird.f32 %v323
      %vm331 = vmor %vm329, %vm330
      %v332 = vsel %vm331, %v323, %v328
      %v333 = vmul.f32 %v316, %v332
      %v334 = vld [vmem:[%s4] sm:$0x1]
      %v336 = vperm.slane %v334, 0
      %v338 = vmul.f32 %v333, %v336
      %v339 = vld [vmem:[%s5] sm:$0x1]
      %v341 = vperm.slane %v339, 0
      %v343 = vadd.f32 %v338, %v341
      %344 = vst.msk [vmem:[%s263] sm:$0xff] %vm286, %v343
      %p345 = scmp.lt.s32.totalorder %s17, 1
      %s346 = scalar_select %p345, %s17, 1
      %s347 = smul.addr %s346, 8
      %s348 = scalar_lea.vmem %s6, %s347
      // Predicated region
      $region45: #{text_encoder_forward.32} parent=43 // pred_check
        %p349 = pneg %p171
      $region46: #{text_encoder_forward.32} parent=43 // pred_check_branch
        %351 = sbr.rel (%p349) target = $region48
      $region47: #{text_encoder_forward.32} parent=43 // pred_region
        _
      $region48: #{text_encoder_forward.32} parent=43 // pred_fallthru
        _
    $region44: #{text_encoder_forward.32} parent=5 // pred_fallthru
      _
    %p352 = scmp.le.s32.totalorder 2, %s12
    // Predicated region
    $region49: #{text_encoder_forward.32} parent=5 // pred_check
      %p353 = pneg %p352
    $region50: #{text_encoder_forward.32} parent=5 // pred_check_branch
      %355 = sbr.rel (%p353) target = $region52
    $region51: #{text_encoder_forward.32} parent=5 // pred_region
      %s356 = ssub.s32 %s12, 2
      // Predicated region
      $region53: #{text_encoder_forward.32} parent=51 // pred_check
        %p357 = pneg %p177
      $region54: #{text_encoder_forward.32} parent=51 // pred_check_branch
        %359 = sbr.rel (%p357) target = $region56
      $region55: #{text_encoder_forward.32} parent=51 // pred_region
        %p360 = scmp.lt.s32.totalorder %s18, 1
        %s361 = scalar_select %p360, %s18, 1
        %s362 = smul.addr %s361, 8
        %s363 = scalar_lea.vmem %s6, %s362
      $region56: #{text_encoder_forward.32} parent=51 // pred_fallthru
        _
    $region52: #{text_encoder_forward.32} parent=5 // pred_fallthru
      _
  $region6: #{text_encoder_forward.32} parent=0 // loop_footer
    %s16 = sadd.s32 1, %s12
  $region7: #{text_encoder_forward.32} parent=0 // loop_footer_branch
    %11 = sbr.rel target = $region3
  $region8: #{text_encoder_forward.32} parent=0 // loop_exit
    _

// kernel: text_encoder_forward.28
$region0: #{text_encoder_forward.28}
  #allocation0 [shape = 'u32[]', space=smem, size = 0x4, offset = 0x4, fixed_abs, tag = 'smem constant byte address 0x4 - core index']
  #allocation1 [shape = 'u32[72,128]{1,0:T(1,128)}', space=vmem, size = 0x9000, scoped, tag = 'internal scratch']
  %s0 = inlined_call_operand.vmem [shape: f32[16,32], index: 0, kind: input, shape index: {}]
  %s1 = inlined_call_operand.vmem [shape: bf16[32,2048], index: 1, kind: input, shape index: {}]
  %s2 = inlined_call_operand.vmem [shape: f32[1,2048], index: 2, kind: input, shape index: {}]
  %s3 = inlined_call_operand.vmem [shape: bf16[16,2048], index: 3, kind: output, shape index: {}]
  %s4 = sld [smem:[#allocation0]]
  $region68: #{text_encoder_forward.28} parent=0
    _
  %s6 = ssub.s32 1, %s4
  %s7 = scalar_select 0, %s6, %s4
  $region1: #{text_encoder_forward.28} parent=0
    #allocation2 [shape = 'u8[65536]{0}', space=vmem, size = 0x10000, scoped, tag = 'input window, operand 1']
    loop: start=0, step=1, limit=10
    $region2: #{text_encoder_forward.28} parent=1 // loop_pre_header
      _
    $region3: #{text_encoder_forward.28} parent=1 // loop_header
      %s9 = sphi 0, %s13
      %p10 = scmp.ge.s32.totalorder %s9, 10
      %s16 = sphi 0, %s28
      %s17 = sphi 0, %s24
      %s18 = sphi 0, %s16
      %s19 = sphi 0, %s17
      %s20 = sphi 0, %s18
      %s21 = sphi 0, %s19
      %s31 = sphi 0, %s33
      %s34 = sphi 0, %s31
      %s35 = sphi 0, %s34
      %s51 = sphi 0, %s35
      %s57 = sphi 0, %s59
      %s60 = sphi 0, %s57
      %s61 = sphi 0, %s60
      %s77 = sphi 0, %s61
      %s83 = sphi 0, %s85
      %s86 = sphi 0, %s83
      %s87 = sphi 0, %s86
      %s103 = sphi 0, %s87
      %s111 = sphi 0, %s113
      %s114 = sphi 0, %s111
      %s115 = sphi 0, %s114
      %s131 = sphi 0, %s115
    $region4: #{text_encoder_forward.28} parent=1 // loop_header_branch
      %12 = sbr.rel (%p10) target = $region8
    $region5: #{text_encoder_forward.28} parent=1 // loop_body
      %s14 = ssub.s32 %s9, 1
      %s15 = ssub.s32 %s9, 2
      %s22 = sadd.s32 1, %s17
      %p23 = scmp.ge.s32.totalorder %s22, 2
      %s24 = scalar_select %p23, 0, %s22
      %s25 = sadd.s32 1, %s16
      %s26 = scalar_select %p23, %s25, %s16
      %p27 = scmp.ge.s32.totalorder %s26, 4
      %s28 = scalar_select %p27, 0, %s26
      %s29 = ssub.s32 %s17, %s24
      %p30 = scmp.eq.s32.totalorder %s29, 0
      %s32 = sadd.s32 %s31, 1
      %s33 = scalar_select %p30, %s31, %s32
      %p36 = pneg %p30
      %p37 = scmp.eq.s32.totalorder %s9, 7
      %p38 = por %p36, %p37
      %p39 = scmp.ne.s32.totalorder %s31, %s34
      %p40 = scmp.eq.s32.totalorder %s9, 0
      %p41 = por %p39, %p40
      %p42 = scmp.ne.s32.totalorder %s31, %s34
      %p43 = scmp.eq.s32.totalorder %s14, 7
      %p44 = por %p42, %p43
      %p45 = scmp.ne.s32.totalorder %s34, %s35
      %p46 = scmp.eq.s32.totalorder %s14, 0
      %p47 = por %p45, %p46
      %p48 = scmp.ne.s32.totalorder %s34, %s35
      %p49 = scmp.eq.s32.totalorder %s15, 7
      %p50 = por %p48, %p49
      %p52 = scmp.ne.s32.totalorder %s35, %s51
      %p53 = scmp.eq.s32.totalorder %s15, 0
      %p54 = por %p52, %p53
      %s55 = ssub.s32 %s16, %s28
      %p56 = scmp.eq.s32.totalorder %s55, 0
      %s58 = sadd.s32 %s57, 1
      %s59 = scalar_select %p56, %s57, %s58
      %p62 = pneg %p56
      %p63 = scmp.eq.s32.totalorder %s9, 7
      %p64 = por %p62, %p63
      %p65 = scmp.ne.s32.totalorder %s57, %s60
      %p66 = scmp.eq.s32.totalorder %s9, 0
      %p67 = por %p65, %p66
      %p68 = scmp.ne.s32.totalorder %s57, %s60
      %p69 = scmp.eq.s32.totalorder %s14, 7
      %p70 = por %p68, %p69
      %p71 = scmp.ne.s32.totalorder %s60, %s61
      %p72 = scmp.eq.s32.totalorder %s14, 0
      %p73 = por %p71, %p72
      %p74 = scmp.ne.s32.totalorder %s60, %s61
      %p75 = scmp.eq.s32.totalorder %s15, 7
      %p76 = por %p74, %p75
      %p78 = scmp.ne.s32.totalorder %s61, %s77
      %p79 = scmp.eq.s32.totalorder %s15, 0
      %p80 = por %p78, %p79
      %s81 = ssub.s32 %s16, %s28
      %p82 = scmp.eq.s32.totalorder %s81, 0
      %s84 = sadd.s32 %s83, 1
      %s85 = scalar_select %p82, %s83, %s84
      %p88 = pneg %p82
      %p89 = scmp.eq.s32.totalorder %s9, 7
      %p90 = por %p88, %p89
      %p91 = scmp.ne.s32.totalorder %s83, %s86
      %p92 = scmp.eq.s32.totalorder %s9, 0
      %p93 = por %p91, %p92
      %p94 = scmp.ne.s32.totalorder %s83, %s86
      %p95 = scmp.eq.s32.totalorder %s14, 7
      %p96 = por %p94, %p95
      %p97 = scmp.ne.s32.totalorder %s86, %s87
      %p98 = scmp.eq.s32.totalorder %s14, 0
      %p99 = por %p97, %p98
      %p100 = scmp.ne.s32.totalorder %s86, %s87
      %p101 = scmp.eq.s32.totalorder %s15, 7
      %p102 = por %p100, %p101
      %p104 = scmp.ne.s32.totalorder %s87, %s103
      %p105 = scmp.eq.s32.totalorder %s15, 0
      %p106 = por %p104, %p105
      %s107 = ssub.s32 %s17, %s24
      %s108 = ssub.s32 %s16, %s28
      %s109 = sor.u32 %s107, %s108
      %p110 = scmp.eq.s32.totalorder %s109, 0
      %s112 = sadd.s32 %s111, 1
      %s113 = scalar_select %p110, %s111, %s112
      %p116 = pneg %p110
      %p117 = scmp.eq.s32.totalorder %s9, 7
      %p118 = por %p116, %p117
      %p119 = scmp.ne.s32.totalorder %s111, %s114
      %p120 = scmp.eq.s32.totalorder %s9, 0
      %p121 = por %p119, %p120
      %p122 = scmp.ne.s32.totalorder %s111, %s114
      %p123 = scmp.eq.s32.totalorder %s14, 7
      %p124 = por %p122, %p123
      %p125 = scmp.ne.s32.totalorder %s114, %s115
      %p126 = scmp.eq.s32.totalorder %s14, 0
      %p127 = por %p125, %p126
      %p128 = scmp.ne.s32.totalorder %s114, %s115
      %p129 = scmp.eq.s32.totalorder %s15, 7
      %p130 = por %p128, %p129
      %p132 = scmp.ne.s32.totalorder %s115, %s131
      %p133 = scmp.eq.s32.totalorder %s15, 0
      %p134 = por %p132, %p133
      %p135 = scmp.le.s32.totalorder 1, %s9
      %p136 = scmp.lt.s32.totalorder %s9, 9
      %p137 = pnand %p135, %p136
      %p138 = pneg %p137
      // Predicated region
      $region9: #{text_encoder_forward.28} parent=5 // pred_check
        _
      $region10: #{text_encoder_forward.28} parent=5 // pred_check_branch
        %140 = sbr.rel (%p137) target = $region12
      $region11: #{text_encoder_forward.28} parent=5 // pred_region
        %s141 = ssub.s32 %s9, 1
      $region12: #{text_encoder_forward.28} parent=5 // pred_fallthru
        _
      %p142 = scmp.lt.s32.totalorder %s9, 8
      // Predicated region
      $region13: #{text_encoder_forward.28} parent=5 // pred_check
        %p143 = pneg %p142
      $region14: #{text_encoder_forward.28} parent=5 // pred_check_branch
        %145 = sbr.rel (%p143) target = $region16
      $region15: #{text_encoder_forward.28} parent=5 // pred_region
        // Predicated region
        $region17: #{text_encoder_forward.28} parent=15 // pred_check
          %p146 = pneg %p41
        $region18: #{text_encoder_forward.28} parent=15 // pred_check_branch
          %148 = sbr.rel (%p146) target = $region20
        $region19: #{text_encoder_forward.28} parent=15 // pred_region
          %p149 = scmp.lt.s32.totalorder %s17, 1
          %s150 = scalar_select %p149, %s17, 1
          %s151 = smul.addr %s150, 8
          %s152 = scalar_lea.vmem %s0, %s151
        $region20: #{text_encoder_forward.28} parent=15 // pred_fallthru
          _
        // Predicated region
        $region21: #{text_encoder_forward.28} parent=15 // pred_check
          %p153 = pneg %p67
        $region22: #{text_encoder_forward.28} parent=15 // pred_check_branch
          %155 = sbr.rel (%p153) target = $region24
        $region23: #{text_encoder_forward.28} parent=15 // pred_region
          %s156 = sand.u32 %s57, 1
          %s157 = sand.u32 %s57, 1
          %s158 = smul.addr %s157, 64
          %s159 = scalar_lea.vmem [#allocation2], %s158
          %s160 = smul.u32 4, %s16
          %s161 = smul.addr %s160, 4
          %s162 = scalar_lea.vmem %s1, %s161
          // Predicated region
          $region25: #{text_encoder_forward.28} parent=23 // pred_check
            _
          $region26: #{text_encoder_forward.28} parent=23 // pred_check_branch
            %164 = sbr.rel (0) target = $region28
          $region27: #{text_encoder_forward.28} parent=23 // pred_region
            // Predicated region
            $region29: #{text_encoder_forward.28} parent=27 // pred_check
              _
            $region30: #{text_encoder_forward.28} parent=27 // pred_check_branch
              %166 = sbr.rel (0) target = $region32
            $region31: #{text_encoder_forward.28} parent=27 // pred_region
              loop: start=0, step=1, limit=1
              $region33: #{text_encoder_forward.28} parent=31 // loop_pre_header
                _
              $region34: #{text_encoder_forward.28} parent=31 // loop_header
                %s168 = sphi 0, %s172
                %p169 = scmp.ge.s32.totalorder %s168, 1
                %s173 = sphi %s162, %s162
                %s174 = sphi %s159, %s159
              $region35: #{text_encoder_forward.28} parent=31 // loop_header_branch
                %171 = sbr.rel (%p169) target = $region39
              $region36: #{text_encoder_forward.28} parent=31 // loop_body
                %v175 = vld [vmem:[%s173] sm:$0xff]
                %176 = vst [vmem:[%s174] sm:$0xff] %v175
                %v177 = vld [vmem:[%s173 + $0x8] sm:$0xff]
                %178 = vst [vmem:[%s174 + $0x8] sm:$0xff] %v177
                %v179 = vld [vmem:[%s173 + $0x40] sm:$0xff]
                %180 = vst [vmem:[%s174 + $0x10] sm:$0xff] %v179
                %v181 = vld [vmem:[%s173 + $0x48] sm:$0xff]
                %182 = vst [vmem:[%s174 + $0x18] sm:$0xff] %v181
                %v183 = vld [vmem:[%s173 + $0x80] sm:$0xff]
                %184 = vst [vmem:[%s174 + $0x20] sm:$0xff] %v183
                %v185 = vld [vmem:[%s173 + $0x88] sm:$0xff]
                %186 = vst [vmem:[%s174 + $0x28] sm:$0xff] %v185
                %v187 = vld [vmem:[%s173 + $0xc0] sm:$0xff]
                %188 = vst [vmem:[%s174 + $0x30] sm:$0xff] %v187
                %v189 = vld [vmem:[%s173 + $0xc8] sm:$0xff]
                %190 = vst [vmem:[%s174 + $0x38] sm:$0xff] %v189
              $region37: #{text_encoder_forward.28} parent=31 // loop_footer
                %s172 = sadd.s32 1, %s168
              $region38: #{text_encoder_forward.28} parent=31 // loop_footer_branch
                %167 = sbr.rel target = $region34
              $region39: #{text_encoder_forward.28} parent=31 // loop_exit
                _
            $region32: #{text_encoder_forward.28} parent=27 // pred_fallthru
              _
            // Predicated region
            $region40: #{text_encoder_forward.28} parent=27 // pred_check
              _
            $region41: #{text_encoder_forward.28} parent=27 // pred_check_branch
              %192 = sbr.rel target = $region43
            $region42: #{text_encoder_forward.28} parent=27 // pred_region
              _
            $region43: #{text_encoder_forward.28} parent=27 // pred_fallthru
              _
          $region28: #{text_encoder_forward.28} parent=23 // pred_fallthru
            _
          %193 = vnop
        $region24: #{text_encoder_forward.28} parent=15 // pred_fallthru
          _
        // Predicated region
        $region44: #{text_encoder_forward.28} parent=15 // pred_check
          %p194 = pneg %p93
        $region45: #{text_encoder_forward.28} parent=15 // pred_check_branch
          %196 = sbr.rel (%p194) target = $region47
        $region46: #{text_encoder_forward.28} parent=15 // pred_region
          %s197 = smul.u32 4, %s16
          %p198 = scmp.lt.s32.totalorder %s197, 15
          %s199 = scalar_select %p198, %s197, 15
          %s200 = scalar_lea.vmem %s2, %s199
          %s201 = smul.u32 4, %s16
        $region47: #{text_encoder_forward.28} parent=15 // pred_fallthru
          _
      $region16: #{text_encoder_forward.28} parent=5 // pred_fallthru
        _
      %p202 = scmp.le.s32.totalorder 1, %s9
      %p203 = scmp.lt.s32.totalorder %s9, 9
      %p204 = pnand %p202, %p203
      %p205 = pneg %p204
      // Predicated region
      $region48: #{text_encoder_forward.28} parent=5 // pred_check
        _
      $region49: #{text_encoder_forward.28} parent=5 // pred_check_branch
        %207 = sbr.rel (%p204) target = $region51
      $region50: #{text_encoder_forward.28} parent=5 // pred_region
        %s208 = ssub.s32 %s9, 1
        %s209 = sand.u32 %s60, 1
        %s210 = sand.u32 %s60, 1
        %s211 = smul.addr %s210, 64
        %s212 = scalar_lea.vmem [#allocation2], %s211
        // Predicated region
        $region52: #{text_encoder_forward.28} parent=50 // pred_check
          %p213 = pneg %p73
        $region53: #{text_encoder_forward.28} parent=50 // pred_check_branch
          %215 = sbr.rel (%p213) target = $region55
        $region54: #{text_encoder_forward.28} parent=50 // pred_region
          _
        $region55: #{text_encoder_forward.28} parent=50 // pred_fallthru
          _
        %p216 = scmp.lt.s32.totalorder %s19, 1
        %s217 = scalar_select %p216, %s19, 1
        %s218 = smul.addr %s217, 8
        %s219 = scalar_lea.vmem %s0, %s218
        %p220 = pneg %p47
        %p221 = pneg %p44
        %s222 = sand.u32 %s60, 1
        %s223 = sand.u32 %s60, 1
        %s224 = smul.addr %s223, 64
        %s225 = scalar_lea.vmem [#allocation2], %s224
        %p226 = pneg %p73
        %p227 = pneg %p70
        %s228 = smul.u32 4, %s18
        %p229 = scmp.lt.s32.totalorder %s228, 15
        %s230 = scalar_select %p229, %s228, 15
        %s231 = scalar_lea.vmem %s2, %s230
        %p232 = pneg %p99
        %p233 = pneg %p96
        %p234 = pneg %p127
        %p235 = pneg %p124
        %s236 = smul.u32 4, %s18
        %p237 = scmp.lt.s32.totalorder %s19, 1
        %s238 = scalar_select %p237, %s19, 1
        %p239 = scmp.lt.s32.totalorder %s236, 15
        %s240 = scalar_select %p239, %s236, 15
        %s241 = smul.addr %s238, 16
        %s242 = sadd.s32 %s240, %s241
        %s243 = smul.addr %s242, 4
        %s244 = scalar_lea.vmem %s3, %s243
        %p245 = scmp.lt.s32.totalorder %s19, 1
        %s246 = scalar_select %p245, %s19, 1
        %s247 = smul.addr %s246, 8
        %s248 = scalar_lea.vmem %s0, %s247
        %s249 = smul.u32 4, %s18
        %s250 = smul.u32 4, %s18
        %p251 = scmp.lt.s32.totalorder %s250, 15
        %s252 = scalar_select %p251, %s250, 15
        %s253 = scalar_lea.vmem %s2, %s252
        %s254 = smul.u32 4, %s18
        %s255 = smul.u32 4, %s18
        %p256 = scmp.lt.s32.totalorder %s19, 1
        %s257 = scalar_select %p256, %s19, 1
        %p258 = scmp.lt.s32.totalorder %s255, 15
        %s259 = scalar_select %p258, %s255, 15
        %s260 = smul.addr %s257, 16
        %s261 = sadd.s32 %s259, %s260
        %s262 = smul.addr %s261, 4
        %s263 = scalar_lea.vmem %s3, %s262
        %s264 = smul.u32 4, %s18
        %v266 = vld [vmem:[%s248] sm:$0xff]
        %v267 = vpack.c.bf16 %v266, %v266
        %v268 = vld [vmem:[%s212] sm:$0xff]
        %v269 = vld [vmem:[%s212 + $0x8] sm:$0xff]
        %v270 = vld [vmem:[%s212 + $0x10] sm:$0xff]
        %v271 = vld [vmem:[%s212 + $0x18] sm:$0xff]
        %v272 = vld [vmem:[%s212 + $0x20] sm:$0xff]
        %v273 = vld [vmem:[%s212 + $0x28] sm:$0xff]
        %v274 = vld [vmem:[%s212 + $0x30] sm:$0xff]
        %v275 = vld [vmem:[%s212 + $0x38] sm:$0xff]
        %v276 = vld [vmem:[%s253] sm:$0xf]
        %v278 = vperm.slane %v276, 0
        %v279 = vperm.slane %v276, 1
        %v280 = vperm.slane %v276, 2
        %v281 = vperm.slane %v276, 3
        %v294 = vunpack.c.l.b16 %v268
        %v295 = vunpack.c.h.b16 %v268
        %v296 = vunpack.c.l.b16 %v269
        %v297 = vunpack.c.h.b16 %v269
        %v298 = vunpack.c.l.b16 %v270
        %v299 = vunpack.c.h.b16 %v270
        %v300 = vunpack.c.l.b16 %v271
        %v301 = vunpack.c.h.b16 %v271
        %v302 = vunpack.c.l.b16 %v272
        %v303 = vunpack.c.h.b16 %v272
        %v304 = vunpack.c.l.b16 %v273
        %v305 = vunpack.c.h.b16 %v273
        %v306 = vunpack.c.l.b16 %v274
        %v307 = vunpack.c.h.b16 %v274
        %v308 = vunpack.c.l.b16 %v275
        %v309 = vunpack.c.h.b16 %v275
        %v310 = vpack.c.b16 %v298, %v294
        %v311 = vpack.c.b16 %v299, %v295
        %v312 = vpack.c.b16 %v300, %v296
        %v313 = vpack.c.b16 %v301, %v297
        %v314 = vpack.c.b16 %v306, %v302
        %v315 = vpack.c.b16 %v307, %v303
        %v316 = vpack.c.b16 %v308, %v304
        %v317 = vpack.c.b16 %v309, %v305
        %vm326 = vcmask 261120
        %v328 = vsel %vm326, %v267, 0
        %330 = vmatpush.bf16.msra.mxu0 0
        %331 = vmatpush.bf16.msra.mxu0 0
        %332 = vmatpush.bf16.msra.mxu0 0
        %333 = vmatpush.bf16.msra.mxu0 0
        %334 = vmatpush.bf16.msra.mxu0 0
        %335 = vmatpush.bf16.msra.mxu0 0
        %336 = vmatpush.bf16.msra.mxu0 %v314
        %337 = vmatpush.bf16.msra.mxu0 %v310
        %338 = vmatmul.bf16.gmra.mxu0 %v328
        %v339 = vpop.f32.mrf.mxu0
        %v340 = vadd.f32 %v278, %v339
        %v341 = vpop.f32.mrf.mxu0
        %342 = vdwg.mxu0
        %343 = vmatpush.bf16.msra.mxu0 0
        %344 = vmatpush.bf16.msra.mxu0 0
        %345 = vmatpush.bf16.msra.mxu0 0
        %346 = vmatpush.bf16.msra.mxu0 0
        %347 = vmatpush.bf16.msra.mxu0 0
        %348 = vmatpush.bf16.msra.mxu0 0
        %349 = vmatpush.bf16.msra.mxu0 %v315
        %350 = vmatpush.bf16.msra.mxu0 %v311
        %351 = vmatmul.bf16.gmra.mxu0 %v328
        %v352 = vpop.f32.mrf.mxu0
        %v353 = vadd.f32 %v279, %v352
        %v354 = vpop.f32.mrf.mxu0
        %355 = vdwg.mxu0
        %356 = vmatpush.bf16.msra.mxu0 0
        %357 = vmatpush.bf16.msra.mxu0 0
        %358 = vmatpush.bf16.msra.mxu0 0
        %359 = vmatpush.bf16.msra.mxu0 0
        %360 = vmatpush.bf16.msra.mxu0 0
        %361 = vmatpush.bf16.msra.mxu0 0
        %362 = vmatpush.bf16.msra.mxu0 %v316
        %363 = vmatpush.bf16.msra.mxu0 %v312
        %364 = vmatmul.bf16.gmra.mxu0 %v328
        %v365 = vpop.f32.mrf.mxu0
        %v366 = vadd.f32 %v280, %v365
        %v367 = vpop.f32.mrf.mxu0
        %368 = vdwg.mxu0
        %369 = vmatpush.bf16.msra.mxu0 0
        %370 = vmatpush.bf16.msra.mxu0 0
        %371 = vmatpush.bf16.msra.mxu0 0
        %372 = vmatpush.bf16.msra.mxu0 0
        %373 = vmatpush.bf16.msra.mxu0 0
        %374 = vmatpush.bf16.msra.mxu0 0
        %375 = vmatpush.bf16.msra.mxu0 %v317
        %376 = vmatpush.bf16.msra.mxu0 %v313
        %377 = vmatmul.bf16.gmra.mxu0 %v328
        %v378 = vpop.f32.mrf.mxu0
        %v379 = vadd.f32 %v281, %v378
        %v380 = vpop.f32.mrf.mxu0
        %381 = vdwg.mxu0
        %v382 = vmax.f32 %v340, 0.0
        %v383 = vmax.f32 %v353, 0.0
        %v384 = vmax.f32 %v366, 0.0
        %v385 = vmax.f32 %v379, 0.0
        %v386 = vpack.c.bf16 %v383, %v382
        %v387 = vpack.c.bf16 %v385, %v384
        %388 = vst [vmem:[%s263] sm:$0xff] %v386
        %389 = vst [vmem:[%s263 + $0x8] sm:$0xff] %v387
        %s390 = smul.u32 4, %s18
        %p391 = scmp.lt.s32.totalorder %s19, 1
        %s392 = scalar_select %p391, %s19, 1
        %p393 = scmp.lt.s32.totalorder %s390, 15
        %s394 = scalar_select %p393, %s390, 15
        %s395 = smul.addr %s392, 16
        %s396 = sadd.s32 %s394, %s395
        %s397 = smul.addr %s396, 4
        %s398 = scalar_lea.vmem %s3, %s397
        // Predicated region
        $region56: #{text_encoder_forward.28} parent=50 // pred_check
          %p399 = pneg %p124
        $region57: #{text_encoder_forward.28} parent=50 // pred_check_branch
          %401 = sbr.rel (%p399) target = $region59
        $region58: #{text_encoder_forward.28} parent=50 // pred_region
          %s402 = smul.u32 4, %s18
        $region59: #{text_encoder_forward.28} parent=50 // pred_fallthru
          _
      $region51: #{text_encoder_forward.28} parent=5 // pred_fallthru
        _
      %p403 = scmp.le.s32.totalorder 2, %s9
      // Predicated region
      $region60: #{text_encoder_forward.28} parent=5 // pred_check
        %p404 = pneg %p403
      $region61: #{text_encoder_forward.28} parent=5 // pred_check_branch
        %406 = sbr.rel (%p404) target = $region63
      $region62: #{text_encoder_forward.28} parent=5 // pred_region
        %s407 = ssub.s32 %s9, 2
        // Predicated region
        $region64: #{text_encoder_forward.28} parent=62 // pred_check
          %p408 = pneg %p130
        $region65: #{text_encoder_forward.28} parent=62 // pred_check_branch
          %410 = sbr.rel (%p408) target = $region67
        $region66: #{text_encoder_forward.28} parent=62 // pred_region
          %s411 = smul.u32 4, %s20
          %p412 = scmp.lt.s32.totalorder %s21, 1
          %s413 = scalar_select %p412, %s21, 1
          %p414 = scmp.lt.s32.totalorder %s411, 15
          %s415 = scalar_select %p414, %s411, 15
          %s416 = smul.addr %s413, 16
          %s417 = sadd.s32 %s415, %s416
          %s418 = smul.addr %s417, 4
          %s419 = scalar_lea.vmem %s3, %s418
        $region67: #{text_encoder_forward.28} parent=62 // pred_fallthru
          _
      $region63: #{text_encoder_forward.28} parent=5 // pred_fallthru
        _
    $region6: #{text_encoder_forward.28} parent=1 // loop_footer
      %s13 = sadd.s32 1, %s9
    $region7: #{text_encoder_forward.28} parent=1 // loop_footer_branch
      %8 = sbr.rel target = $region3
    $region8: #{text_encoder_forward.28} parent=1 // loop_exit
      _

// kernel: text_encoder_forward.30
$region0: #{text_encoder_forward.30}
  #allocation0 [shape = 'u32[]', space=smem, size = 0x4, offset = 0x4, fixed_abs, tag = 'smem constant byte address 0x4 - core index']
  #allocation1 [shape = 'u32[72,128]{1,0:T(1,128)}', space=vmem, size = 0x9000, scoped, tag = 'internal scratch']
  %s0 = inlined_call_operand.vmem [shape: f32[16,32], index: 0, kind: input, shape index: {}]
  %s1 = inlined_call_operand.vmem [shape: f32[1,32], index: 1, kind: input, shape index: {}]
  %s2 = inlined_call_operand.vmem [shape: f32[1,32], index: 2, kind: input, shape index: {}]
  %s3 = inlined_call_operand.vmem [shape: f32[16,32], index: 3, kind: output, shape index: {}]
  %s4 = sld [smem:[#allocation0]]
  $region45: #{text_encoder_forward.30} parent=0
    _
  %s6 = ssub.s32 1, %s4
  %s7 = scalar_select 0, %s6, %s4
  loop: start=0, step=1, limit=4
  $region2: #{text_encoder_forward.30} parent=0 // loop_pre_header
    _
  $region3: #{text_encoder_forward.30} parent=0 // loop_header
    %s9 = sphi 0, %s13
    %p10 = scmp.ge.s32.totalorder %s9, 4
    %s19 = sphi 0, %s21
    %s22 = sphi 0, %s19
    %s23 = sphi 0, %s22
    %s39 = sphi 0, %s23
    %s43 = sphi 0, %s43
    %s45 = sphi 0, %s43
    %s46 = sphi 0, %s45
    %s60 = sphi 0, %s46
    %s64 = sphi 0, %s64
    %s66 = sphi 0, %s64
    %s67 = sphi 0, %s66
    %s81 = sphi 0, %s67
    %s87 = sphi 0, %s89
    %s90 = sphi 0, %s87
    %s91 = sphi 0, %s90
    %s107 = sphi 0, %s91
  $region4: #{text_encoder_forward.30} parent=0 // loop_header_branch
    %12 = sbr.rel (%p10) target = $region8
  $region5: #{text_encoder_forward.30} parent=0 // loop_body
    %s14 = ssub.s32 %s9, 1
    %s15 = ssub.s32 %s9, 2
    %s16 = sadd.s32 %s9, 1
    %s17 = ssub.s32 %s9, %s16
    %p18 = scmp.eq.s32.totalorder %s17, 0
    %s20 = sadd.s32 %s19, 1
    %s21 = scalar_select %p18, %s19, %s20
    %p24 = pneg %p18
    %p25 = scmp.eq.s32.totalorder %s9, 1
    %p26 = por %p24, %p25
    %p27 = scmp.ne.s32.totalorder %s19, %s22
    %p28 = scmp.eq.s32.totalorder %s9, 0
    %p29 = por %p27, %p28
    %p30 = scmp.ne.s32.totalorder %s19, %s22
    %p31 = scmp.eq.s32.totalorder %s14, 1
    %p32 = por %p30, %p31
    %p33 = scmp.ne.s32.totalorder %s22, %s23
    %p34 = scmp.eq.s32.totalorder %s14, 0
    %p35 = por %p33, %p34
    %p36 = scmp.ne.s32.totalorder %s22, %s23
    %p37 = scmp.eq.s32.totalorder %s15, 1
    %p38 = por %p36, %p37
    %p40 = scmp.ne.s32.totalorder %s23, %s39
    %p41 = scmp.eq.s32.totalorder %s15, 0
    %p42 = por %p40, %p41
    %s44 = sadd.s32 %s43, 1
    %p47 = scmp.eq.s32.totalorder %s9, 1
    %p48 = scmp.ne.s32.totalorder %s43, %s45
    %p49 = scmp.eq.s32.totalorder %s9, 0
    %p50 = por %p48, %p49
    %p51 = scmp.ne.s32.totalorder %s43, %s45
    %p52 = scmp.eq.s32.totalorder %s14, 1
    %p53 = por %p51, %p52
    %p54 = scmp.ne.s32.totalorder %s45, %s46
    %p55 = scmp.eq.s32.totalorder %s14, 0
    %p56 = por %p54, %p55
    %p57 = scmp.ne.s32.totalorder %s45, %s46
    %p58 = scmp.eq.s32.totalorder %s15, 1
    %p59 = por %p57, %p58
    %p61 = scmp.ne.s32.totalorder %s46, %s60
    %p62 = scmp.eq.s32.totalorder %s15, 0
    %p63 = por %p61, %p62
    %s65 = sadd.s32 %s64, 1
    %p68 = scmp.eq.s32.totalorder %s9, 1
    %p69 = scmp.ne.s32.totalorder %s64, %s66
    %p70 = scmp.eq.s32.totalorder %s9, 0
    %p71 = por %p69, %p70
    %p72 = scmp.ne.s32.totalorder %s64, %s66
    %p73 = scmp.eq.s32.totalorder %s14, 1
    %p74 = por %p72, %p73
    %p75 = scmp.ne.s32.totalorder %s66, %s67
    %p76 = scmp.eq.s32.totalorder %s14, 0
    %p77 = por %p75, %p76
    %p78 = scmp.ne.s32.totalorder %s66, %s67
    %p79 = scmp.eq.s32.totalorder %s15, 1
    %p80 = por %p78, %p79
    %p82 = scmp.ne.s32.totalorder %s67, %s81
    %p83 = scmp.eq.s32.totalorder %s15, 0
    %p84 = por %p82, %p83
    %s85 = ssub.s32 %s9, %s16
    %p86 = scmp.eq.s32.totalorder %s85, 0
    %s88 = sadd.s32 %s87, 1
    %s89 = scalar_select %p86, %s87, %s88
    %p92 = pneg %p86
    %p93 = scmp.eq.s32.totalorder %s9, 1
    %p94 = por %p92, %p93
    %p95 = scmp.ne.s32.totalorder %s87, %s90
    %p96 = scmp.eq.s32.totalorder %s9, 0
    %p97 = por %p95, %p96
    %p98 = scmp.ne.s32.totalorder %s87, %s90
    %p99 = scmp.eq.s32.totalorder %s14, 1
    %p100 = por %p98, %p99
    %p101 = scmp.ne.s32.totalorder %s90, %s91
    %p102 = scmp.eq.s32.totalorder %s14, 0
    %p103 = por %p101, %p102
    %p104 = scmp.ne.s32.totalorder %s90, %s91
    %p105 = scmp.eq.s32.totalorder %s15, 1
    %p106 = por %p104, %p105
    %p108 = scmp.ne.s32.totalorder %s91, %s107
    %p109 = scmp.eq.s32.totalorder %s15, 0
    %p110 = por %p108, %p109
    %p111 = scmp.le.s32.totalorder 1, %s9
    %p112 = scmp.lt.s32.totalorder %s9, 3
    %p113 = pnand %p111, %p112
    %p114 = pneg %p113
    // Predicated region
    $region9: #{text_encoder_forward.30} parent=5 // pred_check
      _
    $region10: #{text_encoder_forward.30} parent=5 // pred_check_branch
      %116 = sbr.rel (%p113) target = $region12
    $region11: #{text_encoder_forward.30} parent=5 // pred_region
      %s117 = ssub.s32 %s9, 1
      // Predicated region
      $region13: #{text_encoder_forward.30} parent=11 // pred_check
        %p118 = pneg %p56
      $region14: #{text_encoder_forward.30} parent=11 // pred_check_branch
        %120 = sbr.rel (%p118) target = $region16
      $region15: #{text_encoder_forward.30} parent=11 // pred_region
        _
      $region16: #{text_encoder_forward.30} parent=11 // pred_fallthru
        _
      // Predicated region
      $region17: #{text_encoder_forward.30} parent=11 // pred_check
        %p121 = pneg %p77
      $region18: #{text_encoder_forward.30} parent=11 // pred_check_branch
        %123 = sbr.rel (%p121) target = $region20
      $region19: #{text_encoder_forward.30} parent=11 // pred_region
        _
      $region20: #{text_encoder_forward.30} parent=11 // pred_fallthru
        _
    $region12: #{text_encoder_forward.30} parent=5 // pred_fallthru
      _
    %p124 = scmp.lt.s32.totalorder %s9, 2
    // Predicated region
    $region21: #{text_encoder_forward.30} parent=5 // pred_check
      %p125 = pneg %p124
    $region22: #{text_encoder_forward.30} parent=5 // pred_check_branch
      %127 = sbr.rel (%p125) target = $region24
    $region23: #{text_encoder_forward.30} parent=5 // pred_region
      // Predicated region
      $region25: #{text_encoder_forward.30} parent=23 // pred_check
        %p128 = pneg %p29
      $region26: #{text_encoder_forward.30} parent=23 // pred_check_branch
        %130 = sbr.rel (%p128) target = $region28
      $region27: #{text_encoder_forward.30} parent=23 // pred_region
        %p131 = scmp.lt.s32.totalorder %s9, 1
        %s132 = scalar_select %p131, %s9, 1
        %s133 = smul.addr %s132, 8
        %s134 = scalar_lea.vmem %s0, %s133
      $region28: #{text_encoder_forward.30} parent=23 // pred_fallthru
        _
    $region24: #{text_encoder_forward.30} parent=5 // pred_fallthru
      _
    %p135 = scmp.le.s32.totalorder 1, %s9
    %p136 = scmp.lt.s32.totalorder %s9, 3
    %p137 = pnand %p135, %p136
    %p138 = pneg %p137
    // Predicated region
    $region29: #{text_encoder_forward.30} parent=5 // pred_check
      _
    $region30: #{text_encoder_forward.30} parent=5 // pred_check_branch
      %140 = sbr.rel (%p137) target = $region32
    $region31: #{text_encoder_forward.30} parent=5 // pred_region
      %s141 = ssub.s32 %s9, 1
      %p142 = scmp.lt.s32.totalorder %s14, 1
      %s143 = scalar_select %p142, %s14, 1
      %s144 = smul.addr %s143, 8
      %s145 = scalar_lea.vmem %s0, %s144
      %p146 = pneg %p35
      %p147 = pneg %p32
      %p148 = pneg %p56
      %p149 = pneg %p53
      %p150 = pneg %p77
      %p151 = pneg %p74
      %p152 = pneg %p103
      %p153 = pneg %p100
      %p154 = scmp.lt.s32.totalorder %s14, 1
      %s155 = scalar_select %p154, %s14, 1
      %s156 = smul.addr %s155, 8
      %s157 = scalar_lea.vmem %s3, %s156
      %p158 = scmp.lt.s32.totalorder %s14, 1
      %s159 = scalar_select %p158, %s14, 1
      %s160 = smul.addr %s159, 8
      %s161 = scalar_lea.vmem %s0, %s160
      %p162 = scmp.lt.s32.totalorder %s14, 1
      %s163 = scalar_select %p162, %s14, 1
      %s164 = smul.addr %s163, 8
      %s165 = scalar_lea.vmem %s3, %s164
      %v166 = vld [vmem:[%s161] sm:$0xff]
      %vm167 = vcmask 261120
      %v168 = vsel %vm167, %v166, 0.0
      %169 = vadd.xlane.f32.xlu0 %v168
      %v170 = vpop.xlane.xlu0 %169
      %v171 = vrcp.pop 32.0
      %v172 = vmul.f32 32.0, %v171
      %v173 = vsub.f32 1.0, %v172
      %v174 = vmul.f32 %v171, %v173
      %v175 = vadd.f32 %v171, %v174
      %vm176 = vweird.f32 %v171
      %v177 = vsel %vm176, %v171, %v175
      %v178 = vmul.f32 %v170, %v177
      %v179 = vsub.f32 %v166, %v178
      %v180 = vmul.f32 %v179, %v179
      %v181 = vsel %vm167, %v180, 0.0
      %182 = vadd.xlane.f32.xlu0 %v181
      %v183 = vpop.xlane.xlu0 %182
      %v184 = vmul.f32 %v183, %v177
      %v185 = vadd.f32 %v184, 1e-05
      %v186 = vrsqrt.pop %v185
      %v187 = vmul.f32 %v186, %v185
      %v188 = vmul.f32 %v187, %v186
      %v189 = vmul.f32 0.5, %v188
      %v190 = vsub.f32 1.5, %v189
      %v191 = vmul.f32 %v186, %v190
      %vm192 = vweird.f32 %v185
      %vm193 = vweird.f32 %v186
      %vm194 = vmor %vm192, %vm193
      %v195 = vsel %vm194, %v186, %v191
      %v196 = vmul.f32 %v179, %v195
      %v197 = vld [vmem:[%s1] sm:$0x1]
      %v199 = vperm.slane %v197, 0
      %v201 = vmul.f32 %v196, %v199
      %v202 = vld [vmem:[%s2] sm:$0x1]
      %v204 = vperm.slane %v202, 0
      %v206 = vadd.f32 %v201, %v204
      %207 = vst.msk [vmem:[%s165] sm:$0xff] %vm167, %v206
      %p208 = scmp.lt.s32.totalorder %s14, 1
      %s209 = scalar_select %p208, %s14, 1
      %s210 = smul.addr %s209, 8
      %s211 = scalar_lea.vmem %s3, %s210
      // Predicated region
      $region33: #{text_encoder_forward.30} parent=31 // pred_check
        %p212 = pneg %p100
      $region34: #{text_encoder_forward.30} parent=31 // pred_check_branch
        %214 = sbr.rel (%p212) target = $region36
      $region35: #{text_encoder_forward.30} parent=31 // pred_region
        _
      $region36: #{text_encoder_forward.30} parent=31 // pred_fallthru
        _
    $region32: #{text_encoder_forward.30} parent=5 // pred_fallthru
      _
    %p215 = scmp.le.s32.totalorder 2, %s9
    // Predicated region
    $region37: #{text_encoder_forward.30} parent=5 // pred_check
      %p216 = pneg %p215
    $region38: #{text_encoder_forward.30} parent=5 // pred_check_branch
      %218 = sbr.rel (%p216) target = $region40
    $region39: #{text_encoder_forward.30} parent=5 // pred_region
      %s219 = ssub.s32 %s9, 2
      // Predicated region
      $region41: #{text_encoder_forward.30} parent=39 // pred_check
        %p220 = pneg %p106
      $region42: #{text_encoder_forward.30} parent=39 // pred_check_branch
        %222 = sbr.rel (%p220) target = $region44
      $region43: #{text_encoder_forward.30} parent=39 // pred_region
        %p223 = scmp.lt.s32.totalorder %s15, 1
        %s224 = scalar_select %p223, %s15, 1
        %s225 = smul.addr %s224, 8
        %s226 = scalar_lea.vmem %s3, %s225
      $region44: #{text_encoder_forward.30} parent=39 // pred_fallthru
        _
    $region40: #{text_encoder_forward.30} parent=5 // pred_fallthru
      _
  $region6: #{text_encoder_forward.30} parent=0 // loop_footer
    %s13 = sadd.s32 1, %s9
  $region7: #{text_encoder_forward.30} parent=0 // loop_footer_branch
    %8 = sbr.rel target = $region3
  $region8: #{text_encoder_forward.30} parent=0 // loop_exit
    _

// kernel: text_encoder_forward.25
$region0: #{text_encoder_forward.25}
  #allocation0 [shape = 'u32[]', space=smem, size = 0x4, offset = 0x4, fixed_abs, tag = 'smem constant byte address 0x4 - core index']
  #allocation1 [shape = 'u32[72,128]{1,0:T(1,128)}', space=vmem, size = 0x9000, scoped, tag = 'internal scratch']
  %s0 = inlined_call_operand.vmem [shape: bf16[16,2048], index: 0, kind: input, shape index: {}]
  %s1 = inlined_call_operand.vmem [shape: bf16[2048,32], index: 1, kind: input, shape index: {}]
  %s2 = inlined_call_operand.vmem [shape: f32[1,32], index: 2, kind: input, shape index: {}]
  %s3 = inlined_call_operand.vmem [shape: f32[16,32], index: 3, kind: input, shape index: {}]
  %s4 = inlined_call_operand.vmem [shape: f32[1,32], index: 4, kind: input, shape index: {}]
  %s5 = inlined_call_operand.vmem [shape: f32[1,32], index: 5, kind: input, shape index: {}]
  %s6 = inlined_call_operand.vmem [shape: f32[16,32], index: 6, kind: output, shape index: {}]
  %s7 = sld [smem:[#allocation0]]
  $region57: #{text_encoder_forward.25} parent=0
    _
  %s9 = ssub.s32 1, %s7
  %s10 = scalar_select 0, %s9, %s7
  loop: start=0, step=1, limit=4
  $region2: #{text_encoder_forward.25} parent=0 // loop_pre_header
    _
  $region3: #{text_encoder_forward.25} parent=0 // loop_header
    %s12 = sphi 0, %s16
    %p13 = scmp.ge.s32.totalorder %s12, 4
    %s22 = sphi 0, %s24
    %s25 = sphi 0, %s22
    %s26 = sphi 0, %s25
    %s42 = sphi 0, %s26
    %s46 = sphi 0, %s46
    %s48 = sphi 0, %s46
    %s49 = sphi 0, %s48
    %s63 = sphi 0, %s49
    %s67 = sphi 0, %s67
    %s69 = sphi 0, %s67
    %s70 = sphi 0, %s69
    %s84 = sphi 0, %s70
    %s90 = sphi 0, %s92
    %s93 = sphi 0, %s90
    %s94 = sphi 0, %s93
    %s110 = sphi 0, %s94
    %s114 = sphi 0, %s114
    %s116 = sphi 0, %s114
    %s117 = sphi 0, %s116
    %s131 = sphi 0, %s117
    %s135 = sphi 0, %s135
    %s137 = sphi 0, %s135
    %s138 = sphi 0, %s137
    %s152 = sphi 0, %s138
    %s158 = sphi 0, %s160
    %s161 = sphi 0, %s158
    %s162 = sphi 0, %s161
    %s178 = sphi 0, %s162
  $region4: #{text_encoder_forward.25} parent=0 // loop_header_branch
    %15 = sbr.rel (%p13) target = $region8
  $region5: #{text_encoder_forward.25} parent=0 // loop_body
    %s17 = ssub.s32 %s12, 1
    %s18 = ssub.s32 %s12, 2
    %s19 = sadd.s32 %s12, 1
    %s20 = ssub.s32 %s12, %s19
    %p21 = scmp.eq.s32.totalorder %s20, 0
    %s23 = sadd.s32 %s22, 1
    %s24 = scalar_select %p21, %s22, %s23
    %p27 = pneg %p21
    %p28 = scmp.eq.s32.totalorder %s12, 1
    %p29 = por %p27, %p28
    %p30 = scmp.ne.s32.totalorder %s22, %s25
    %p31 = scmp.eq.s32.totalorder %s12, 0
    %p32 = por %p30, %p31
    %p33 = scmp.ne.s32.totalorder %s22, %s25
    %p34 = scmp.eq.s32.totalorder %s17, 1
    %p35 = por %p33, %p34
    %p36 = scmp.ne.s32.totalorder %s25, %s26
    %p37 = scmp.eq.s32.totalorder %s17, 0
    %p38 = por %p36, %p37
    %p39 = scmp.ne.s32.totalorder %s25, %s26
    %p40 = scmp.eq.s32.totalorder %s18, 1
    %p41 = por %p39, %p40
    %p43 = scmp.ne.s32.totalorder %s26, %s42
    %p44 = scmp.eq.s32.totalorder %s18, 0
    %p45 = por %p43, %p44
    %s47 = sadd.s32 %s46, 1
    %p50 = scmp.eq.s32.totalorder %s12, 1
    %p51 = scmp.ne.s32.totalorder %s46, %s48
    %p52 = scmp.eq.s32.totalorder %s12, 0
    %p53 = por %p51, %p52
    %p54 = scmp.ne.s32.totalorder %s46, %s48
    %p55 = scmp.eq.s32.totalorder %s17, 1
    %p56 = por %p54, %p55
    %p57 = scmp.ne.s32.totalorder %s48, %s49
    %p58 = scmp.eq.s32.totalorder %s17, 0
    %p59 = por %p57, %p58
    %p60 = scmp.ne.s32.totalorder %s48, %s49
    %p61 = scmp.eq.s32.totalorder %s18, 1
    %p62 = por %p60, %p61
    %p64 = scmp.ne.s32.totalorder %s49, %s63
    %p65 = scmp.eq.s32.totalorder %s18, 0
    %p66 = por %p64, %p65
    %s68 = sadd.s32 %s67, 1
    %p71 = scmp.eq.s32.totalorder %s12, 1
    %p72 = scmp.ne.s32.totalorder %s67, %s69
    %p73 = scmp.eq.s32.totalorder %s12, 0
    %p74 = por %p72, %p73
    %p75 = scmp.ne.s32.totalorder %s67, %s69
    %p76 = scmp.eq.s32.totalorder %s17, 1
    %p77 = por %p75, %p76
    %p78 = scmp.ne.s32.totalorder %s69, %s70
    %p79 = scmp.eq.s32.totalorder %s17, 0
    %p80 = por %p78, %p79
    %p81 = scmp.ne.s32.totalorder %s69, %s70
    %p82 = scmp.eq.s32.totalorder %s18, 1
    %p83 = por %p81, %p82
    %p85 = scmp.ne.s32.totalorder %s70, %s84
    %p86 = scmp.eq.s32.totalorder %s18, 0
    %p87 = por %p85, %p86
    %s88 = ssub.s32 %s12, %s19
    %p89 = scmp.eq.s32.totalorder %s88, 0
    %s91 = sadd.s32 %s90, 1
    %s92 = scalar_select %p89, %s90, %s91
    %p95 = pneg %p89
    %p96 = scmp.eq.s32.totalorder %s12, 1
    %p97 = por %p95, %p96
    %p98 = scmp.ne.s32.totalorder %s90, %s93
    %p99 = scmp.eq.s32.totalorder %s12, 0
    %p100 = por %p98, %p99
    %p101 = scmp.ne.s32.totalorder %s90, %s93
    %p102 = scmp.eq.s32.totalorder %s17, 1
    %p103 = por %p101, %p102
    %p104 = scmp.ne.s32.totalorder %s93, %s94
    %p105 = scmp.eq.s32.totalorder %s17, 0
    %p106 = por %p104, %p105
    %p107 = scmp.ne.s32.totalorder %s93, %s94
    %p108 = scmp.eq.s32.totalorder %s18, 1
    %p109 = por %p107, %p108
    %p111 = scmp.ne.s32.totalorder %s94, %s110
    %p112 = scmp.eq.s32.totalorder %s18, 0
    %p113 = por %p111, %p112
    %s115 = sadd.s32 %s114, 1
    %p118 = scmp.eq.s32.totalorder %s12, 1
    %p119 = scmp.ne.s32.totalorder %s114, %s116
    %p120 = scmp.eq.s32.totalorder %s12, 0
    %p121 = por %p119, %p120
    %p122 = scmp.ne.s32.totalorder %s114, %s116
    %p123 = scmp.eq.s32.totalorder %s17, 1
    %p124 = por %p122, %p123
    %p125 = scmp.ne.s32.totalorder %s116, %s117
    %p126 = scmp.eq.s32.totalorder %s17, 0
    %p127 = por %p125, %p126
    %p128 = scmp.ne.s32.totalorder %s116, %s117
    %p129 = scmp.eq.s32.totalorder %s18, 1
    %p130 = por %p128, %p129
    %p132 = scmp.ne.s32.totalorder %s117, %s131
    %p133 = scmp.eq.s32.totalorder %s18, 0
    %p134 = por %p132, %p133
    %s136 = sadd.s32 %s135, 1
    %p139 = scmp.eq.s32.totalorder %s12, 1
    %p140 = scmp.ne.s32.totalorder %s135, %s137
    %p141 = scmp.eq.s32.totalorder %s12, 0
    %p142 = por %p140, %p141
    %p143 = scmp.ne.s32.totalorder %s135, %s137
    %p144 = scmp.eq.s32.totalorder %s17, 1
    %p145 = por %p143, %p144
    %p146 = scmp.ne.s32.totalorder %s137, %s138
    %p147 = scmp.eq.s32.totalorder %s17, 0
    %p148 = por %p146, %p147
    %p149 = scmp.ne.s32.totalorder %s137, %s138
    %p150 = scmp.eq.s32.totalorder %s18, 1
    %p151 = por %p149, %p150
    %p153 = scmp.ne.s32.totalorder %s138, %s152
    %p154 = scmp.eq.s32.totalorder %s18, 0
    %p155 = por %p153, %p154
    %s156 = ssub.s32 %s12, %s19
    %p157 = scmp.eq.s32.totalorder %s156, 0
    %s159 = sadd.s32 %s158, 1
    %s160 = scalar_select %p157, %s158, %s159
    %p163 = pneg %p157
    %p164 = scmp.eq.s32.totalorder %s12, 1
    %p165 = por %p163, %p164
    %p166 = scmp.ne.s32.totalorder %s158, %s161
    %p167 = scmp.eq.s32.totalorder %s12, 0
    %p168 = por %p166, %p167
    %p169 = scmp.ne.s32.totalorder %s158, %s161
    %p170 = scmp.eq.s32.totalorder %s17, 1
    %p171 = por %p169, %p170
    %p172 = scmp.ne.s32.totalorder %s161, %s162
    %p173 = scmp.eq.s32.totalorder %s17, 0
    %p174 = por %p172, %p173
    %p175 = scmp.ne.s32.totalorder %s161, %s162
    %p176 = scmp.eq.s32.totalorder %s18, 1
    %p177 = por %p175, %p176
    %p179 = scmp.ne.s32.totalorder %s162, %s178
    %p180 = scmp.eq.s32.totalorder %s18, 0
    %p181 = por %p179, %p180
    %p182 = scmp.le.s32.totalorder 1, %s12
    %p183 = scmp.lt.s32.totalorder %s12, 3
    %p184 = pnand %p182, %p183
    %p185 = pneg %p184
    // Predicated region
    $region9: #{text_encoder_forward.25} parent=5 // pred_check
      _
    $region10: #{text_encoder_forward.25} parent=5 // pred_check_branch
      %187 = sbr.rel (%p184) target = $region12
    $region11: #{text_encoder_forward.25} parent=5 // pred_region
      %s188 = ssub.s32 %s12, 1
      // Predicated region
      $region13: #{text_encoder_forward.25} parent=11 // pred_check
        %p189 = pneg %p59
      $region14: #{text_encoder_forward.25} parent=11 // pred_check_branch
        %191 = sbr.rel (%p189) target = $region16
      $region15: #{text_encoder_forward.25} parent=11 // pred_region
        _
      $region16: #{text_encoder_forward.25} parent=11 // pred_fallthru
        _
      // Predicated region
      $region17: #{text_encoder_forward.25} parent=11 // pred_check
        %p192 = pneg %p80
      $region18: #{text_encoder_forward.25} parent=11 // pred_check_branch
        %194 = sbr.rel (%p192) target = $region20
      $region19: #{text_encoder_forward.25} parent=11 // pred_region
        _
      $region20: #{text_encoder_forward.25} parent=11 // pred_fallthru
        _
      // Predicated region
      $region21: #{text_encoder_forward.25} parent=11 // pred_check
        %p195 = pneg %p127
      $region22: #{text_encoder_forward.25} parent=11 // pred_check_branch
        %197 = sbr.rel (%p195) target = $region24
      $region23: #{text_encoder_forward.25} parent=11 // pred_region
        _
      $region24: #{text_encoder_forward.25} parent=11 // pred_fallthru
        _
      // Predicated region
      $region25: #{text_encoder_forward.25} parent=11 // pred_check
        %p198 = pneg %p148
      $region26: #{text_encoder_forward.25} parent=11 // pred_check_branch
        %200 = sbr.rel (%p198) target = $region28
      $region27: #{text_encoder_forward.25} parent=11 // pred_region
        _
      $region28: #{text_encoder_forward.25} parent=11 // pred_fallthru
        _
    $region12: #{text_encoder_forward.25} parent=5 // pred_fallthru
      _
    %p201 = scmp.lt.s32.totalorder %s12, 2
    // Predicated region
    $region29: #{text_encoder_forward.25} parent=5 // pred_check
      %p202 = pneg %p201
    $region30: #{text_encoder_forward.25} parent=5 // pred_check_branch
      %204 = sbr.rel (%p202) target = $region32
    $region31: #{text_encoder_forward.25} parent=5 // pred_region
      // Predicated region
      $region33: #{text_encoder_forward.25} parent=31 // pred_check
        %p205 = pneg %p32
      $region34: #{text_encoder_forward.25} parent=31 // pred_check_branch
        %207 = sbr.rel (%p205) target = $region36
      $region35: #{text_encoder_forward.25} parent=31 // pred_region
        %p208 = scmp.lt.s32.totalorder %s12, 1
        %s209 = scalar_select %p208, %s12, 1
        %s210 = smul.addr %s209, 16
        %s211 = smul.addr %s210, 4
        %s212 = scalar_lea.vmem %s0, %s211
      $region36: #{text_encoder_forward.25} parent=31 // pred_fallthru
        _
      // Predicated region
      $region37: #{text_encoder_forward.25} parent=31 // pred_check
        %p213 = pneg %p100
      $region38: #{text_encoder_forward.25} parent=31 // pred_check_branch
        %215 = sbr.rel (%p213) target = $region40
      $region39: #{text_encoder_forward.25} parent=31 // pred_region
        %p216 = scmp.lt.s32.totalorder %s12, 1
        %s217 = scalar_select %p216, %s12, 1
        %s218 = smul.addr %s217, 8
        %s219 = scalar_lea.vmem %s3, %s218
      $region40: #{text_encoder_forward.25} parent=31 // pred_fallthru
        _
    $region32: #{text_encoder_forward.25} parent=5 // pred_fallthru
      _
    %p220 = scmp.le.s32.totalorder 1, %s12
    %p221 = scmp.lt.s32.totalorder %s12, 3
    %p222 = pnand %p220, %p221
    %p223 = pneg %p222
    // Predicated region
    $region41: #{text_encoder_forward.25} parent=5 // pred_check
      _
    $region42: #{text_encoder_forward.25} parent=5 // pred_check_branch
      %225 = sbr.rel (%p222) target = $region44
    $region43: #{text_encoder_forward.25} parent=5 // pred_region
      %s226 = ssub.s32 %s12, 1
      %p227 = scmp.lt.s32.totalorder %s17, 1
      %s228 = scalar_select %p227, %s17, 1
      %s229 = smul.addr %s228, 16
      %s230 = smul.addr %s229, 4
      %s231 = scalar_lea.vmem %s0, %s230
      %p232 = pneg %p38
      %p233 = pneg %p35
      %p234 = pneg %p59
      %p235 = pneg %p56
      %p236 = pneg %p80
      %p237 = pneg %p77
      %p238 = scmp.lt.s32.totalorder %s17, 1
      %s239 = scalar_select %p238, %s17, 1
      %s240 = smul.addr %s239, 8
      %s241 = scalar_lea.vmem %s3, %s240
      %p242 = pneg %p106
      %p243 = pneg %p103
      %p244 = pneg %p127
      %p245 = pneg %p124
      %p246 = pneg %p148
      %p247 = pneg %p145
      %p248 = pneg %p174
      %p249 = pneg %p171
      %p250 = scmp.lt.s32.totalorder %s17, 1
      %s251 = scalar_select %p250, %s17, 1
      %s252 = smul.addr %s251, 8
      %s253 = scalar_lea.vmem %s6, %s252
      %p254 = scmp.lt.s32.totalorder %s17, 1
      %s255 = scalar_select %p254, %s17, 1
      %s256 = smul.addr %s255, 16
      %s257 = smul.addr %s256, 4
      %s258 = scalar_lea.vmem %s0, %s257
      %p259 = scmp.lt.s32.totalorder %s17, 1
      %s260 = scalar_select %p259, %s17, 1
      %s261 = smul.addr %s260, 8
      %s262 = scalar_lea.vmem %s3, %s261
      %p263 = scmp.lt.s32.totalorder %s17, 1
      %s264 = scalar_select %p263, %s17, 1
      %s265 = smul.addr %s264, 8
      %s266 = scalar_lea.vmem %s6, %s265
      %v267 = vld [vmem:[%s258] sm:$0xff]
      %v268 = vld [vmem:[%s258 + $0x8] sm:$0xff]
      %v269 = vld [vmem:[%s258 + $0x10] sm:$0xff]
      %v270 = vld [vmem:[%s258 + $0x18] sm:$0xff]
      %v271 = vld [vmem:[%s258 + $0x20] sm:$0xff]
      %v272 = vld [vmem:[%s258 + $0x28] sm:$0xff]
      %v273 = vld [vmem:[%s258 + $0x30] sm:$0xff]
      %v274 = vld [vmem:[%s258 + $0x38] sm:$0xff]
      %v275 = vld [vmem:[%s1] sm:$0xf]
      %v276 = vld [vmem:[%s1 + $0x4] sm:$0xf]
      %v277 = vld [vmem:[%s1 + $0x8] sm:$0xf]
      %v278 = vld [vmem:[%s1 + $0xc] sm:$0xf]
      %v279 = vld [vmem:[%s1 + $0x10] sm:$0xf]
      %v280 = vld [vmem:[%s1 + $0x14] sm:$0xf]
      %v281 = vld [vmem:[%s1 + $0x18] sm:$0xf]
      %v282 = vld [vmem:[%s1 + $0x1c] sm:$0xf]
      %v283 = vld [vmem:[%s1 + $0x20] sm:$0xf]
      %v284 = vld [vmem:[%s1 + $0x24] sm:$0xf]
      %v285 = vld [vmem:[%s1 + $0x28] sm:$0xf]
      %v286 = vld [vmem:[%s1 + $0x2c] sm:$0xf]
      %v287 = vld [vmem:[%s1 + $0x30] sm:$0xf]
      %v288 = vld [vmem:[%s1 + $0x34] sm:$0xf]
      %v289 = vld [vmem:[%s1 + $0x38] sm:$0xf]
      %v290 = vld [vmem:[%s1 + $0x3c] sm:$0xf]
      %v291 = vld [vmem:[%s1 + $0x40] sm:$0xf]
      %v292 = vld [vmem:[%s1 + $0x44] sm:$0xf]
      %v293 = vld [vmem:[%s1 + $0x48] sm:$0xf]
      %v294 = vld [vmem:[%s1 + $0x4c] sm:$0xf]
      %v295 = vld [vmem:[%s1 + $0x50] sm:$0xf]
      %v296 = vld [vmem:[%s1 + $0x54] sm:$0xf]
      %v297 = vld [vmem:[%s1 + $0x58] sm:$0xf]
      %v298 = vld [vmem:[%s1 + $0x5c] sm:$0xf]
      %v299 = vld [vmem:[%s1 + $0x60] sm:$0xf]
      %v300 = vld [vmem:[%s1 + $0x64] sm:$0xf]
      %v301 = vld [vmem:[%s1 + $0x68] sm:$0xf]
      %v302 = vld [vmem:[%s1 + $0x6c] sm:$0xf]
      %v303 = vld [vmem:[%s1 + $0x70] sm:$0xf]
      %v304 = vld [vmem:[%s1 + $0x74] sm:$0xf]
      %v305 = vld [vmem:[%s1 + $0x78] sm:$0xf]
      %v306 = vld [vmem:[%s1 + $0x7c] sm:$0xf]
      %v307 = vld [vmem:[%s1 + $0x80] sm:$0xf]
      %v308 = vld [vmem:[%s1 + $0x84] sm:$0xf]
      %v309 = vld [vmem:[%s1 + $0x88] sm:$0xf]
      %v310 = vld [vmem:[%s1 + $0x8c] sm:$0xf]
      %v311 = vld [vmem:[%s1 + $0x90] sm:$0xf]
      %v312 = vld [vmem:[%s1 + $0x94] sm:$0xf]
      %v313 = vld [vmem:[%s1 + $0x98] sm:$0xf]
      %v314 = vld [vmem:[%s1 + $0x9c] sm:$0xf]
      %v315 = vld [vmem:[%s1 + $0xa0] sm:$0xf]
      %v316 = vld [vmem:[%s1 + $0xa4] sm:$0xf]
      %v317 = vld [vmem:[%s1 + $0xa8] sm:$0xf]
      %v318 = vld [vmem:[%s1 + $0xac] sm:$0xf]
      %v319 = vld [vmem:[%s1 + $0xb0] sm:$0xf]
      %v320 = vld [vmem:[%s1 + $0xb4] sm:$0xf]
      %v321 = vld [vmem:[%s1 + $0xb8] sm:$0xf]
      %v322 = vld [vmem:[%s1 + $0xbc] sm:$0xf]
      %v323 = vld [vmem:[%s1 + $0xc0] sm:$0xf]
      %v324 = vld [vmem:[%s1 + $0xc4] sm:$0xf]
      %v325 = vld [vmem:[%s1 + $0xc8] sm:$0xf]
      %v326 = vld [vmem:[%s1 + $0xcc] sm:$0xf]
      %v327 = vld [vmem:[%s1 + $0xd0] sm:$0xf]
      %v328 = vld [vmem:[%s1 + $0xd4] sm:$0xf]
      %v329 = vld [vmem:[%s1 + $0xd8] sm:$0xf]
      %v330 = vld [vmem:[%s1 + $0xdc] sm:$0xf]
      %v331 = vld [vmem:[%s1 + $0xe0] sm:$0xf]
      %v332 = vld [vmem:[%s1 + $0xe4] sm:$0xf]
      %v333 = vld [vmem:[%s1 + $0xe8] sm:$0xf]
      %v334 = vld [vmem:[%s1 + $0xec] sm:$0xf]
      %v335 = vld [vmem:[%s1 + $0xf0] sm:$0xf]
      %v336 = vld [vmem:[%s1 + $0xf4] sm:$0xf]
      %v337 = vld [vmem:[%s1 + $0xf8] sm:$0xf]
      %v338 = vld [vmem:[%s1 + $0xfc] sm:$0xf]
      %v339 = vld [vmem:[%s1 + $0x100] sm:$0xf]
      %v340 = vld [vmem:[%s1 + $0x104] sm:$0xf]
      %v341 = vld [vmem:[%s1 + $0x108] sm:$0xf]
      %v342 = vld [vmem:[%s1 + $0x10c] sm:$0xf]
      %v343 = vld [vmem:[%s1 + $0x110] sm:$0xf]
      %v344 = vld [vmem:[%s1 + $0x114] sm:$0xf]
      %v345 = vld [vmem:[%s1 + $0x118] sm:$0xf]
      %v346 = vld [vmem:[%s1 + $0x11c] sm:$0xf]
      %v347 = vld [vmem:[%s1 + $0x120] sm:$0xf]
      %v348 = vld [vmem:[%s1 + $0x124] sm:$0xf]
      %v349 = vld [vmem:[%s1 + $0x128] sm:$0xf]
      %v350 = vld [vmem:[%s1 + $0x12c] sm:$0xf]
      %v351 = vld [vmem:[%s1 + $0x130] sm:$0xf]
      %v352 = vld [vmem:[%s1 + $0x134] sm:$0xf]
      %v353 = vld [vmem:[%s1 + $0x138] sm:$0xf]
      %v354 = vld [vmem:[%s1 + $0x13c] sm:$0xf]
      %v355 = vld [vmem:[%s1 + $0x140] sm:$0xf]
      %v356 = vld [vmem:[%s1 + $0x144] sm:$0xf]
      %v357 = vld [vmem:[%s1 + $0x148] sm:$0xf]
      %v358 = vld [vmem:[%s1 + $0x14c] sm:$0xf]
      %v359 = vld [vmem:[%s1 + $0x150] sm:$0xf]
      %v360 = vld [vmem:[%s1 + $0x154] sm:$0xf]
      %v361 = vld [vmem:[%s1 + $0x158] sm:$0xf]
      %v362 = vld [vmem:[%s1 + $0x15c] sm:$0xf]
      %v363 = vld [vmem:[%s1 + $0x160] sm:$0xf]
      %v364 = vld [vmem:[%s1 + $0x164] sm:$0xf]
      %v365 = vld [vmem:[%s1 + $0x168] sm:$0xf]
      %v366 = vld [vmem:[%s1 + $0x16c] sm:$0xf]
      %v367 = vld [vmem:[%s1 + $0x170] sm:$0xf]
      %v368 = vld [vmem:[%s1 + $0x174] sm:$0xf]
      %v369 = vld [vmem:[%s1 + $0x178] sm:$0xf]
      %v370 = vld [vmem:[%s1 + $0x17c] sm:$0xf]
      %v371 = vld [vmem:[%s1 + $0x180] sm:$0xf]
      %v372 = vld [vmem:[%s1 + $0x184] sm:$0xf]
      %v373 = vld [vmem:[%s1 + $0x188] sm:$0xf]
      %v374 = vld [vmem:[%s1 + $0x18c] sm:$0xf]
      %v375 = vld [vmem:[%s1 + $0x190] sm:$0xf]
      %v376 = vld [vmem:[%s1 + $0x194] sm:$0xf]
      %v377 = vld [vmem:[%s1 + $0x198] sm:$0xf]
      %v378 = vld [vmem:[%s1 + $0x19c] sm:$0xf]
      %v379 = vld [vmem:[%s1 + $0x1a0] sm:$0xf]
      %v380 = vld [vmem:[%s1 + $0x1a4] sm:$0xf]
      %v381 = vld [vmem:[%s1 + $0x1a8] sm:$0xf]
      %v382 = vld [vmem:[%s1 + $0x1ac] sm:$0xf]
      %v383 = vld [vmem:[%s1 + $0x1b0] sm:$0xf]
      %v384 = vld [vmem:[%s1 + $0x1b4] sm:$0xf]
      %v385 = vld [vmem:[%s1 + $0x1b8] sm:$0xf]
      %v386 = vld [vmem:[%s1 + $0x1bc] sm:$0xf]
      %v387 = vld [vmem:[%s1 + $0x1c0] sm:$0xf]
      %v388 = vld [vmem:[%s1 + $0x1c4] sm:$0xf]
      %v389 = vld [vmem:[%s1 + $0x1c8] sm:$0xf]
      %v390 = vld [vmem:[%s1 + $0x1cc] sm:$0xf]
      %v391 = vld [vmem:[%s1 + $0x1d0] sm:$0xf]
      %v392 = vld [vmem:[%s1 + $0x1d4] sm:$0xf]
      %v393 = vld [vmem:[%s1 + $0x1d8] sm:$0xf]
      %v394 = vld [vmem:[%s1 + $0x1dc] sm:$0xf]
      %v395 = vld [vmem:[%s1 + $0x1e0] sm:$0xf]
      %v396 = vld [vmem:[%s1 + $0x1e4] sm:$0xf]
      %v397 = vld [vmem:[%s1 + $0x1e8] sm:$0xf]
      %v398 = vld [vmem:[%s1 + $0x1ec] sm:$0xf]
      %v399 = vld [vmem:[%s1 + $0x1f0] sm:$0xf]
      %v400 = vld [vmem:[%s1 + $0x1f4] sm:$0xf]
      %v401 = vld [vmem:[%s1 + $0x1f8] sm:$0xf]
      %v402 = vld [vmem:[%s1 + $0x1fc] sm:$0xf]
      %v403 = vld [vmem:[%s1 + $0x200] sm:$0xf]
      %v404 = vld [vmem:[%s1 + $0x204] sm:$0xf]
      %v405 = vld [vmem:[%s1 + $0x208] sm:$0xf]
      %v406 = vld [vmem:[%s1 + $0x20c] sm:$0xf]
      %v407 = vld [vmem:[%s1 + $0x210] sm:$0xf]
      %v408 = vld [vmem:[%s1 + $0x214] sm:$0xf]
      %v409 = vld [vmem:[%s1 + $0x218] sm:$0xf]
      %v410 = vld [vmem:[%s1 + $0x21c] sm:$0xf]
      %v411 = vld [vmem:[%s1 + $0x220] sm:$0xf]
      %v412 = vld [vmem:[%s1 + $0x224] sm:$0xf]
      %v413 = vld [vmem:[%s1 + $0x228] sm:$0xf]
      %v414 = vld [vmem:[%s1 + $0x22c] sm:$0xf]
      %v415 = vld [vmem:[%s1 + $0x230] sm:$0xf]
      %v416 = vld [vmem:[%s1 + $0x234] sm:$0xf]
      %v417 = vld [vmem:[%s1 + $0x238] sm:$0xf]
      %v418 = vld [vmem:[%s1 + $0x23c] sm:$0xf]
      %v419 = vld [vmem:[%s1 + $0x240] sm:$0xf]
      %v420 = vld [vmem:[%s1 + $0x244] sm:$0xf]
      %v421 = vld [vmem:[%s1 + $0x248] sm:$0xf]
      %v422 = vld [vmem:[%s1 + $0x24c] sm:$0xf]
      %v423 = vld [vmem:[%s1 + $0x250] sm:$0xf]
      %v424 = vld [vmem:[%s1 + $0x254] sm:$0xf]
      %v425 = vld [vmem:[%s1 + $0x258] sm:$0xf]
      %v426 = vld [vmem:[%s1 + $0x25c] sm:$0xf]
      %v427 = vld [vmem:[%s1 + $0x260] sm:$0xf]
      %v428 = vld [vmem:[%s1 + $0x264] sm:$0xf]
      %v429 = vld [vmem:[%s1 + $0x268] sm:$0xf]
      %v430 = vld [vmem:[%s1 + $0x26c] sm:$0xf]
      %v431 = vld [vmem:[%s1 + $0x270] sm:$0xf]
      %v432 = vld [vmem:[%s1 + $0x274] sm:$0xf]
      %v433 = vld [vmem:[%s1 + $0x278] sm:$0xf]
      %v434 = vld [vmem:[%s1 + $0x27c] sm:$0xf]
      %v435 = vld [vmem:[%s1 + $0x280] sm:$0xf]
      %v436 = vld [vmem:[%s1 + $0x284] sm:$0xf]
      %v437 = vld [vmem:[%s1 + $0x288] sm:$0xf]
      %v438 = vld [vmem:[%s1 + $0x28c] sm:$0xf]
      %v439 = vld [vmem:[%s1 + $0x290] sm:$0xf]
      %v440 = vld [vmem:[%s1 + $0x294] sm:$0xf]
      %v441 = vld [vmem:[%s1 + $0x298] sm:$0xf]
      %v442 = vld [vmem:[%s1 + $0x29c] sm:$0xf]
      %v443 = vld [vmem:[%s1 + $0x2a0] sm:$0xf]
      %v444 = vld [vmem:[%s1 + $0x2a4] sm:$0xf]
      %v445 = vld [vmem:[%s1 + $0x2a8] sm:$0xf]
      %v446 = vld [vmem:[%s1 + $0x2ac] sm:$0xf]
      %v447 = vld [vmem:[%s1 + $0x2b0] sm:$0xf]
      %v448 = vld [vmem:[%s1 + $0x2b4] sm:$0xf]
      %v449 = vld [vmem:[%s1 + $0x2b8] sm:$0xf]
      %v450 = vld [vmem:[%s1 + $0x2bc] sm:$0xf]
      %v451 = vld [vmem:[%s1 + $0x2c0] sm:$0xf]
      %v452 = vld [vmem:[%s1 + $0x2c4] sm:$0xf]
      %v453 = vld [vmem:[%s1 + $0x2c8] sm:$0xf]
      %v454 = vld [vmem:[%s1 + $0x2cc] sm:$0xf]
      %v455 = vld [vmem:[%s1 + $0x2d0] sm:$0xf]
      %v456 = vld [vmem:[%s1 + $0x2d4] sm:$0xf]
      %v457 = vld [vmem:[%s1 + $0x2d8] sm:$0xf]
      %v458 = vld [vmem:[%s1 + $0x2dc] sm:$0xf]
      %v459 = vld [vmem:[%s1 + $0x2e0] sm:$0xf]
      %v460 = vld [vmem:[%s1 + $0x2e4] sm:$0xf]
      %v461 = vld [vmem:[%s1 + $0x2e8] sm:$0xf]
      %v462 = vld [vmem:[%s1 + $0x2ec] sm:$0xf]
      %v463 = vld [vmem:[%s1 + $0x2f0] sm:$0xf]
      %v464 = vld [vmem:[%s1 + $0x2f4] sm:$0xf]
      %v465 = vld [vmem:[%s1 + $0x2f8] sm:$0xf]
      %v466 = vld [vmem:[%s1 + $0x2fc] sm:$0xf]
      %v467 = vld [vmem:[%s1 + $0x300] sm:$0xf]
      %v468 = vld [vmem:[%s1 + $0x304] sm:$0xf]
      %v469 = vld [vmem:[%s1 + $0x308] sm:$0xf]
      %v470 = vld [vmem:[%s1 + $0x30c] sm:$0xf]
      %v471 = vld [vmem:[%s1 + $0x310] sm:$0xf]
      %v472 = vld [vmem:[%s1 + $0x314] sm:$0xf]
      %v473 = vld [vmem:[%s1 + $0x318] sm:$0xf]
      %v474 = vld [vmem:[%s1 + $0x31c] sm:$0xf]
      %v475 = vld [vmem:[%s1 + $0x320] sm:$0xf]
      %v476 = vld [vmem:[%s1 + $0x324] sm:$0xf]
      %v477 = vld [vmem:[%s1 + $0x328] sm:$0xf]
      %v478 = vld [vmem:[%s1 + $0x32c] sm:$0xf]
      %v479 = vld [vmem:[%s1 + $0x330] sm:$0xf]
      %v480 = vld [vmem:[%s1 + $0x334] sm:$0xf]
      %v481 = vld [vmem:[%s1 + $0x338] sm:$0xf]
      %v482 = vld [vmem:[%s1 + $0x33c] sm:$0xf]
      %v483 = vld [vmem:[%s1 + $0x340] sm:$0xf]
      %v484 = vld [vmem:[%s1 + $0x344] sm:$0xf]
      %v485 = vld [vmem:[%s1 + $0x348] sm:$0xf]
      %v486 = vld [vmem:[%s1 + $0x34c] sm:$0xf]
      %v487 = vld [vmem:[%s1 + $0x350] sm:$0xf]
      %v488 = vld [vmem:[%s1 + $0x354] sm:$0xf]
      %v489 = vld [vmem:[%s1 + $0x358] sm:$0xf]
      %v490 = vld [vmem:[%s1 + $0x35c] sm:$0xf]
      %v491 = vld [vmem:[%s1 + $0x360] sm:$0xf]
      %v492 = vld [vmem:[%s1 + $0x364] sm:$0xf]
      %v493 = vld [vmem:[%s1 + $0x368] sm:$0xf]
      %v494 = vld [vmem:[%s1 + $0x36c] sm:$0xf]
      %v495 = vld [vmem:[%s1 + $0x370] sm:$0xf]
      %v496 = vld [vmem:[%s1 + $0x374] sm:$0xf]
      %v497 = vld [vmem:[%s1 + $0x378] sm:$0xf]
      %v498 = vld [vmem:[%s1 + $0x37c] sm:$0xf]
      %v499 = vld [vmem:[%s1 + $0x380] sm:$0xf]
      %v500 = vld [vmem:[%s1 + $0x384] sm:$0xf]
      %v501 = vld [vmem:[%s1 + $0x388] sm:$0xf]
      %v502 = vld [vmem:[%s1 + $0x38c] sm:$0xf]
      %v503 = vld [vmem:[%s1 + $0x390] sm:$0xf]
      %v504 = vld [vmem:[%s1 + $0x394] sm:$0xf]
      %v505 = vld [vmem:[%s1 + $0x398] sm:$0xf]
      %v506 = vld [vmem:[%s1 + $0x39c] sm:$0xf]
      %v507 = vld [vmem:[%s1 + $0x3a0] sm:$0xf]
      %v508 = vld [vmem:[%s1 + $0x3a4] sm:$0xf]
      %v509 = vld [vmem:[%s1 + $0x3a8] sm:$0xf]
      %v510 = vld [vmem:[%s1 + $0x3ac] sm:$0xf]
      %v511 = vld [vmem:[%s1 + $0x3b0] sm:$0xf]
      %v512 = vld [vmem:[%s1 + $0x3b4] sm:$0xf]
      %v513 = vld [vmem:[%s1 + $0x3b8] sm:$0xf]
      %v514 = vld [vmem:[%s1 + $0x3bc] sm:$0xf]
      %v515 = vld [vmem:[%s1 + $0x3c0] sm:$0xf]
      %v516 = vld [vmem:[%s1 + $0x3c4] sm:$0xf]
      %v517 = vld [vmem:[%s1 + $0x3c8] sm:$0xf]
      %v518 = vld [vmem:[%s1 + $0x3cc] sm:$0xf]
      %v519 = vld [vmem:[%s1 + $0x3d0] sm:$0xf]
      %v520 = vld [vmem:[%s1 + $0x3d4] sm:$0xf]
      %v521 = vld [vmem:[%s1 + $0x3d8] sm:$0xf]
      %v522 = vld [vmem:[%s1 + $0x3dc] sm:$0xf]
      %v523 = vld [vmem:[%s1 + $0x3e0] sm:$0xf]
      %v524 = vld [vmem:[%s1 + $0x3e4] sm:$0xf]
      %v525 = vld [vmem:[%s1 + $0x3e8] sm:$0xf]
      %v526 = vld [vmem:[%s1 + $0x3ec] sm:$0xf]
      %v527 = vld [vmem:[%s1 + $0x3f0] sm:$0xf]
      %v528 = vld [vmem:[%s1 + $0x3f4] sm:$0xf]
      %v529 = vld [vmem:[%s1 + $0x3f8] sm:$0xf]
      %v530 = vld [vmem:[%s1 + $0x3fc] sm:$0xf]
      %v531 = vld [vmem:[%s2] sm:$0x1]
      %v533 = vperm.slane %v531, 0
      %v543 = vunpack.c.l.b16 %v267
      %v544 = vunpack.c.h.b16 %v267
      %v545 = vunpack.c.l.b16 %v268
      %v546 = vunpack.c.h.b16 %v268
      %v547 = vunpack.c.l.b16 %v269
      %v548 = vunpack.c.h.b16 %v269
      %v549 = vunpack.c.l.b16 %v270
      %v550 = vunpack.c.h.b16 %v270
      %v551 = vunpack.c.l.b16 %v271
      %v552 = vunpack.c.h.b16 %v271
      %v553 = vunpack.c.l.b16 %v272
      %v554 = vunpack.c.h.b16 %v272
      %v555 = vunpack.c.l.b16 %v273
      %v556 = vunpack.c.h.b16 %v273
      %v557 = vunpack.c.l.b16 %v274
      %v558 = vunpack.c.h.b16 %v274
      %v559 = vpack.c.b16 %v543, %v543
      %v560 = vpack.c.b16 %v544, %v544
      %v561 = vpack.c.b16 %v545, %v545
      %v562 = vpack.c.b16 %v546, %v546
      %v563 = vpack.c.b16 %v547, %v547
      %v564 = vpack.c.b16 %v548, %v548
      %v565 = vpack.c.b16 %v549, %v549
      %v566 = vpack.c.b16 %v550, %v550
      %v567 = vpack.c.b16 %v551, %v551
      %v568 = vpack.c.b16 %v552, %v552
      %v569 = vpack.c.b16 %v553, %v553
      %v570 = vpack.c.b16 %v554, %v554
      %v571 = vpack.c.b16 %v555, %v555
      %v572 = vpack.c.b16 %v556, %v556
      %v573 = vpack.c.b16 %v557, %v557
      %v574 = vpack.c.b16 %v558, %v558
      %v847 = vunpack.c.l.b16 %v275
      %v848 = vunpack.c.l.b16 %v276
      %v849 = vunpack.c.l.b16 %v277
      %v850 = vunpack.c.l.b16 %v278
      %v851 = vunpack.c.l.b16 %v279
      %v852 = vunpack.c.l.b16 %v280
      %v853 = vunpack.c.l.b16 %v281
      %v854 = vunpack.c.l.b16 %v282
      %v855 = vunpack.c.l.b16 %v283
      %v856 = vunpack.c.l.b16 %v284
      %v857 = vunpack.c.l.b16 %v285
      %v858 = vunpack.c.l.b16 %v286
      %v859 = vunpack.c.l.b16 %v287
      %v860 = vunpack.c.l.b16 %v288
      %v861 = vunpack.c.l.b16 %v289
      %v862 = vunpack.c.l.b16 %v290
      %v863 = vunpack.c.l.b16 %v291
      %v864 = vunpack.c.l.b16 %v292
      %v865 = vunpack.c.l.b16 %v293
      %v866 = vunpack.c.l.b16 %v294
      %v867 = vunpack.c.l.b16 %v295
      %v868 = vunpack.c.l.b16 %v296
      %v869 = vunpack.c.l.b16 %v297
      %v870 = vunpack.c.l.b16 %v298
      %v871 = vunpack.c.l.b16 %v299
      %v872 = vunpack.c.l.b16 %v300
      %v873 = vunpack.c.l.b16 %v301
      %v874 = vunpack.c.l.b16 %v302
      %v875 = vunpack.c.l.b16 %v303
      %v876 = vunpack.c.l.b16 %v304
      %v877 = vunpack.c.l.b16 %v305
      %v878 = vunpack.c.l.b16 %v306
      %v879 = vunpack.c.l.b16 %v307
      %v880 = vunpack.c.l.b16 %v308
      %v881 = vunpack.c.l.b16 %v309
      %v882 = vunpack.c.l.b16 %v310
      %v883 = vunpack.c.l.b16 %v311
      %v884 = vunpack.c.l.b16 %v312
      %v885 = vunpack.c.l.b16 %v313
      %v886 = vunpack.c.l.b16 %v314
      %v887 = vunpack.c.l.b16 %v315
      %v888 = vunpack.c.l.b16 %v316
      %v889 = vunpack.c.l.b16 %v317
      %v890 = vunpack.c.l.b16 %v318
      %v891 = vunpack.c.l.b16 %v319
      %v892 = vunpack.c.l.b16 %v320
      %v893 = vunpack.c.l.b16 %v321
      %v894 = vunpack.c.l.b16 %v322
      %v895 = vunpack.c.l.b16 %v323
      %v896 = vunpack.c.l.b16 %v324
      %v897 = vunpack.c.l.b16 %v325
      %v898 = vunpack.c.l.b16 %v326
      %v899 = vunpack.c.l.b16 %v327
      %v900 = vunpack.c.l.b16 %v328
      %v901 = vunpack.c.l.b16 %v329
      %v902 = vunpack.c.l.b16 %v330
      %v903 = vunpack.c.l.b16 %v331
      %v904 = vunpack.c.l.b16 %v332
      %v905 = vunpack.c.l.b16 %v333
      %v906 = vunpack.c.l.b16 %v334
      %v907 = vunpack.c.l.b16 %v335
      %v908 = vunpack.c.l.b16 %v336
      %v909 = vunpack.c.l.b16 %v337
      %v910 = vunpack.c.l.b16 %v338
      %v911 = vunpack.c.l.b16 %v339
      %v912 = vunpack.c.l.b16 %v340
      %v913 = vunpack.c.l.b16 %v341
      %v914 = vunpack.c.l.b16 %v342
      %v915 = vunpack.c.l.b16 %v343
      %v916 = vunpack.c.l.b16 %v344
      %v917 = vunpack.c.l.b16 %v345
      %v918 = vunpack.c.l.b16 %v346
      %v919 = vunpack.c.l.b16 %v347
      %v920 = vunpack.c.l.b16 %v348
      %v921 = vunpack.c.l.b16 %v349
      %v922 = vunpack.c.l.b16 %v350
      %v923 = vunpack.c.l.b16 %v351
      %v924 = vunpack.c.l.b16 %v352
      %v925 = vunpack.c.l.b16 %v353
      %v926 = vunpack.c.l.b16 %v354
      %v927 = vunpack.c.l.b16 %v355
      %v928 = vunpack.c.l.b16 %v356
      %v929 = vunpack.c.l.b16 %v357
      %v930 = vunpack.c.l.b16 %v358
      %v931 = vunpack.c.l.b16 %v359
      %v932 = vunpack.c.l.b16 %v360
      %v933 = vunpack.c.l.b16 %v361
      %v934 = vunpack.c.l.b16 %v362
      %v935 = vunpack.c.l.b16 %v363
      %v936 = vunpack.c.l.b16 %v364
      %v937 = vunpack.c.l.b16 %v365
      %v938 = vunpack.c.l.b16 %v366
      %v939 = vunpack.c.l.b16 %v367
      %v940 = vunpack.c.l.b16 %v368
      %v941 = vunpack.c.l.b16 %v369
      %v942 = vunpack.c.l.b16 %v370
      %v943 = vunpack.c.l.b16 %v371
      %v944 = vunpack.c.l.b16 %v372
      %v945 = vunpack.c.l.b16 %v373
      %v946 = vunpack.c.l.b16 %v374
      %v947 = vunpack.c.l.b16 %v375
      %v948 = vunpack.c.l.b16 %v376
      %v949 = vunpack.c.l.b16 %v377
      %v950 = vunpack.c.l.b16 %v378
      %v951 = vunpack.c.l.b16 %v379
      %v952 = vunpack.c.l.b16 %v380
      %v953 = vunpack.c.l.b16 %v381
      %v954 = vunpack.c.l.b16 %v382
      %v955 = vunpack.c.l.b16 %v383
      %v956 = vunpack.c.l.b16 %v384
      %v957 = vunpack.c.l.b16 %v385
      %v958 = vunpack.c.l.b16 %v386
      %v959 = vunpack.c.l.b16 %v387
      %v960 = vunpack.c.l.b16 %v388
      %v961 = vunpack.c.l.b16 %v389
      %v962 = vunpack.c.l.b16 %v390
      %v963 = vunpack.c.l.b16 %v391
      %v964 = vunpack.c.l.b16 %v392
      %v965 = vunpack.c.l.b16 %v393
      %v966 = vunpack.c.l.b16 %v394
      %v967 = vunpack.c.l.b16 %v395
      %v968 = vunpack.c.l.b16 %v396
      %v969 = vunpack.c.l.b16 %v397
      %v970 = vunpack.c.l.b16 %v398
      %v971 = vunpack.c.l.b16 %v399
      %v972 = vunpack.c.l.b16 %v400
      %v973 = vunpack.c.l.b16 %v401
      %v974 = vunpack.c.l.b16 %v402
      %v975 = vunpack.c.l.b16 %v403
      %v976 = vunpack.c.l.b16 %v404
      %v977 = vunpack.c.l.b16 %v405
      %v978 = vunpack.c.l.b16 %v406
      %v979 = vunpack.c.l.b16 %v407
      %v980 = vunpack.c.l.b16 %v408
      %v981 = vunpack.c.l.b16 %v409
      %v982 = vunpack.c.l.b16 %v410
      %v983 = vunpack.c.l.b16 %v411
      %v984 = vunpack.c.l.b16 %v412
      %v985 = vunpack.c.l.b16 %v413
      %v986 = vunpack.c.l.b16 %v414
      %v987 = vunpack.c.l.b16 %v415
      %v988 = vunpack.c.l.b16 %v416
      %v989 = vunpack.c.l.b16 %v417
      %v990 = vunpack.c.l.b16 %v418
      %v991 = vunpack.c.l.b16 %v419
      %v992 = vunpack.c.l.b16 %v420
      %v993 = vunpack.c.l.b16 %v421
      %v994 = vunpack.c.l.b16 %v422
      %v995 = vunpack.c.l.b16 %v423
      %v996 = vunpack.c.l.b16 %v424
      %v997 = vunpack.c.l.b16 %v425
      %v998 = vunpack.c.l.b16 %v426
      %v999 = vunpack.c.l.b16 %v427
      %v1000 = vunpack.c.l.b16 %v428
      %v1001 = vunpack.c.l.b16 %v429
      %v1002 = vunpack.c.l.b16 %v430
      %v1003 = vunpack.c.l.b16 %v431
      %v1004 = vunpack.c.l.b16 %v432
      %v1005 = vunpack.c.l.b16 %v433
      %v1006 = vunpack.c.l.b16 %v434
      %v1007 = vunpack.c.l.b16 %v435
      %v1008 = vunpack.c.l.b16 %v436
      %v1009 = vunpack.c.l.b16 %v437
      %v1010 = vunpack.c.l.b16 %v438
      %v1011 = vunpack.c.l.b16 %v439
      %v1012 = vunpack.c.l.b16 %v440
      %v1013 = vunpack.c.l.b16 %v441
      %v1014 = vunpack.c.l.b16 %v442
      %v1015 = vunpack.c.l.b16 %v443
      %v1016 = vunpack.c.l.b16 %v444
      %v1017 = vunpack.c.l.b16 %v445
      %v1018 = vunpack.c.l.b16 %v446
      %v1019 = vunpack.c.l.b16 %v447
      %v1020 = vunpack.c.l.b16 %v448
      %v1021 = vunpack.c.l.b16 %v449
      %v1022 = vunpack.c.l.b16 %v450
      %v1023 = vunpack.c.l.b16 %v451
      %v1024 = vunpack.c.l.b16 %v452
      %v1025 = vunpack.c.l.b16 %v453
      %v1026 = vunpack.c.l.b16 %v454
      %v1027 = vunpack.c.l.b16 %v455
      %v1028 = vunpack.c.l.b16 %v456
      %v1029 = vunpack.c.l.b16 %v457
      %v1030 = vunpack.c.l.b16 %v458
      %v1031 = vunpack.c.l.b16 %v459
      %v1032 = vunpack.c.l.b16 %v460
      %v1033 = vunpack.c.l.b16 %v461
      %v1034 = vunpack.c.l.b16 %v462
      %v1035 = vunpack.c.l.b16 %v463
      %v1036 = vunpack.c.l.b16 %v464
      %v1037 = vunpack.c.l.b16 %v465
      %v1038 = vunpack.c.l.b16 %v466
      %v1039 = vunpack.c.l.b16 %v467
      %v1040 = vunpack.c.l.b16 %v468
      %v1041 = vunpack.c.l.b16 %v469
      %v1042 = vunpack.c.l.b16 %v470
      %v1043 = vunpack.c.l.b16 %v471
      %v1044 = vunpack.c.l.b16 %v472
      %v1045 = vunpack.c.l.b16 %v473
      %v1046 = vunpack.c.l.b16 %v474
      %v1047 = vunpack.c.l.b16 %v475
      %v1048 = vunpack.c.l.b16 %v476
      %v1049 = vunpack.c.l.b16 %v477
      %v1050 = vunpack.c.l.b16 %v478
      %v1051 = vunpack.c.l.b16 %v479
      %v1052 = vunpack.c.l.b16 %v480
      %v1053 = vunpack.c.l.b16 %v481
      %v1054 = vunpack.c.l.b16 %v482
      %v1055 = vunpack.c.l.b16 %v483
      %v1056 = vunpack.c.l.b16 %v484
      %v1057 = vunpack.c.l.b16 %v485
      %v1058 = vunpack.c.l.b16 %v486
      %v1059 = vunpack.c.l.b16 %v487
      %v1060 = vunpack.c.l.b16 %v488
      %v1061 = vunpack.c.l.b16 %v489
      %v1062 = vunpack.c.l.b16 %v490
      %v1063 = vunpack.c.l.b16 %v491
      %v1064 = vunpack.c.l.b16 %v492
      %v1065 = vunpack.c.l.b16 %v493
      %v1066 = vunpack.c.l.b16 %v494
      %v1067 = vunpack.c.l.b16 %v495
      %v1068 = vunpack.c.l.b16 %v496
      %v1069 = vunpack.c.l.b16 %v497
      %v1070 = vunpack.c.l.b16 %v498
      %v1071 = vunpack.c.l.b16 %v499
      %v1072 = vunpack.c.l.b16 %v500
      %v1073 = vunpack.c.l.b16 %v501
      %v1074 = vunpack.c.l.b16 %v502
      %v1075 = vunpack.c.l.b16 %v503
      %v1076 = vunpack.c.l.b16 %v504
      %v1077 = vunpack.c.l.b16 %v505
      %v1078 = vunpack.c.l.b16 %v506
      %v1079 = vunpack.c.l.b16 %v507
      %v1080 = vunpack.c.l.b16 %v508
      %v1081 = vunpack.c.l.b16 %v509
      %v1082 = vunpack.c.l.b16 %v510
      %v1083 = vunpack.c.l.b16 %v511
      %v1084 = vunpack.c.l.b16 %v512
      %v1085 = vunpack.c.l.b16 %v513
      %v1086 = vunpack.c.l.b16 %v514
      %v1087 = vunpack.c.l.b16 %v515
      %v1088 = vunpack.c.l.b16 %v516
      %v1089 = vunpack.c.l.b16 %v517
      %v1090 = vunpack.c.l.b16 %v518
      %v1091 = vunpack.c.l.b16 %v519
      %v1092 = vunpack.c.l.b16 %v520
      %v1093 = vunpack.c.l.b16 %v521
      %v1094 = vunpack.c.l.b16 %v522
      %v1095 = vunpack.c.l.b16 %v523
      %v1096 = vunpack.c.l.b16 %v524
      %v1097 = vunpack.c.l.b16 %v525
      %v1098 = vunpack.c.l.b16 %v526
      %v1099 = vunpack.c.l.b16 %v527
      %v1100 = vunpack.c.l.b16 %v528
      %v1101 = vunpack.c.l.b16 %v529
      %v1102 = vunpack.c.l.b16 %v530
      %v1103 = vpack.c.b16 %v848, %v847
      %v1104 = vpack.c.b16 %v850, %v849
      %v1105 = vpack.c.b16 %v852, %v851
      %v1106 = vpack.c.b16 %v854, %v853
      %v1107 = vpack.c.b16 %v856, %v855
      %v1108 = vpack.c.b16 %v858, %v857
      %v1109 = vpack.c.b16 %v860, %v859
      %v1110 = vpack.c.b16 %v862, %v861
      %v1111 = vpack.c.b16 %v864, %v863
      %v1112 = vpack.c.b16 %v866, %v865
      %v1113 = vpack.c.b16 %v868, %v867
      %v1114 = vpack.c.b16 %v870, %v869
      %v1115 = vpack.c.b16 %v872, %v871
      %v1116 = vpack.c.b16 %v874, %v873
      %v1117 = vpack.c.b16 %v876, %v875
      %v1118 = vpack.c.b16 %v878, %v877
      %v1119 = vpack.c.b16 %v880, %v879
      %v1120 = vpack.c.b16 %v882, %v881
      %v1121 = vpack.c.b16 %v884, %v883
      %v1122 = vpack.c.b16 %v886, %v885
      %v1123 = vpack.c.b16 %v888, %v887
      %v1124 = vpack.c.b16 %v890, %v889
      %v1125 = vpack.c.b16 %v892, %v891
      %v1126 = vpack.c.b16 %v894, %v893
      %v1127 = vpack.c.b16 %v896, %v895
      %v1128 = vpack.c.b16 %v898, %v897
      %v1129 = vpack.c.b16 %v900, %v899
      %v1130 = vpack.c.b16 %v902, %v901
      %v1131 = vpack.c.b16 %v904, %v903
      %v1132 = vpack.c.b16 %v906, %v905
      %v1133 = vpack.c.b16 %v908, %v907
      %v1134 = vpack.c.b16 %v910, %v909
      %v1135 = vpack.c.b16 %v912, %v911
      %v1136 = vpack.c.b16 %v914, %v913
      %v1137 = vpack.c.b16 %v916, %v915
      %v1138 = vpack.c.b16 %v918, %v917
      %v1139 = vpack.c.b16 %v920, %v919
      %v1140 = vpack.c.b16 %v922, %v921
      %v1141 = vpack.c.b16 %v924, %v923
      %v1142 = vpack.c.b16 %v926, %v925
      %v1143 = vpack.c.b16 %v928, %v927
      %v1144 = vpack.c.b16 %v930, %v929
      %v1145 = vpack.c.b16 %v932, %v931
      %v1146 = vpack.c.b16 %v934, %v933
      %v1147 = vpack.c.b16 %v936, %v935
      %v1148 = vpack.c.b16 %v938, %v937
      %v1149 = vpack.c.b16 %v940, %v939
      %v1150 = vpack.c.b16 %v942, %v941
      %v1151 = vpack.c.b16 %v944, %v943
      %v1152 = vpack.c.b16 %v946, %v945
      %v1153 = vpack.c.b16 %v948, %v947
      %v1154 = vpack.c.b16 %v950, %v949
      %v1155 = vpack.c.b16 %v952, %v951
      %v1156 = vpack.c.b16 %v954, %v953
      %v1157 = vpack.c.b16 %v956, %v955
      %v1158 = vpack.c.b16 %v958, %v957
      %v1159 = vpack.c.b16 %v960, %v959
      %v1160 = vpack.c.b16 %v962, %v961
      %v1161 = vpack.c.b16 %v964, %v963
      %v1162 = vpack.c.b16 %v966, %v965
      %v1163 = vpack.c.b16 %v968, %v967
      %v1164 = vpack.c.b16 %v970, %v969
      %v1165 = vpack.c.b16 %v972, %v971
      %v1166 = vpack.c.b16 %v974, %v973
      %v1167 = vpack.c.b16 %v976, %v975
      %v1168 = vpack.c.b16 %v978, %v977
      %v1169 = vpack.c.b16 %v980, %v979
      %v1170 = vpack.c.b16 %v982, %v981
      %v1171 = vpack.c.b16 %v984, %v983
      %v1172 = vpack.c.b16 %v986, %v985
      %v1173 = vpack.c.b16 %v988, %v987
      %v1174 = vpack.c.b16 %v990, %v989
      %v1175 = vpack.c.b16 %v992, %v991
      %v1176 = vpack.c.b16 %v994, %v993
      %v1177 = vpack.c.b16 %v996, %v995
      %v1178 = vpack.c.b16 %v998, %v997
      %v1179 = vpack.c.b16 %v1000, %v999
      %v1180 = vpack.c.b16 %v1002, %v1001
      %v1181 = vpack.c.b16 %v1004, %v1003
      %v1182 = vpack.c.b16 %v1006, %v1005
      %v1183 = vpack.c.b16 %v1008, %v1007
      %v1184 = vpack.c.b16 %v1010, %v1009
      %v1185 = vpack.c.b16 %v1012, %v1011
      %v1186 = vpack.c.b16 %v1014, %v1013
      %v1187 = vpack.c.b16 %v1016, %v1015
      %v1188 = vpack.c.b16 %v1018, %v1017
      %v1189 = vpack.c.b16 %v1020, %v1019
      %v1190 = vpack.c.b16 %v1022, %v1021
      %v1191 = vpack.c.b16 %v1024, %v1023
      %v1192 = vpack.c.b16 %v1026, %v1025
      %v1193 = vpack.c.b16 %v1028, %v1027
      %v1194 = vpack.c.b16 %v1030, %v1029
      %v1195 = vpack.c.b16 %v1032, %v1031
      %v1196 = vpack.c.b16 %v1034, %v1033
      %v1197 = vpack.c.b16 %v1036, %v1035
      %v1198 = vpack.c.b16 %v1038, %v1037
      %v1199 = vpack.c.b16 %v1040, %v1039
      %v1200 = vpack.c.b16 %v1042, %v1041
      %v1201 = vpack.c.b16 %v1044, %v1043
      %v1202 = vpack.c.b16 %v1046, %v1045
      %v1203 = vpack.c.b16 %v1048, %v1047
      %v1204 = vpack.c.b16 %v1050, %v1049
      %v1205 = vpack.c.b16 %v1052, %v1051
      %v1206 = vpack.c.b16 %v1054, %v1053
      %v1207 = vpack.c.b16 %v1056, %v1055
      %v1208 = vpack.c.b16 %v1058, %v1057
      %v1209 = vpack.c.b16 %v1060, %v1059
      %v1210 = vpack.c.b16 %v1062, %v1061
      %v1211 = vpack.c.b16 %v1064, %v1063
      %v1212 = vpack.c.b16 %v1066, %v1065
      %v1213 = vpack.c.b16 %v1068, %v1067
      %v1214 = vpack.c.b16 %v1070, %v1069
      %v1215 = vpack.c.b16 %v1072, %v1071
      %v1216 = vpack.c.b16 %v1074, %v1073
      %v1217 = vpack.c.b16 %v1076, %v1075
      %v1218 = vpack.c.b16 %v1078, %v1077
      %v1219 = vpack.c.b16 %v1080, %v1079
      %v1220 = vpack.c.b16 %v1082, %v1081
      %v1221 = vpack.c.b16 %v1084, %v1083
      %v1222 = vpack.c.b16 %v1086, %v1085
      %v1223 = vpack.c.b16 %v1088, %v1087
      %v1224 = vpack.c.b16 %v1090, %v1089
      %v1225 = vpack.c.b16 %v1092, %v1091
      %v1226 = vpack.c.b16 %v1094, %v1093
      %v1227 = vpack.c.b16 %v1096, %v1095
      %v1228 = vpack.c.b16 %v1098, %v1097
      %v1229 = vpack.c.b16 %v1100, %v1099
      %v1230 = vpack.c.b16 %v1102, %v1101
      %1359 = vmatpush.bf16.msra.mxu0 %v1110
      %1360 = vmatpush.bf16.msra.mxu0 %v1109
      %1361 = vmatpush.bf16.msra.mxu0 %v1108
      %1362 = vmatpush.bf16.msra.mxu0 %v1107
      %1363 = vmatpush.bf16.msra.mxu0 %v1106
      %1364 = vmatpush.bf16.msra.mxu0 %v1105
      %1365 = vmatpush.bf16.msra.mxu0 %v1104
      %1366 = vmatpush.bf16.msra.mxu0 %v1103
      %1367 = vmatmul.bf16.gmra.mxu0 %v559
      %v1368 = vpop.f32.mrf.mxu0
      %v1369 = vadd.f32 %v533, %v1368
      %v1370 = vpop.f32.mrf.mxu0
      %1371 = vdwg.mxu0
      %1372 = vmatpush.bf16.msra.mxu0 %v1118
      %1373 = vmatpush.bf16.msra.mxu0 %v1117
      %1374 = vmatpush.bf16.msra.mxu0 %v1116
      %1375 = vmatpush.bf16.msra.mxu0 %v1115
      %1376 = vmatpush.bf16.msra.mxu0 %v1114
      %1377 = vmatpush.bf16.msra.mxu0 %v1113
      %1378 = vmatpush.bf16.msra.mxu0 %v1112
      %1379 = vmatpush.bf16.msra.mxu0 %v1111
      %1380 = vmatmul.bf16.gmra.mxu0 %v560
      %v1381 = vpop.f32.mrf.mxu0
      %v1382 = vadd.f32 %v1369, %v1381
      %v1383 = vpop.f32.mrf.mxu0
      %1384 = vdwg.mxu0
      %1385 = vmatpush.bf16.msra.mxu0 %v1126
      %1386 = vmatpush.bf16.msra.mxu0 %v1125
      %1387 = vmatpush.bf16.msra.mxu0 %v1124
      %1388 = vmatpush.bf16.msra.mxu0 %v1123
      %1389 = vmatpush.bf16.msra.mxu0 %v1122
      %1390 = vmatpush.bf16.msra.mxu0 %v1121
      %1391 = vmatpush.bf16.msra.mxu0 %v1120
      %1392 = vmatpush.bf16.msra.mxu0 %v1119
      %1393 = vmatmul.bf16.gmra.mxu0 %v561
      %v1394 = vpop.f32.mrf.mxu0
      %v1395 = vadd.f32 %v1382, %v1394
      %v1396 = vpop.f32.mrf.mxu0
      %1397 = vdwg.mxu0
      %1398 = vmatpush.bf16.msra.mxu0 %v1134
      %1399 = vmatpush.bf16.msra.mxu0 %v1133
      %1400 = vmatpush.bf16.msra.mxu0 %v1132
      %1401 = vmatpush.bf16.msra.mxu0 %v1131
      %1402 = vmatpush.bf16.msra.mxu0 %v1130
      %1403 = vmatpush.bf16.msra.mxu0 %v1129
      %1404 = vmatpush.bf16.msra.mxu0 %v1128
      %1405 = vmatpush.bf16.msra.mxu0 %v1127
      %1406 = vmatmul.bf16.gmra.mxu0 %v562
      %v1407 = vpop.f32.mrf.mxu0
      %v1408 = vadd.f32 %v1395, %v1407
      %v1409 = vpop.f32.mrf.mxu0
      %1410 = vdwg.mxu0
      %1411 = vmatpush.bf16.msra.mxu0 %v1142
      %1412 = vmatpush.bf16.msra.mxu0 %v1141
      %1413 = vmatpush.bf16.msra.mxu0 %v1140
      %1414 = vmatpush.bf16.msra.mxu0 %v1139
      %1415 = vmatpush.bf16.msra.mxu0 %v1138
      %1416 = vmatpush.bf16.msra.mxu0 %v1137
      %1417 = vmatpush.bf16.msra.mxu0 %v1136
      %1418 = vmatpush.bf16.msra.mxu0 %v1135
      %1419 = vmatmul.bf16.gmra.mxu0 %v563
      %v1420 = vpop.f32.mrf.mxu0
      %v1421 = vadd.f32 %v1408, %v1420
      %v1422 = vpop.f32.mrf.mxu0
      %1423 = vdwg.mxu0
      %1424 = vmatpush.bf16.msra.mxu0 %v1150
      %1425 = vmatpush.bf16.msra.mxu0 %v1149
      %1426 = vmatpush.bf16.msra.mxu0 %v1148
      %1427 = vmatpush.bf16.msra.mxu0 %v1147
      %1428 = vmatpush.bf16.msra.mxu0 %v1146
      %1429 = vmatpush.bf16.msra.mxu0 %v1145
      %1430 = vmatpush.bf16.msra.mxu0 %v1144
      %1431 = vmatpush.bf16.msra.mxu0 %v1143
      %1432 = vmatmul.bf16.gmra.mxu0 %v564
      %v1433 = vpop.f32.mrf.mxu0
      %v1434 = vadd.f32 %v1421, %v1433
      %v1435 = vpop.f32.mrf.mxu0
      %1436 = vdwg.mxu0
      %1437 = vmatpush.bf16.msra.mxu0 %v1158
      %1438 = vmatpush.bf16.msra.mxu0 %v1157
      %1439 = vmatpush.bf16.msra.mxu0 %v1156
      %1440 = vmatpush.bf16.msra.mxu0 %v1155
      %1441 = vmatpush.bf16.msra.mxu0 %v1154
      %1442 = vmatpush.bf16.msra.mxu0 %v1153
      %1443 = vmatpush.bf16.msra.mxu0 %v1152
      %1444 = vmatpush.bf16.msra.mxu0 %v1151
      %1445 = vmatmul.bf16.gmra.mxu0 %v565
      %v1446 = vpop.f32.mrf.mxu0
      %v1447 = vadd.f32 %v1434, %v1446
      %v1448 = vpop.f32.mrf.mxu0
      %1449 = vdwg.mxu0
      %1450 = vmatpush.bf16.msra.mxu0 %v1166
      %1451 = vmatpush.bf16.msra.mxu0 %v1165
      %1452 = vmatpush.bf16.msra.mxu0 %v1164
      %1453 = vmatpush.bf16.msra.mxu0 %v1163
      %1454 = vmatpush.bf16.msra.mxu0 %v1162
      %1455 = vmatpush.bf16.msra.mxu0 %v1161
      %1456 = vmatpush.bf16.msra.mxu0 %v1160
      %1457 = vmatpush.bf16.msra.mxu0 %v1159
      %1458 = vmatmul.bf16.gmra.mxu0 %v566
      %v1459 = vpop.f32.mrf.mxu0
      %v1460 = vadd.f32 %v1447, %v1459
      %v1461 = vpop.f32.mrf.mxu0
      %1462 = vdwg.mxu0
      %1463 = vmatpush.bf16.msra.mxu0 %v1174
      %1464 = vmatpush.bf16.msra.mxu0 %v1173
      %1465 = vmatpush.bf16.msra.mxu0 %v1172
      %1466 = vmatpush.bf16.msra.mxu0 %v1171
      %1467 = vmatpush.bf16.msra.mxu0 %v1170
      %1468 = vmatpush.bf16.msra.mxu0 %v1169
      %1469 = vmatpush.bf16.msra.mxu0 %v1168
      %1470 = vmatpush.bf16.msra.mxu0 %v1167
      %1471 = vmatmul.bf16.gmra.mxu0 %v567
      %v1472 = vpop.f32.mrf.mxu0
      %v1473 = vadd.f32 %v1460, %v1472
      %v1474 = vpop.f32.mrf.mxu0
      %1475 = vdwg.mxu0
      %1476 = vmatpush.bf16.msra.mxu0 %v1182
      %1477 = vmatpush.bf16.msra.mxu0 %v1181
      %1478 = vmatpush.bf16.msra.mxu0 %v1180
      %1479 = vmatpush.bf16.msra.mxu0 %v1179
      %1480 = vmatpush.bf16.msra.mxu0 %v1178
      %1481 = vmatpush.bf16.msra.mxu0 %v1177
      %1482 = vmatpush.bf16.msra.mxu0 %v1176
      %1483 = vmatpush.bf16.msra.mxu0 %v1175
      %1484 = vmatmul.bf16.gmra.mxu0 %v568
      %v1485 = vpop.f32.mrf.mxu0
      %v1486 = vadd.f32 %v1473, %v1485
      %v1487 = vpop.f32.mrf.mxu0
      %1488 = vdwg.mxu0
      %1489 = vmatpush.bf16.msra.mxu0 %v1190
      %1490 = vmatpush.bf16.msra.mxu0 %v1189
      %1491 = vmatpush.bf16.msra.mxu0 %v1188
      %1492 = vmatpush.bf16.msra.mxu0 %v1187
      %1493 = vmatpush.bf16.msra.mxu0 %v1186
      %1494 = vmatpush.bf16.msra.mxu0 %v1185
      %1495 = vmatpush.bf16.msra.mxu0 %v1184
      %1496 = vmatpush.bf16.msra.mxu0 %v1183
      %1497 = vmatmul.bf16.gmra.mxu0 %v569
      %v1498 = vpop.f32.mrf.mxu0
      %v1499 = vadd.f32 %v1486, %v1498
      %v1500 = vpop.f32.mrf.mxu0
      %1501 = vdwg.mxu0
      %1502 = vmatpush.bf16.msra.mxu0 %v1198
      %1503 = vmatpush.bf16.msra.mxu0 %v1197
      %1504 = vmatpush.bf16.msra.mxu0 %v1196
      %1505 = vmatpush.bf16.msra.mxu0 %v1195
      %1506 = vmatpush.bf16.msra.mxu0 %v1194
      %1507 = vmatpush.bf16.msra.mxu0 %v1193
      %1508 = vmatpush.bf16.msra.mxu0 %v1192
      %1509 = vmatpush.bf16.msra.mxu0 %v1191
      %1510 = vmatmul.bf16.gmra.mxu0 %v570
      %v1511 = vpop.f32.mrf.mxu0
      %v1512 = vadd.f32 %v1499, %v1511
      %v1513 = vpop.f32.mrf.mxu0
      %1514 = vdwg.mxu0
      %1515 = vmatpush.bf16.msra.mxu0 %v1206
      %1516 = vmatpush.bf16.msra.mxu0 %v1205
      %1517 = vmatpush.bf16.msra.mxu0 %v1204
      %1518 = vmatpush.bf16.msra.mxu0 %v1203
      %1519 = vmatpush.bf16.msra.mxu0 %v1202
      %1520 = vmatpush.bf16.msra.mxu0 %v1201
      %1521 = vmatpush.bf16.msra.mxu0 %v1200
      %1522 = vmatpush.bf16.msra.mxu0 %v1199
      %1523 = vmatmul.bf16.gmra.mxu0 %v571
      %v1524 = vpop.f32.mrf.mxu0
      %v1525 = vadd.f32 %v1512, %v1524
      %v1526 = vpop.f32.mrf.mxu0
      %1527 = vdwg.mxu0
      %1528 = vmatpush.bf16.msra.mxu0 %v1214
      %1529 = vmatpush.bf16.msra.mxu0 %v1213
      %1530 = vmatpush.bf16.msra.mxu0 %v1212
      %1531 = vmatpush.bf16.msra.mxu0 %v1211
      %1532 = vmatpush.bf16.msra.mxu0 %v1210
      %1533 = vmatpush.bf16.msra.mxu0 %v1209
      %1534 = vmatpush.bf16.msra.mxu0 %v1208
      %1535 = vmatpush.bf16.msra.mxu0 %v1207
      %1536 = vmatmul.bf16.gmra.mxu0 %v572
      %v1537 = vpop.f32.mrf.mxu0
      %v1538 = vadd.f32 %v1525, %v1537
      %v1539 = vpop.f32.mrf.mxu0
      %1540 = vdwg.mxu0
      %1541 = vmatpush.bf16.msra.mxu0 %v1222
      %1542 = vmatpush.bf16.msra.mxu0 %v1221
      %1543 = vmatpush.bf16.msra.mxu0 %v1220
      %1544 = vmatpush.bf16.msra.mxu0 %v1219
      %1545 = vmatpush.bf16.msra.mxu0 %v1218
      %1546 = vmatpush.bf16.msra.mxu0 %v1217
      %1547 = vmatpush.bf16.msra.mxu0 %v1216
      %1548 = vmatpush.bf16.msra.mxu0 %v1215
      %1549 = vmatmul.bf16.gmra.mxu0 %v573
      %v1550 = vpop.f32.mrf.mxu0
      %v1551 = vadd.f32 %v1538, %v1550
      %v1552 = vpop.f32.mrf.mxu0
      %1553 = vdwg.mxu0
      %1554 = vmatpush.bf16.msra.mxu0 %v1230
      %1555 = vmatpush.bf16.msra.mxu0 %v1229
      %1556 = vmatpush.bf16.msra.mxu0 %v1228
      %1557 = vmatpush.bf16.msra.mxu0 %v1227
      %1558 = vmatpush.bf16.msra.mxu0 %v1226
      %1559 = vmatpush.bf16.msra.mxu0 %v1225
      %1560 = vmatpush.bf16.msra.mxu0 %v1224
      %1561 = vmatpush.bf16.msra.mxu0 %v1223
      %1562 = vmatmul.bf16.gmra.mxu0 %v574
      %v1563 = vpop.f32.mrf.mxu0
      %v1564 = vadd.f32 %v1551, %v1563
      %v1565 = vpop.f32.mrf.mxu0
      %1566 = vdwg.mxu0
      %v1567 = vld [vmem:[%s262] sm:$0xff]
      %v1568 = vadd.f32 %v1564, %v1567
      %vm1569 = vcmask 261120
      %v1570 = vsel %vm1569, %v1568, 0.0
      %1571 = vadd.xlane.f32.xlu0 %v1570
      %v1572 = vpop.xlane.xlu0 %1571
      %v1573 = vrcp.pop 32.0
      %v1574 = vmul.f32 32.0, %v1573
      %v1575 = vsub.f32 1.0, %v1574
      %v1576 = vmul.f32 %v1573, %v1575
      %v1577 = vadd.f32 %v1573, %v1576
      %vm1578 = vweird.f32 %v1573
      %v1579 = vsel %vm1578, %v1573, %v1577
      %v1580 = vmul.f32 %v1572, %v1579
      %v1581 = vsub.f32 %v1568, %v1580
      %v1582 = vmul.f32 %v1581, %v1581
      %v1583 = vsel %vm1569, %v1582, 0.0
      %1584 = vadd.xlane.f32.xlu0 %v1583
      %v1585 = vpop.xlane.xlu0 %1584
      %v1586 = vmul.f32 %v1585, %v1579
      %v1587 = vadd.f32 %v1586, 1e-05
      %v1588 = vrsqrt.pop %v1587
      %v1589 = vmul.f32 %v1588, %v1587
      %v1590 = vmul.f32 %v1589, %v1588
      %v1591 = vmul.f32 0.5, %v1590
      %v1592 = vsub.f32 1.5, %v1591
      %v1593 = vmul.f32 %v1588, %v1592
      %vm1594 = vweird.f32 %v1587
      %vm1595 = vweird.f32 %v1588
      %vm1596 = vmor %vm1594, %vm1595
      %v1597 = vsel %vm1596, %v1588, %v1593
      %v1598 = vmul.f32 %v1581, %v1597
      %v1599 = vld [vmem:[%s4] sm:$0x1]
      %v1601 = vperm.slane %v1599, 0
      %v1603 = vmul.f32 %v1598, %v1601
      %v1604 = vld [vmem:[%s5] sm:$0x1]
      %v1606 = vperm.slane %v1604, 0
      %v1608 = vadd.f32 %v1603, %v1606
      %1609 = vst.msk [vmem:[%s266] sm:$0xff] %vm1569, %v1608
      %p1610 = scmp.lt.s32.totalorder %s17, 1
      %s1611 = scalar_select %p1610, %s17, 1
      %s1612 = smul.addr %s1611, 8
      %s1613 = scalar_lea.vmem %s6, %s1612
      // Predicated region
      $region45: #{text_encoder_forward.25} parent=43 // pred_check
        %p1614 = pneg %p171
      $region46: #{text_encoder_forward.25} parent=43 // pred_check_branch
        %1616 = sbr.rel (%p1614) target = $region48
      $region47: #{text_encoder_forward.25} parent=43 // pred_region
        _
      $region48: #{text_encoder_forward.25} parent=43 // pred_fallthru
        _
    $region44: #{text_encoder_forward.25} parent=5 // pred_fallthru
      _
    %p1617 = scmp.le.s32.totalorder 2, %s12
    // Predicated region
    $region49: #{text_encoder_forward.25} parent=5 // pred_check
      %p1618 = pneg %p1617
    $region50: #{text_encoder_forward.25} parent=5 // pred_check_branch
      %1620 = sbr.rel (%p1618) target = $region52
    $region51: #{text_encoder_forward.25} parent=5 // pred_region
      %s1621 = ssub.s32 %s12, 2
      // Predicated region
      $region53: #{text_encoder_forward.25} parent=51 // pred_check
        %p1622 = pneg %p177
      $region54: #{text_encoder_forward.25} parent=51 // pred_check_branch
        %1624 = sbr.rel (%p1622) target = $region56
      $region55: #{text_encoder_forward.25} parent=51 // pred_region
        %p1625 = scmp.lt.s32.totalorder %s18, 1
        %s1626 = scalar_select %p1625, %s18, 1
        %s1627 = smul.addr %s1626, 8
        %s1628 = scalar_lea.vmem %s6, %s1627
      $region56: #{text_encoder_forward.25} parent=51 // pred_fallthru
        _
    $region52: #{text_encoder_forward.25} parent=5 // pred_fallthru
      _
  $region6: #{text_encoder_forward.25} parent=0 // loop_footer
    %s16 = sadd.s32 1, %s12
  $region7: #{text_encoder_forward.25} parent=0 // loop_footer_branch
    %11 = sbr.rel target = $region3
  $region8: #{text_encoder_forward.25} parent=0 // loop_exit
    _

// kernel: text_encoder_forward.33
$region0: #{text_encoder_forward.33}
  #allocation0 [shape = 'u32[]', space=smem, size = 0x4, offset = 0x4, fixed_abs, tag = 'smem constant byte address 0x4 - core index']
  #allocation1 [shape = 'u32[72,128]{1,0:T(1,128)}', space=vmem, size = 0x9000, scoped, tag = 'internal scratch']
  %s0 = inlined_call_operand.vmem [shape: f32[2,8,32], index: 0, kind: input, shape index: {}]
  %s1 = inlined_call_operand.vmem [shape: f32[2,8,32], index: 1, kind: input, shape index: {}]
  %s2 = inlined_call_operand.vmem [shape: bf16[32,32], index: 2, kind: input, shape index: {}]
  %s3 = inlined_call_operand.vmem [shape: f32[1,32], index: 3, kind: input, shape index: {}]
  %s4 = inlined_call_operand.vmem [shape: bf16[32,64], index: 4, kind: input, shape index: {}]
  %s5 = inlined_call_operand.vmem [shape: f32[1,64], index: 5, kind: input, shape index: {}]
  %s6 = inlined_call_operand.vmem [shape: bf16[2,8,32], index: 6, kind: output, shape index: {}]
  %s7 = sld [smem:[#allocation0]]
  $region57: #{text_encoder_forward.33} parent=0
    _
  %s9 = ssub.s32 1, %s7
  %s10 = scalar_select 0, %s9, %s7
  loop: start=0, step=1, limit=4
  $region2: #{text_encoder_forward.33} parent=0 // loop_pre_header
    _
  $region3: #{text_encoder_forward.33} parent=0 // loop_header
    %s12 = sphi 0, %s16
    %p13 = scmp.ge.s32.totalorder %s12, 4
    %s22 = sphi 0, %s24
    %s25 = sphi 0, %s22
    %s26 = sphi 0, %s25
    %s42 = sphi 0, %s26
    %s48 = sphi 0, %s50
    %s51 = sphi 0, %s48
    %s52 = sphi 0, %s51
    %s68 = sphi 0, %s52
    %s72 = sphi 0, %s72
    %s74 = sphi 0, %s72
    %s75 = sphi 0, %s74
    %s89 = sphi 0, %s75
    %s93 = sphi 0, %s93
    %s95 = sphi 0, %s93
    %s96 = sphi 0, %s95
    %s110 = sphi 0, %s96
    %s114 = sphi 0, %s114
    %s116 = sphi 0, %s114
    %s117 = sphi 0, %s116
    %s131 = sphi 0, %s117
    %s135 = sphi 0, %s135
    %s137 = sphi 0, %s135
    %s138 = sphi 0, %s137
    %s152 = sphi 0, %s138
    %s158 = sphi 0, %s160
    %s161 = sphi 0, %s158
    %s162 = sphi 0, %s161
    %s178 = sphi 0, %s162
  $region4: #{text_encoder_forward.33} parent=0 // loop_header_branch
    %15 = sbr.rel (%p13) target = $region8
  $region5: #{text_encoder_forward.33} parent=0 // loop_body
    %s17 = ssub.s32 %s12, 1
    %s18 = ssub.s32 %s12, 2
    %s19 = sadd.s32 %s12, 1
    %s20 = ssub.s32 %s12, %s19
    %p21 = scmp.eq.s32.totalorder %s20, 0
    %s23 = sadd.s32 %s22, 1
    %s24 = scalar_select %p21, %s22, %s23
    %p27 = pneg %p21
    %p28 = scmp.eq.s32.totalorder %s12, 1
    %p29 = por %p27, %p28
    %p30 = scmp.ne.s32.totalorder %s22, %s25
    %p31 = scmp.eq.s32.totalorder %s12, 0
    %p32 = por %p30, %p31
    %p33 = scmp.ne.s32.totalorder %s22, %s25
    %p34 = scmp.eq.s32.totalorder %s17, 1
    %p35 = por %p33, %p34
    %p36 = scmp.ne.s32.totalorder %s25, %s26
    %p37 = scmp.eq.s32.totalorder %s17, 0
    %p38 = por %p36, %p37
    %p39 = scmp.ne.s32.totalorder %s25, %s26
    %p40 = scmp.eq.s32.totalorder %s18, 1
    %p41 = por %p39, %p40
    %p43 = scmp.ne.s32.totalorder %s26, %s42
    %p44 = scmp.eq.s32.totalorder %s18, 0
    %p45 = por %p43, %p44
    %s46 = ssub.s32 %s12, %s19
    %p47 = scmp.eq.s32.totalorder %s46, 0
    %s49 = sadd.s32 %s48, 1
    %s50 = scalar_select %p47, %s48, %s49
    %p53 = pneg %p47
    %p54 = scmp.eq.s32.totalorder %s12, 1
    %p55 = por %p53, %p54
    %p56 = scmp.ne.s32.totalorder %s48, %s51
    %p57 = scmp.eq.s32.totalorder %s12, 0
    %p58 = por %p56, %p57
    %p59 = scmp.ne.s32.totalorder %s48, %s51
    %p60 = scmp.eq.s32.totalorder %s17, 1
    %p61 = por %p59, %p60
    %p62 = scmp.ne.s32.totalorder %s51, %s52
    %p63 = scmp.eq.s32.totalorder %s17, 0
    %p64 = por %p62, %p63
    %p65 = scmp.ne.s32.totalorder %s51, %s52
    %p66 = scmp.eq.s32.totalorder %s18, 1
    %p67 = por %p65, %p66
    %p69 = scmp.ne.s32.totalorder %s52, %s68
    %p70 = scmp.eq.s32.totalorder %s18, 0
    %p71 = por %p69, %p70
    %s73 = sadd.s32 %s72, 1
    %p76 = scmp.eq.s32.totalorder %s12, 1
    %p77 = scmp.ne.s32.totalorder %s72, %s74
    %p78 = scmp.eq.s32.totalorder %s12, 0
    %p79 = por %p77, %p78
    %p80 = scmp.ne.s32.totalorder %s72, %s74
    %p81 = scmp.eq.s32.totalorder %s17, 1
    %p82 = por %p80, %p81
    %p83 = scmp.ne.s32.totalorder %s74, %s75
    %p84 = scmp.eq.s32.totalorder %s17, 0
    %p85 = por %p83, %p84
    %p86 = scmp.ne.s32.totalorder %s74, %s75
    %p87 = scmp.eq.s32.totalorder %s18, 1
    %p88 = por %p86, %p87
    %p90 = scmp.ne.s32.totalorder %s75, %s89
    %p91 = scmp.eq.s32.totalorder %s18, 0
    %p92 = por %p90, %p91
    %s94 = sadd.s32 %s93, 1
    %p97 = scmp.eq.s32.totalorder %s12, 1
    %p98 = scmp.ne.s32.totalorder %s93, %s95
    %p99 = scmp.eq.s32.totalorder %s12, 0
    %p100 = por %p98, %p99
    %p101 = scmp.ne.s32.totalorder %s93, %s95
    %p102 = scmp.eq.s32.totalorder %s17, 1
    %p103 = por %p101, %p102
    %p104 = scmp.ne.s32.totalorder %s95, %s96
    %p105 = scmp.eq.s32.totalorder %s17, 0
    %p106 = por %p104, %p105
    %p107 = scmp.ne.s32.totalorder %s95, %s96
    %p108 = scmp.eq.s32.totalorder %s18, 1
    %p109 = por %p107, %p108
    %p111 = scmp.ne.s32.totalorder %s96, %s110
    %p112 = scmp.eq.s32.totalorder %s18, 0
    %p113 = por %p111, %p112
    %s115 = sadd.s32 %s114, 1
    %p118 = scmp.eq.s32.totalorder %s12, 1
    %p119 = scmp.ne.s32.totalorder %s114, %s116
    %p120 = scmp.eq.s32.totalorder %s12, 0
    %p121 = por %p119, %p120
    %p122 = scmp.ne.s32.totalorder %s114, %s116
    %p123 = scmp.eq.s32.totalorder %s17, 1
    %p124 = por %p122, %p123
    %p125 = scmp.ne.s32.totalorder %s116, %s117
    %p126 = scmp.eq.s32.totalorder %s17, 0
    %p127 = por %p125, %p126
    %p128 = scmp.ne.s32.totalorder %s116, %s117
    %p129 = scmp.eq.s32.totalorder %s18, 1
    %p130 = por %p128, %p129
    %p132 = scmp.ne.s32.totalorder %s117, %s131
    %p133 = scmp.eq.s32.totalorder %s18, 0
    %p134 = por %p132, %p133
    %s136 = sadd.s32 %s135, 1
    %p139 = scmp.eq.s32.totalorder %s12, 1
    %p140 = scmp.ne.s32.totalorder %s135, %s137
    %p141 = scmp.eq.s32.totalorder %s12, 0
    %p142 = por %p140, %p141
    %p143 = scmp.ne.s32.totalorder %s135, %s137
    %p144 = scmp.eq.s32.totalorder %s17, 1
    %p145 = por %p143, %p144
    %p146 = scmp.ne.s32.totalorder %s137, %s138
    %p147 = scmp.eq.s32.totalorder %s17, 0
    %p148 = por %p146, %p147
    %p149 = scmp.ne.s32.totalorder %s137, %s138
    %p150 = scmp.eq.s32.totalorder %s18, 1
    %p151 = por %p149, %p150
    %p153 = scmp.ne.s32.totalorder %s138, %s152
    %p154 = scmp.eq.s32.totalorder %s18, 0
    %p155 = por %p153, %p154
    %s156 = ssub.s32 %s12, %s19
    %p157 = scmp.eq.s32.totalorder %s156, 0
    %s159 = sadd.s32 %s158, 1
    %s160 = scalar_select %p157, %s158, %s159
    %p163 = pneg %p157
    %p164 = scmp.eq.s32.totalorder %s12, 1
    %p165 = por %p163, %p164
    %p166 = scmp.ne.s32.totalorder %s158, %s161
    %p167 = scmp.eq.s32.totalorder %s12, 0
    %p168 = por %p166, %p167
    %p169 = scmp.ne.s32.totalorder %s158, %s161
    %p170 = scmp.eq.s32.totalorder %s17, 1
    %p171 = por %p169, %p170
    %p172 = scmp.ne.s32.totalorder %s161, %s162
    %p173 = scmp.eq.s32.totalorder %s17, 0
    %p174 = por %p172, %p173
    %p175 = scmp.ne.s32.totalorder %s161, %s162
    %p176 = scmp.eq.s32.totalorder %s18, 1
    %p177 = por %p175, %p176
    %p179 = scmp.ne.s32.totalorder %s162, %s178
    %p180 = scmp.eq.s32.totalorder %s18, 0
    %p181 = por %p179, %p180
    %p182 = scmp.le.s32.totalorder 1, %s12
    %p183 = scmp.lt.s32.totalorder %s12, 3
    %p184 = pnand %p182, %p183
    %p185 = pneg %p184
    // Predicated region
    $region9: #{text_encoder_forward.33} parent=5 // pred_check
      _
    $region10: #{text_encoder_forward.33} parent=5 // pred_check_branch
      %187 = sbr.rel (%p184) target = $region12
    $region11: #{text_encoder_forward.33} parent=5 // pred_region
      %s188 = ssub.s32 %s12, 1
      // Predicated region
      $region13: #{text_encoder_forward.33} parent=11 // pred_check
        %p189 = pneg %p85
      $region14: #{text_encoder_forward.33} parent=11 // pred_check_branch
        %191 = sbr.rel (%p189) target = $region16
      $region15: #{text_encoder_forward.33} parent=11 // pred_region
        _
      $region16: #{text_encoder_forward.33} parent=11 // pred_fallthru
        _
      // Predicated region
      $region17: #{text_encoder_forward.33} parent=11 // pred_check
        %p192 = pneg %p106
      $region18: #{text_encoder_forward.33} parent=11 // pred_check_branch
        %194 = sbr.rel (%p192) target = $region20
      $region19: #{text_encoder_forward.33} parent=11 // pred_region
        _
      $region20: #{text_encoder_forward.33} parent=11 // pred_fallthru
        _
      // Predicated region
      $region21: #{text_encoder_forward.33} parent=11 // pred_check
        %p195 = pneg %p127
      $region22: #{text_encoder_forward.33} parent=11 // pred_check_branch
        %197 = sbr.rel (%p195) target = $region24
      $region23: #{text_encoder_forward.33} parent=11 // pred_region
        _
      $region24: #{text_encoder_forward.33} parent=11 // pred_fallthru
        _
      // Predicated region
      $region25: #{text_encoder_forward.33} parent=11 // pred_check
        %p198 = pneg %p148
      $region26: #{text_encoder_forward.33} parent=11 // pred_check_branch
        %200 = sbr.rel (%p198) target = $region28
      $region27: #{text_encoder_forward.33} parent=11 // pred_region
        _
      $region28: #{text_encoder_forward.33} parent=11 // pred_fallthru
        _
    $region12: #{text_encoder_forward.33} parent=5 // pred_fallthru
      _
    %p201 = scmp.lt.s32.totalorder %s12, 2
    // Predicated region
    $region29: #{text_encoder_forward.33} parent=5 // pred_check
      %p202 = pneg %p201
    $region30: #{text_encoder_forward.33} parent=5 // pred_check_branch
      %204 = sbr.rel (%p202) target = $region32
    $region31: #{text_encoder_forward.33} parent=5 // pred_region
      // Predicated region
      $region33: #{text_encoder_forward.33} parent=31 // pred_check
        %p205 = pneg %p32
      $region34: #{text_encoder_forward.33} parent=31 // pred_check_branch
        %207 = sbr.rel (%p205) target = $region36
      $region35: #{text_encoder_forward.33} parent=31 // pred_region
        %p208 = scmp.lt.s32.totalorder %s12, 1
        %s209 = scalar_select %p208, %s12, 1
        %s210 = smul.addr %s209, 8
        %s211 = scalar_lea.vmem %s0, %s210
      $region36: #{text_encoder_forward.33} parent=31 // pred_fallthru
        _
      // Predicated region
      $region37: #{text_encoder_forward.33} parent=31 // pred_check
        %p212 = pneg %p58
      $region38: #{text_encoder_forward.33} parent=31 // pred_check_branch
        %214 = sbr.rel (%p212) target = $region40
      $region39: #{text_encoder_forward.33} parent=31 // pred_region
        %p215 = scmp.lt.s32.totalorder %s12, 1
        %s216 = scalar_select %p215, %s12, 1
        %s217 = smul.addr %s216, 8
        %s218 = scalar_lea.vmem %s1, %s217
      $region40: #{text_encoder_forward.33} parent=31 // pred_fallthru
        _
    $region32: #{text_encoder_forward.33} parent=5 // pred_fallthru
      _
    %p219 = scmp.le.s32.totalorder 1, %s12
    %p220 = scmp.lt.s32.totalorder %s12, 3
    %p221 = pnand %p219, %p220
    %p222 = pneg %p221
    // Predicated region
    $region41: #{text_encoder_forward.33} parent=5 // pred_check
      _
    $region42: #{text_encoder_forward.33} parent=5 // pred_check_branch
      %224 = sbr.rel (%p221) target = $region44
    $region43: #{text_encoder_forward.33} parent=5 // pred_region
      %s225 = ssub.s32 %s12, 1
      %p226 = scmp.lt.s32.totalorder %s17, 1
      %s227 = scalar_select %p226, %s17, 1
      %s228 = smul.addr %s227, 8
      %s229 = scalar_lea.vmem %s0, %s228
      %p230 = pneg %p38
      %p231 = pneg %p35
      %p232 = scmp.lt.s32.totalorder %s17, 1
      %s233 = scalar_select %p232, %s17, 1
      %s234 = smul.addr %s233, 8
      %s235 = scalar_lea.vmem %s1, %s234
      %p236 = pneg %p64
      %p237 = pneg %p61
      %p238 = pneg %p85
      %p239 = pneg %p82
      %p240 = pneg %p106
      %p241 = pneg %p103
      %p242 = pneg %p127
      %p243 = pneg %p124
      %p244 = pneg %p148
      %p245 = pneg %p145
      %p246 = pneg %p174
      %p247 = pneg %p171
      %p248 = scmp.lt.s32.totalorder %s17, 1
      %s249 = scalar_select %p248, %s17, 1
      %s250 = smul.addr %s249, 4
      %s251 = scalar_lea.vmem %s6, %s250
      %p252 = scmp.lt.s32.totalorder %s17, 1
      %s253 = scalar_select %p252, %s17, 1
      %s254 = smul.addr %s253, 8
      %s255 = scalar_lea.vmem %s0, %s254
      %p256 = scmp.lt.s32.totalorder %s17, 1
      %s257 = scalar_select %p256, %s17, 1
      %s258 = smul.addr %s257, 8
      %s259 = scalar_lea.vmem %s1, %s258
      %p260 = scmp.lt.s32.totalorder %s17, 1
      %s261 = scalar_select %p260, %s17, 1
      %s262 = smul.addr %s261, 4
      %s263 = scalar_lea.vmem %s6, %s262
      %v265 = vld [vmem:[%s255] sm:$0xff]
      %v266 = vpack.c.bf16 %v265, %v265
      %v267 = vld [vmem:[%s259] sm:$0xff]
      %v268 = vpack.c.bf16 %v267, %v267
      %v269 = vld [vmem:[%s2] sm:$0xf]
      %v270 = vld [vmem:[%s2 + $0x4] sm:$0xf]
      %v271 = vld [vmem:[%s2 + $0x8] sm:$0xf]
      %v272 = vld [vmem:[%s2 + $0xc] sm:$0xf]
      %v273 = vld [vmem:[%s3] sm:$0x1]
      %v275 = vperm.slane %v273, 0
      %v281 = vunpack.c.l.b16 %v269
      %v282 = vunpack.c.l.b16 %v270
      %v283 = vunpack.c.l.b16 %v271
      %v284 = vunpack.c.l.b16 %v272
      %v285 = vpack.c.b16 %v282, %v281
      %v286 = vpack.c.b16 %v284, %v283
      %vm289 = vcmask 261120
      %v291 = vsel %vm289, %v266, 0
      %293 = vmatpush.bf16.msra.mxu0 0
      %294 = vmatpush.bf16.msra.mxu0 0
      %295 = vmatpush.bf16.msra.mxu0 0
      %296 = vmatpush.bf16.msra.mxu0 0
      %297 = vmatpush.bf16.msra.mxu0 0
      %298 = vmatpush.bf16.msra.mxu0 0
      %299 = vmatpush.bf16.msra.mxu0 %v286
      %300 = vmatpush.bf16.msra.mxu0 %v285
      %301 = vmatmul.bf16.gmra.mxu0 %v291
      %v302 = vpop.f32.mrf.mxu0
      %v303 = vadd.f32 %v275, %v302
      %v304 = vpop.f32.mrf.mxu0
      %305 = vdwg.mxu0
      %v306 = vld [vmem:[%s4] sm:$0xf]
      %v307 = vld [vmem:[%s4 + $0x4] sm:$0xf]
      %v308 = vld [vmem:[%s4 + $0x8] sm:$0xf]
      %v309 = vld [vmem:[%s4 + $0xc] sm:$0xf]
      %v310 = vld [vmem:[%s5] sm:$0x1]
      %v312 = vperm.slane %v310, 0
      %v318 = vunpack.c.l.b16 %v306
      %v319 = vunpack.c.l.b16 %v307
      %v320 = vunpack.c.l.b16 %v308
      %v321 = vunpack.c.l.b16 %v309
      %v322 = vpack.c.b16 %v319, %v318
      %v323 = vpack.c.b16 %v321, %v320
      %v327 = vsel %vm289, %v268, 0
      %329 = vmatpush.bf16.msra.mxu0 0
      %330 = vmatpush.bf16.msra.mxu0 0
      %331 = vmatpush.bf16.msra.mxu0 0
      %332 = vmatpush.bf16.msra.mxu0 0
      %333 = vmatpush.bf16.msra.mxu0 0
      %334 = vmatpush.bf16.msra.mxu0 0
      %335 = vmatpush.bf16.msra.mxu0 %v323
      %336 = vmatpush.bf16.msra.mxu0 %v322
      %337 = vmatmul.bf16.gmra.mxu0 %v327
      %v338 = vpop.f32.mrf.mxu0
      %v339 = vadd.f32 %v312, %v338
      %v340 = vpop.f32.mrf.mxu0
      %341 = vdwg.mxu0
      %v342 = vpack.c.bf16 %v303, %v303
      %v343 = vpack.c.bf16 %v339, %v339
      %vm344 = vcmask 64512
      %v346 = vsel %vm344, %v342, 0
      %v349 = vsel %vm344, %v343, 0
      %351 = vmatpush.bf16.xpose.msra.mxu0 0
      %352 = vmatpush.bf16.xpose.msra.mxu0 0
      %353 = vmatpush.bf16.xpose.msra.mxu0 0
      %354 = vmatpush.bf16.xpose.msra.mxu0 0
      %355 = vmatpush.bf16.xpose.msra.mxu0 0
      %356 = vmatpush.bf16.xpose.msra.mxu0 0
      %357 = vmatpush.bf16.xpose.msra.mxu0 0
      %358 = vmatpush.bf16.xpose.msra.mxu0 %v349
      %359 = vmatmul.bf16.gmra.mxu0 %v346
      %v360 = vpop.f32.mrf.mxu0
      %v361 = vadd.f32 0.0, %v360
      %v362 = vpop.f32.mrf.mxu0
      %363 = vdwg.mxu0
      %v364 = vmul.f32 %v361, 0.35355338
      %v365 = vsel %vm344, %v364, -inf
      %366 = vmax.xlane.f32.xlu0 %v365
      %v367 = vpop.xlane.xlu0 %366
      %v368 = vsub.f32 %v364, %v367
      %v369 = vmul.f32 %v368, 1.442695
      %v370 = vpow.pop %v369
      %v371 = vsel %vm344, %v370, 0.0
      %372 = vadd.xlane.f32.xlu0 %v371
      %v373 = vpop.xlane.xlu0 %372
      %v374 = vrcp.pop %v373
      %v375 = vmul.f32 %v370, %v374
      %v376 = vpack.c.bf16 %v375, %v375
      %378 = vrot.lane.b32.xlu0 %v343, 96
      %v379 = vpop.permute.xlu0 %378
      %v381 = vsel %vm344, %v376, 0
      %vm383 = vcmask 1043456
      %v385 = vsel %vm383, %v379, 0
      %387 = vmatpush.bf16.msra.mxu0 0
      %388 = vmatpush.bf16.msra.mxu0 0
      %389 = vmatpush.bf16.msra.mxu0 0
      %390 = vmatpush.bf16.msra.mxu0 0
      %391 = vmatpush.bf16.msra.mxu0 0
      %392 = vmatpush.bf16.msra.mxu0 0
      %393 = vmatpush.bf16.msra.mxu0 0
      %394 = vmatpush.bf16.msra.mxu0 %v385
      %395 = vmatmul.bf16.gmra.mxu0 %v381
      %v396 = vpop.f32.mrf.mxu0
      %v397 = vadd.f32 0.0, %v396
      %v398 = vpop.f32.mrf.mxu0
      %399 = vdwg.mxu0
      %v400 = vpack.c.bf16 %v397, %v397
      %vm401 = vcmask 60416
      %402 = vst.msk [vmem:[%s263] sm:$0xf] %vm401, %v400
      %404 = vrot.lane.b32.xlu0 %v342, 120
      %v405 = vpop.permute.xlu0 %404
      %406 = vrot.lane.b32.xlu0 %v343, 120
      %v407 = vpop.permute.xlu0 %406
      %v409 = vsel %vm344, %v405, 0
      %v412 = vsel %vm344, %v407, 0
      %414 = vmatpush.bf16.xpose.msra.mxu0 0
      %415 = vmatpush.bf16.xpose.msra.mxu0 0
      %416 = vmatpush.bf16.xpose.msra.mxu0 0
      %417 = vmatpush.bf16.xpose.msra.mxu0 0
      %418 = vmatpush.bf16.xpose.msra.mxu0 0
      %419 = vmatpush.bf16.xpose.msra.mxu0 0
      %420 = vmatpush.bf16.xpose.msra.mxu0 0
      %421 = vmatpush.bf16.xpose.msra.mxu0 %v412
      %422 = vmatmul.bf16.gmra.mxu0 %v409
      %v423 = vpop.f32.mrf.mxu0
      %v424 = vadd.f32 0.0, %v423
      %v425 = vpop.f32.mrf.mxu0
      %426 = vdwg.mxu0
      %v427 = vmul.f32 %v424, 0.35355338
      %v428 = vsel %vm344, %v427, -inf
      %429 = vmax.xlane.f32.xlu0 %v428
      %v430 = vpop.xlane.xlu0 %429
      %v431 = vsub.f32 %v427, %v430
      %v432 = vmul.f32 %v431, 1.442695
      %v433 = vpow.pop %v432
      %v434 = vsel %vm344, %v433, 0.0
      %435 = vadd.xlane.f32.xlu0 %v434
      %v436 = vpop.xlane.xlu0 %435
      %v437 = vrcp.pop %v436
      %v438 = vmul.f32 %v433, %v437
      %v439 = vpack.c.bf16 %v438, %v438
      %440 = vrot.lane.b32.xlu0 %v343, 88
      %v441 = vpop.permute.xlu0 %440
      %v443 = vsel %vm344, %v439, 0
      %v446 = vsel %vm383, %v441, 0
      %448 = vmatpush.bf16.msra.mxu0 0
      %449 = vmatpush.bf16.msra.mxu0 0
      %450 = vmatpush.bf16.msra.mxu0 0
      %451 = vmatpush.bf16.msra.mxu0 0
      %452 = vmatpush.bf16.msra.mxu0 0
      %453 = vmatpush.bf16.msra.mxu0 0
      %454 = vmatpush.bf16.msra.mxu0 0
      %455 = vmatpush.bf16.msra.mxu0 %v446
      %456 = vmatmul.bf16.gmra.mxu0 %v443
      %v457 = vpop.f32.mrf.mxu0
      %v458 = vadd.f32 0.0, %v457
      %v459 = vpop.f32.mrf.mxu0
      %460 = vdwg.mxu0
      %v461 = vpack.c.bf16 %v458, %v458
      %463 = vrot.lane.b32.xlu0 %v461, 8
      %v464 = vpop.permute.xlu0 %463
      %vm466 = vcmask 126016
      %467 = vst.msk [vmem:[%s263] sm:$0xf] %vm466, %v464
      %468 = vrot.lane.b32.xlu0 %v342, 112
      %v469 = vpop.permute.xlu0 %468
      %470 = vrot.lane.b32.xlu0 %v343, 112
      %v471 = vpop.permute.xlu0 %470
      %v473 = vsel %vm344, %v469, 0
      %v476 = vsel %vm344, %v471, 0
      %478 = vmatpush.bf16.xpose.msra.mxu0 0
      %479 = vmatpush.bf16.xpose.msra.mxu0 0
      %480 = vmatpush.bf16.xpose.msra.mxu0 0
      %481 = vmatpush.bf16.xpose.msra.mxu0 0
      %482 = vmatpush.bf16.xpose.msra.mxu0 0
      %483 = vmatpush.bf16.xpose.msra.mxu0 0
      %484 = vmatpush.bf16.xpose.msra.mxu0 0
      %485 = vmatpush.bf16.xpose.msra.mxu0 %v476
      %486 = vmatmul.bf16.gmra.mxu0 %v473
      %v487 = vpop.f32.mrf.mxu0
      %v488 = vadd.f32 0.0, %v487
      %v489 = vpop.f32.mrf.mxu0
      %490 = vdwg.mxu0
      %v491 = vmul.f32 %v488, 0.35355338
      %v492 = vsel %vm344, %v491, -inf
      %493 = vmax.xlane.f32.xlu0 %v492
      %v494 = vpop.xlane.xlu0 %493
      %v495 = vsub.f32 %v491, %v494
      %v496 = vmul.f32 %v495, 1.442695
      %v497 = vpow.pop %v496
      %v498 = vsel %vm344, %v497, 0.0
      %499 = vadd.xlane.f32.xlu0 %v498
      %v500 = vpop.xlane.xlu0 %499
      %v501 = vrcp.pop %v500
      %v502 = vmul.f32 %v497, %v501
      %v503 = vpack.c.bf16 %v502, %v502
      %504 = vrot.lane.b32.xlu0 %v343, 80
      %v505 = vpop.permute.xlu0 %504
      %v507 = vsel %vm344, %v503, 0
      %v510 = vsel %vm383, %v505, 0
      %512 = vmatpush.bf16.msra.mxu0 0
      %513 = vmatpush.bf16.msra.mxu0 0
      %514 = vmatpush.bf16.msra.mxu0 0
      %515 = vmatpush.bf16.msra.mxu0 0
      %516 = vmatpush.bf16.msra.mxu0 0
      %517 = vmatpush.bf16.msra.mxu0 0
      %518 = vmatpush.bf16.msra.mxu0 0
      %519 = vmatpush.bf16.msra.mxu0 %v510
      %520 = vmatmul.bf16.gmra.mxu0 %v507
      %v521 = vpop.f32.mrf.mxu0
      %v522 = vadd.f32 0.0, %v521
      %v523 = vpop.f32.mrf.mxu0
      %524 = vdwg.mxu0
      %v525 = vpack.c.bf16 %v522, %v522
      %527 = vrot.lane.b32.xlu0 %v525, 16
      %v528 = vpop.permute.xlu0 %527
      %vm530 = vcmask 191616
      %531 = vst.msk [vmem:[%s263] sm:$0xf] %vm530, %v528
      %532 = vrot.lane.b32.xlu0 %v342, 104
      %v533 = vpop.permute.xlu0 %532
      %534 = vrot.lane.b32.xlu0 %v343, 104
      %v535 = vpop.permute.xlu0 %534
      %v537 = vsel %vm344, %v533, 0
      %v540 = vsel %vm344, %v535, 0
      %542 = vmatpush.bf16.xpose.msra.mxu0 0
      %543 = vmatpush.bf16.xpose.msra.mxu0 0
      %544 = vmatpush.bf16.xpose.msra.mxu0 0
      %545 = vmatpush.bf16.xpose.msra.mxu0 0
      %546 = vmatpush.bf16.xpose.msra.mxu0 0
      %547 = vmatpush.bf16.xpose.msra.mxu0 0
      %548 = vmatpush.bf16.xpose.msra.mxu0 0
      %549 = vmatpush.bf16.xpose.msra.mxu0 %v540
      %550 = vmatmul.bf16.gmra.mxu0 %v537
      %v551 = vpop.f32.mrf.mxu0
      %v552 = vadd.f32 0.0, %v551
      %v553 = vpop.f32.mrf.mxu0
      %554 = vdwg.mxu0
      %v555 = vmul.f32 %v552, 0.35355338
      %v556 = vsel %vm344, %v555, -inf
      %557 = vmax.xlane.f32.xlu0 %v556
      %v558 = vpop.xlane.xlu0 %557
      %v559 = vsub.f32 %v555, %v558
      %v560 = vmul.f32 %v559, 1.442695
      %v561 = vpow.pop %v560
      %v562 = vsel %vm344, %v561, 0.0
      %563 = vadd.xlane.f32.xlu0 %v562
      %v564 = vpop.xlane.xlu0 %563
      %v565 = vrcp.pop %v564
      %v566 = vmul.f32 %v561, %v565
      %v567 = vpack.c.bf16 %v566, %v566
      %568 = vrot.lane.b32.xlu0 %v343, 72
      %v569 = vpop.permute.xlu0 %568
      %v571 = vsel %vm344, %v567, 0
      %v574 = vsel %vm383, %v569, 0
      %576 = vmatpush.bf16.msra.mxu0 0
      %577 = vmatpush.bf16.msra.mxu0 0
      %578 = vmatpush.bf16.msra.mxu0 0
      %579 = vmatpush.bf16.msra.mxu0 0
      %580 = vmatpush.bf16.msra.mxu0 0
      %581 = vmatpush.bf16.msra.mxu0 0
      %582 = vmatpush.bf16.msra.mxu0 0
      %583 = vmatpush.bf16.msra.mxu0 %v574
      %584 = vmatmul.bf16.gmra.mxu0 %v571
      %v585 = vpop.f32.mrf.mxu0
      %v586 = vadd.f32 0.0, %v585
      %v587 = vpop.f32.mrf.mxu0
      %588 = vdwg.mxu0
      %v589 = vpack.c.bf16 %v586, %v586
      %591 = vrot.lane.b32.xlu0 %v589, 24
      %v592 = vpop.permute.xlu0 %591
      %vm594 = vcmask 257216
      %595 = vst.msk [vmem:[%s263] sm:$0xf] %vm594, %v592
      %p596 = scmp.lt.s32.totalorder %s17, 1
      %s597 = scalar_select %p596, %s17, 1
      %s598 = smul.addr %s597, 4
      %s599 = scalar_lea.vmem %s6, %s598
      // Predicated region
      $region45: #{text_encoder_forward.33} parent=43 // pred_check
        %p600 = pneg %p171
      $region46: #{text_encoder_forward.33} parent=43 // pred_check_branch
        %602 = sbr.rel (%p600) target = $region48
      $region47: #{text_encoder_forward.33} parent=43 // pred_region
        _
      $region48: #{text_encoder_forward.33} parent=43 // pred_fallthru
        _
    $region44: #{text_encoder_forward.33} parent=5 // pred_fallthru
      _
    %p603 = scmp.le.s32.totalorder 2, %s12
    // Predicated region
    $region49: #{text_encoder_forward.33} parent=5 // pred_check
      %p604 = pneg %p603
    $region50: #{text_encoder_forward.33} parent=5 // pred_check_branch
      %606 = sbr.rel (%p604) target = $region52
    $region51: #{text_encoder_forward.33} parent=5 // pred_region
      %s607 = ssub.s32 %s12, 2
      // Predicated region
      $region53: #{text_encoder_forward.33} parent=51 // pred_check
        %p608 = pneg %p177
      $region54: #{text_encoder_forward.33} parent=51 // pred_check_branch
        %610 = sbr.rel (%p608) target = $region56
      $region55: #{text_encoder_forward.33} parent=51 // pred_region
        %p611 = scmp.lt.s32.totalorder %s18, 1
        %s612 = scalar_select %p611, %s18, 1
        %s613 = smul.addr %s612, 4
        %s614 = scalar_lea.vmem %s6, %s613
      $region56: #{text_encoder_forward.33} parent=51 // pred_fallthru
        _
    $region52: #{text_encoder_forward.33} parent=5 // pred_fallthru
      _
  $region6: #{text_encoder_forward.33} parent=0 // loop_footer
    %s16 = sadd.s32 1, %s12
  $region7: #{text_encoder_forward.33} parent=0 // loop_footer_branch
    %11 = sbr.rel target = $region3
  $region8: #{text_encoder_forward.33} parent=0 // loop_exit
    _

</llo_original>
